<compile_context>
chip_gen: v5e
topology: v5e:2x2
jax: 0.10.0
libtpu: 0.0.40
codegen_flags: <defaults>
</compile_context>

<pallas_src>
import math
import numpy as np
import jax
import jax.numpy as jnp
from jax.experimental import pallas as pl
from jax.experimental.pallas import tpu as pltpu

# ---- static module configuration (mirrors ExemplarTransformer.__init__) ----
B = 2
C = 32            # in_channels == out_channels
H = W = 16
HIDDEN = 32       # hidden_dim
E = 4             # e_exemplars
KSZ = 5           # dw_kernel_size
PAD = 2           # dw_padding (keeps spatial size so residual add works)
TEMPERATURE = 2.0
SE_RATIO = 0.5
BN_EPS = 1e-5
LN_EPS = 1e-5

P = H * W         # 256 pixels, pixel index p = h*W + w  (lane axis)
NT = KSZ * KSZ    # 25 depthwise taps


def make_divisible(v, divisor=8, min_value=None):
    min_value = min_value or divisor
    new_v = max(min_value, int(v + divisor / 2) // divisor * divisor)
    if new_v < 0.9 * v:
        new_v += divisor
    return new_v


RED = make_divisible(C * SE_RATIO, 1)   # squeeze-excite reduced channels (16)


def _make_tap_masks():
    """Per-tap validity mask over output pixels (host-side, static)."""
    hh = np.repeat(np.arange(H), W)          # p // W
    ww = np.tile(np.arange(W), H)            # p %  W
    m = np.zeros((NT, P), np.float32)
    for kh in range(KSZ):
        for kw in range(KSZ):
            valid = ((hh + kh - PAD >= 0) & (hh + kh - PAD < H) &
                     (ww + kw - PAD >= 0) & (ww + kw - PAD < W))
            m[kh * KSZ + kw] = valid.astype(np.float32)
    return m


_TAP_MASKS = _make_tap_masks()


# ----------------------------- fused Pallas kernel ---------------------------
def fused_kernel(x_ref, mask_ref, fc1_ref, fc1b_ref, k_ref, vdw_ref, vpw_ref,
                 se_rw_ref, se_rb_ref, se_ew_ref, cols_ref, out_ref):
    # cols_ref columns: 0=dw_bn_scale 1=dw_bn_shift 2=pw_bn_scale 3=pw_bn_shift
    #                   4=ln_gamma    5=ln_beta     6=se_expand_bias
    x = x_ref[0]                                            # (C, P) lane-dense

    # -------- attention over exemplars (tiny VPU/XLU matvecs) --------------
    pooled = jnp.mean(x, axis=1, keepdims=True)             # (C, 1) AdaptiveAvgPool2d(1)
    q = jnp.maximum(
        jnp.sum(fc1_ref[...] * pooled, axis=0, keepdims=True) + fc1b_ref[...],
        0.0)                                                # (1, HIDDEN)
    qk = jnp.sum(k_ref[...] * q, axis=1, keepdims=True)     # (E, 1)
    logits = qk * (1.0 / (math.sqrt(float(HIDDEN)) * TEMPERATURE))
    m = jnp.max(logits, axis=0, keepdims=True)              # (1, 1)
    ex = jnp.exp(logits - m)                                # (E, 1)
    denom = jnp.sum(ex, axis=0, keepdims=True)              # (1, 1)
    attn = ex * pl.reciprocal(denom, approx=True)           # (E, 1)

    # -------- mix per-sample conv kernels (tiny, stays in vregs) -----------
    a0 = attn[0:1, :]
    dwk = vdw_ref[0] * jnp.broadcast_to(a0, (1, NT))        # (C, 25)  [c, tap]
    pwk = vpw_ref[0] * jnp.broadcast_to(a0, (1, C))         # (C, C)   [o, ci]
    for e in range(1, E):
        ae = attn[e:e + 1, :]
        dwk = dwk + vdw_ref[e] * jnp.broadcast_to(ae, (1, NT))
        pwk = pwk + vpw_ref[e] * jnp.broadcast_to(ae, (1, C))

    # -------- depthwise 5x5 conv: lane rolls (XLU) + static boundary masks --
    acc = None
    for kh in range(KSZ):
        sh_h = ((PAD - kh) * W) % P
        base = pltpu.roll(x, sh_h, axis=1) if sh_h else x
        for kw in range(KSZ):
            t = kh * KSZ + kw
            sh_w = (PAD - kw) % P
            rolled = pltpu.roll(base, sh_w, axis=1) if sh_w else base
            if kh == PAD and kw == PAD:
                contrib = rolled                             # centre tap: all valid
            else:
                contrib = rolled * mask_ref[t:t + 1, :]      # zero out-of-image taps
            term = contrib * dwk[:, t:t + 1]
            acc = term if acc is None else acc + term

    # -------- dw BatchNorm (eval, pre-folded) + ReLU -------------------------
    h = jnp.maximum(acc * cols_ref[:, 0:1] + cols_ref[:, 1:2], 0.0)   # (C, P)

    # -------- Squeeze-Excite --------------------------------------------------
    se_p = jnp.mean(h, axis=1, keepdims=True)                # (C, 1)
    se_r = jnp.maximum(
        jnp.sum(se_rw_ref[...] * se_p, axis=0, keepdims=True) + se_rb_ref[...],
        0.0)                                                 # (1, RED)
    gate = jax.nn.sigmoid(
        jnp.sum(se_ew_ref[...] * se_r, axis=1, keepdims=True) + cols_ref[:, 6:7])  # (C,1)
    h = h * gate

    # -------- per-sample pointwise (1x1) conv on MXU + BN + ReLU --------------
    y = jnp.dot(pwk, h, preferred_element_type=jnp.float32)  # (C, P), N=256 lane-dense
    y = jnp.maximum(y * cols_ref[:, 2:3] + cols_ref[:, 3:4], 0.0)

    # -------- residual add + LayerNorm over channels --------------------------
    y = y + x
    mu = jnp.mean(y, axis=0, keepdims=True)                  # (1, P)
    var = jnp.mean((y - mu) ** 2, axis=0, keepdims=True)
    y = (y - mu) * jax.lax.rsqrt(var + LN_EPS) * cols_ref[:, 4:5] + cols_ref[:, 5:6]

    out_ref[0] = y                                           # lane-dense store


# ------------------------------- wrapper --------------------------------------
def exemplar_transformer(x_nchw, p):
    Bb = x_nchw.shape[0]
    f32 = jnp.float32

    # channels-as-sublanes, pixels-as-lanes: plain reshape of NCHW, no transpose
    xT = x_nchw.reshape(Bb, C, P).astype(f32)                 # (B, C, 256)

    # --- parameter plumbing (pure XLA glue, orientation for the (C,P) layout) ---
    fc1_wT = p['fc1_w'].T.astype(f32)                         # (C, HIDDEN)
    fc1_b = p['fc1_b'].reshape(1, HIDDEN).astype(f32)
    kmat = p['K'].astype(f32)                                 # (E, HIDDEN)
    vdw = p['V_dw'].reshape(E, C, NT).astype(f32)             # (E, C, 25) [e, c, kh*5+kw]
    vpw = p['V_pw'].reshape(E, C, C).astype(f32)              # (E, C, C)  [e, o, ci]
    se_rwT = p['se_rw'].T.astype(f32)                         # (C, RED)
    se_rb = p['se_rb'].reshape(1, RED).astype(f32)
    se_ew = p['se_ew'].astype(f32)                            # (C, RED)

    dw_s = p['dw_bn_g'] * jax.lax.rsqrt(p['dw_bn_v'] + BN_EPS)
    dw_b = p['dw_bn_b'] - p['dw_bn_m'] * dw_s
    pw_s = p['pw_bn_g'] * jax.lax.rsqrt(p['pw_bn_v'] + BN_EPS)
    pw_b = p['pw_bn_b'] - p['pw_bn_m'] * pw_s
    cols = jnp.stack([dw_s, dw_b, pw_s, pw_b,
                      p['ln_g'], p['ln_b'], p['se_eb'],
                      jnp.zeros((C,), f32)], axis=1).astype(f32)   # (C, 8)

    masks = jnp.asarray(_TAP_MASKS, dtype=f32)                # (25, 256)

    cost = pl.CostEstimate(flops=2_400_000, transcendentals=700,
                           bytes_accessed=320_000)

    out = pl.pallas_call(
        fused_kernel,
        grid=(Bb,),
        in_specs=[
            pl.BlockSpec((1, C, P), lambda b: (b, 0, 0)),     # x, (C, P) lane-dense
            pl.BlockSpec((NT, P), lambda b: (0, 0)),          # per-tap boundary masks
            pl.BlockSpec((C, HIDDEN), lambda b: (0, 0)),      # fc1_w^T
            pl.BlockSpec((1, HIDDEN), lambda b: (0, 0)),      # fc1_b
            pl.BlockSpec((E, HIDDEN), lambda b: (0, 0)),      # K
            pl.BlockSpec((E, C, NT), lambda b: (0, 0, 0)),    # V_dw  (per-channel taps)
            pl.BlockSpec((E, C, C), lambda b: (0, 0, 0)),     # V_pw  [o, ci]
            pl.BlockSpec((C, RED), lambda b: (0, 0)),         # se reduce W^T
            pl.BlockSpec((1, RED), lambda b: (0, 0)),         # se reduce b
            pl.BlockSpec((C, RED), lambda b: (0, 0)),         # se expand W
            pl.BlockSpec((C, 8), lambda b: (0, 0)),           # folded BN / LN / SE-bias cols
        ],
        out_specs=pl.BlockSpec((1, C, P), lambda b: (b, 0, 0)),
        out_shape=jax.ShapeDtypeStruct((Bb, C, P), jnp.float32),
        compiler_params=pltpu.CompilerParams(dimension_semantics=("parallel",)),
        cost_estimate=cost,
    )(xT, masks, fc1_wT, fc1_b, kmat, vdw, vpw, se_rwT, se_rb, se_ew, cols)

    return out.reshape(Bb, C, H, W)                           # already NCHW


# --------------------------- pure-JAX reference --------------------------------
def reference(x_nchw, p):
    Bb, Cc, Hh, Ww = x_nchw.shape
    hp = jax.lax.Precision.HIGHEST
    pooled = jnp.mean(x_nchw, axis=(2, 3))                               # (B, C)
    q = jax.nn.relu(jnp.dot(pooled, p['fc1_w'].T, precision=hp) + p['fc1_b'])
    qk = jnp.dot(q, p['K'].T, precision=hp) / math.sqrt(HIDDEN)
    attn = jax.nn.softmax(qk / TEMPERATURE, axis=-1)                     # (B, E)
    dw = jnp.dot(attn, p['V_dw'], precision=hp).reshape(Bb, Cc, KSZ, KSZ)
    pw = jnp.dot(attn, p['V_pw'], precision=hp).reshape(Bb, Cc, Cc)      # [b, o, ci]

    xpad = jnp.pad(x_nchw, ((0, 0), (0, 0), (PAD, PAD), (PAD, PAD)))
    acc = jnp.zeros_like(x_nchw)
    for kh in range(KSZ):
        for kw in range(KSZ):
            acc = acc + xpad[:, :, kh:kh + Hh, kw:kw + Ww] * dw[:, :, kh, kw][:, :, None, None]
    g, b, m, v = p['dw_bn_g'], p['dw_bn_b'], p['dw_bn_m'], p['dw_bn_v']
    h = (acc - m[None, :, None, None]) * (g / jnp.sqrt(v + BN_EPS))[None, :, None, None] \
        + b[None, :, None, None]
    h = jax.nn.relu(h)

    se = jnp.mean(h, axis=(2, 3))
    se_r = jax.nn.relu(jnp.dot(se, p['se_rw'].T, precision=hp) + p['se_rb'])
    se_e = jnp.dot(se_r, p['se_ew'].T, precision=hp) + p['se_eb']
    h = h * jax.nn.sigmoid(se_e)[:, :, None, None]

    y = jnp.einsum('boc,bchw->bohw', pw, h, precision=hp)
    g2, b2, m2, v2 = p['pw_bn_g'], p['pw_bn_b'], p['pw_bn_m'], p['pw_bn_v']
    y = (y - m2[None, :, None, None]) * (g2 / jnp.sqrt(v2 + BN_EPS))[None, :, None, None] \
        + b2[None, :, None, None]
    y = jax.nn.relu(y)
    y = y + x_nchw

    yc = jnp.transpose(y.reshape(Bb, Cc, Hh * Ww), (0, 2, 1))
    mu = jnp.mean(yc, -1, keepdims=True)
    var = jnp.mean((yc - mu) ** 2, -1, keepdims=True)
    yc = (yc - mu) / jnp.sqrt(var + LN_EPS) * p['ln_g'] + p['ln_b']
    return jnp.transpose(yc, (0, 2, 1)).reshape(Bb, Cc, Hh, Ww)


# ---------------------------------- main ---------------------------------------
if __name__ == "__main__":
    key = jax.random.PRNGKey(0)
    ks = jax.random.split(key, 24)
    f32 = jnp.float32

    x = jax.random.normal(ks[0], (B, C, H, W), f32)

    params = {
        'fc1_w': 0.1 * jax.random.normal(ks[1], (HIDDEN, C), f32),
        'fc1_b': 0.1 * jax.random.normal(ks[2], (HIDDEN,), f32),
        'K': jax.random.normal(ks[3], (E, HIDDEN), f32),
        'V_dw': 0.1 * jax.random.normal(ks[4], (E, C * 1 * KSZ * KSZ), f32),
        'V_pw': 0.05 * jax.random.normal(ks[5], (E, C * C), f32),
        'dw_bn_g': 1.0 + 0.1 * jax.random.normal(ks[6], (C,), f32),
        'dw_bn_b': 0.1 * jax.random.normal(ks[7], (C,), f32),
        'dw_bn_m': 0.1 * jax.random.normal(ks[8], (C,), f32),
        'dw_bn_v': 0.5 + jnp.abs(jax.random.normal(ks[9], (C,), f32)) * 0.5,
        'se_rw': 0.2 * jax.random.normal(ks[10], (RED, C), f32),
        'se_rb': 0.1 * jax.random.normal(ks[11], (RED,), f32),
        'se_ew': 0.2 * jax.random.normal(ks[12], (C, RED), f32),
        'se_eb': 0.1 * jax.random.normal(ks[13], (C,), f32),
        'pw_bn_g': 1.0 + 0.1 * jax.random.normal(ks[14], (C,), f32),
        'pw_bn_b': 0.1 * jax.random.normal(ks[15], (C,), f32),
        'pw_bn_m': 0.1 * jax.random.normal(ks[16], (C,), f32),
        'pw_bn_v': 0.5 + jnp.abs(jax.random.normal(ks[17], (C,), f32)) * 0.5,
        'ln_g': 1.0 + 0.1 * jax.random.normal(ks[18], (C,), f32),
        'ln_b': 0.1 * jax.random.normal(ks[19], (C,), f32),
    }

    out = exemplar_transformer(x, params)
    out = jax.block_until_ready(out)
    assert out.shape == (B, C, H, W), out.shape

    ref = jax.block_until_ready(reference(x, params))
    if not np.allclose(np.asarray(out), np.asarray(ref), atol=2e-3, rtol=2e-3):
        err = float(jnp.max(jnp.abs(out - ref)))
        raise AssertionError(f"Pallas/reference mismatch, max abs err = {err}")

    print("KERNEL_OK")
</pallas_src>

<mosaic_0001>
module attributes {stable_mosaic.version = 11 : i64} {
  func.func @fused_kernel(%arg0: i32, %arg1: memref<1x32x256xf32, #tpu.memory_space<vmem>>, %arg2: memref<25x256xf32, #tpu.memory_space<vmem>>, %arg3: memref<32x32xf32, #tpu.memory_space<vmem>>, %arg4: memref<1x32xf32, #tpu.memory_space<vmem>>, %arg5: memref<4x32xf32, #tpu.memory_space<vmem>>, %arg6: memref<4x32x25xf32, #tpu.memory_space<vmem>>, %arg7: memref<4x32x32xf32, #tpu.memory_space<vmem>>, %arg8: memref<32x16xf32, #tpu.memory_space<vmem>>, %arg9: memref<1x16xf32, #tpu.memory_space<vmem>>, %arg10: memref<32x16xf32, #tpu.memory_space<vmem>>, %arg11: memref<32x8xf32, #tpu.memory_space<vmem>>, %arg12: memref<1x32x256xf32, #tpu.memory_space<vmem>>) attributes {dimension_semantics = [#tpu.dimension_semantics<parallel>], iteration_bounds = array<i64: 2>, scalar_prefetch = 0 : i64, scratch_operands = 0 : i64, tpu.core_type = #tpu.core_type<tc>, window_params = [{transform_indices = @transform_0, window_bounds = array<i64: 1, 32, 256>}, {pipeline_mode = #tpu.pipeline_mode<synchronous>, transform_indices = @transform_1, window_bounds = array<i64: 25, 256>}, {pipeline_mode = #tpu.pipeline_mode<synchronous>, transform_indices = @transform_2, window_bounds = array<i64: 32, 32>}, {pipeline_mode = #tpu.pipeline_mode<synchronous>, transform_indices = @transform_3, window_bounds = array<i64: 1, 32>}, {pipeline_mode = #tpu.pipeline_mode<synchronous>, transform_indices = @transform_4, window_bounds = array<i64: 4, 32>}, {pipeline_mode = #tpu.pipeline_mode<synchronous>, transform_indices = @transform_5, window_bounds = array<i64: 4, 32, 25>}, {pipeline_mode = #tpu.pipeline_mode<synchronous>, transform_indices = @transform_6, window_bounds = array<i64: 4, 32, 32>}, {pipeline_mode = #tpu.pipeline_mode<synchronous>, transform_indices = @transform_7, window_bounds = array<i64: 32, 16>}, {pipeline_mode = #tpu.pipeline_mode<synchronous>, transform_indices = @transform_8, window_bounds = array<i64: 1, 16>}, {pipeline_mode = #tpu.pipeline_mode<synchronous>, transform_indices = @transform_9, window_bounds = array<i64: 32, 16>}, {pipeline_mode = #tpu.pipeline_mode<synchronous>, transform_indices = @transform_10, window_bounds = array<i64: 32, 8>}, {transform_indices = @transform_11, window_bounds = array<i64: 1, 32, 256>}]} {
    %c0 = arith.constant 0 : index
    %c0_0 = arith.constant 0 : index
    %c0_1 = arith.constant 0 : index
    %0 = vector.load %arg1[%c0, %c0_0, %c0_1] : memref<1x32x256xf32, #tpu.memory_space<vmem>>, vector<1x32x256xf32>
    %1 = vector.shape_cast %0 : vector<1x32x256xf32> to vector<32x256xf32>
    %cst = arith.constant dense<0.000000e+00> : vector<32xf32>
    %2 = vector.multi_reduction <add>, %1, %cst [1] : vector<32x256xf32> to vector<32xf32>
    %3 = vector.shape_cast %2 : vector<32xf32> to vector<32x1xf32>
    %cst_2 = arith.constant 2.560000e+02 : f32
    %4 = vector.broadcast %cst_2 : f32 to vector<32x1xf32>
    %5 = arith.divf %3, %4 : vector<32x1xf32>
    %c0_3 = arith.constant 0 : index
    %c0_4 = arith.constant 0 : index
    %6 = vector.load %arg3[%c0_3, %c0_4] : memref<32x32xf32, #tpu.memory_space<vmem>>, vector<32x32xf32>
    %7 = vector.broadcast %5 : vector<32x1xf32> to vector<32x32xf32>
    %8 = arith.mulf %6, %7 : vector<32x32xf32>
    %cst_5 = arith.constant dense<0.000000e+00> : vector<32xf32>
    %9 = vector.multi_reduction <add>, %8, %cst_5 [0] : vector<32x32xf32> to vector<32xf32>
    %10 = vector.shape_cast %9 : vector<32xf32> to vector<1x32xf32>
    %c0_6 = arith.constant 0 : index
    %c0_7 = arith.constant 0 : index
    %11 = vector.load %arg4[%c0_6, %c0_7] : memref<1x32xf32, #tpu.memory_space<vmem>>, vector<1x32xf32>
    %12 = arith.addf %10, %11 : vector<1x32xf32>
    %cst_8 = arith.constant 0.000000e+00 : f32
    %13 = vector.broadcast %cst_8 : f32 to vector<1x32xf32>
    %14 = arith.maximumf %12, %13 : vector<1x32xf32>
    %c0_9 = arith.constant 0 : index
    %c0_10 = arith.constant 0 : index
    %15 = vector.load %arg5[%c0_9, %c0_10] : memref<4x32xf32, #tpu.memory_space<vmem>>, vector<4x32xf32>
    %16 = vector.broadcast %14 : vector<1x32xf32> to vector<4x32xf32>
    %17 = arith.mulf %15, %16 : vector<4x32xf32>
    %cst_11 = arith.constant dense<0.000000e+00> : vector<4xf32>
    %18 = vector.multi_reduction <add>, %17, %cst_11 [1] : vector<4x32xf32> to vector<4xf32>
    %19 = vector.shape_cast %18 : vector<4xf32> to vector<4x1xf32>
    %cst_12 = arith.constant 0.0883883461 : f32
    %20 = vector.broadcast %cst_12 : f32 to vector<4x1xf32>
    %21 = arith.mulf %19, %20 : vector<4x1xf32>
    %cst_13 = arith.constant dense<0xFF800000> : vector<1xf32>
    %22 = vector.multi_reduction <maximumf>, %21, %cst_13 [0] : vector<4x1xf32> to vector<1xf32>
    %23 = vector.shape_cast %22 : vector<1xf32> to vector<1x1xf32>
    %24 = vector.broadcast %23 : vector<1x1xf32> to vector<4x1xf32>
    %25 = arith.subf %21, %24 : vector<4x1xf32>
    %26 = math.exp %25 : vector<4x1xf32>
    %cst_14 = arith.constant dense<0.000000e+00> : vector<1xf32>
    %27 = vector.multi_reduction <add>, %26, %cst_14 [0] : vector<4x1xf32> to vector<1xf32>
    %28 = vector.shape_cast %27 : vector<1xf32> to vector<1x1xf32>
    %29 = tpu.reciprocal %28 {approx = true} : vector<1x1xf32> -> vector<1x1xf32>
    %30 = vector.broadcast %29 : vector<1x1xf32> to vector<4x1xf32>
    %31 = arith.mulf %26, %30 : vector<4x1xf32>
    %32 = vector.extract_strided_slice %31 {offsets = [0, 0], sizes = [1, 1], strides = [1, 1]} : vector<4x1xf32> to vector<1x1xf32>
    %c0_15 = arith.constant 0 : index
    %c0_16 = arith.constant 0 : index
    %c0_17 = arith.constant 0 : index
    %33 = vector.load %arg6[%c0_15, %c0_16, %c0_17] : memref<4x32x25xf32, #tpu.memory_space<vmem>>, vector<1x32x25xf32>
    %34 = vector.shape_cast %33 : vector<1x32x25xf32> to vector<32x25xf32>
    %35 = vector.shape_cast %32 : vector<1x1xf32> to vector<1x1xf32>
    %36 = vector.broadcast %35 : vector<1x1xf32> to vector<1x25xf32>
    %37 = vector.broadcast %36 : vector<1x25xf32> to vector<32x25xf32>
    %38 = arith.mulf %34, %37 : vector<32x25xf32>
    %c0_18 = arith.constant 0 : index
    %c0_19 = arith.constant 0 : index
    %c0_20 = arith.constant 0 : index
    %39 = vector.load %arg7[%c0_18, %c0_19, %c0_20] : memref<4x32x32xf32, #tpu.memory_space<vmem>>, vector<1x32x32xf32>
    %40 = vector.shape_cast %39 : vector<1x32x32xf32> to vector<32x32xf32>
    %41 = vector.shape_cast %32 : vector<1x1xf32> to vector<1x1xf32>
    %42 = vector.broadcast %41 : vector<1x1xf32> to vector<1x32xf32>
    %43 = vector.broadcast %42 : vector<1x32xf32> to vector<32x32xf32>
    %44 = arith.mulf %40, %43 : vector<32x32xf32>
    %45 = vector.extract_strided_slice %31 {offsets = [1, 0], sizes = [1, 1], strides = [1, 1]} : vector<4x1xf32> to vector<1x1xf32>
    %c1 = arith.constant 1 : index
    %c0_21 = arith.constant 0 : index
    %c0_22 = arith.constant 0 : index
    %46 = vector.load %arg6[%c1, %c0_21, %c0_22] : memref<4x32x25xf32, #tpu.memory_space<vmem>>, vector<1x32x25xf32>
    %47 = vector.shape_cast %46 : vector<1x32x25xf32> to vector<32x25xf32>
    %48 = vector.shape_cast %45 : vector<1x1xf32> to vector<1x1xf32>
    %49 = vector.broadcast %48 : vector<1x1xf32> to vector<1x25xf32>
    %50 = vector.broadcast %49 : vector<1x25xf32> to vector<32x25xf32>
    %51 = arith.mulf %47, %50 : vector<32x25xf32>
    %52 = arith.addf %38, %51 : vector<32x25xf32>
    %c1_23 = arith.constant 1 : index
    %c0_24 = arith.constant 0 : index
    %c0_25 = arith.constant 0 : index
    %53 = vector.load %arg7[%c1_23, %c0_24, %c0_25] : memref<4x32x32xf32, #tpu.memory_space<vmem>>, vector<1x32x32xf32>
    %54 = vector.shape_cast %53 : vector<1x32x32xf32> to vector<32x32xf32>
    %55 = vector.shape_cast %45 : vector<1x1xf32> to vector<1x1xf32>
    %56 = vector.broadcast %55 : vector<1x1xf32> to vector<1x32xf32>
    %57 = vector.broadcast %56 : vector<1x32xf32> to vector<32x32xf32>
    %58 = arith.mulf %54, %57 : vector<32x32xf32>
    %59 = arith.addf %44, %58 : vector<32x32xf32>
    %60 = vector.extract_strided_slice %31 {offsets = [2, 0], sizes = [1, 1], strides = [1, 1]} : vector<4x1xf32> to vector<1x1xf32>
    %c2 = arith.constant 2 : index
    %c0_26 = arith.constant 0 : index
    %c0_27 = arith.constant 0 : index
    %61 = vector.load %arg6[%c2, %c0_26, %c0_27] : memref<4x32x25xf32, #tpu.memory_space<vmem>>, vector<1x32x25xf32>
    %62 = vector.shape_cast %61 : vector<1x32x25xf32> to vector<32x25xf32>
    %63 = vector.shape_cast %60 : vector<1x1xf32> to vector<1x1xf32>
    %64 = vector.broadcast %63 : vector<1x1xf32> to vector<1x25xf32>
    %65 = vector.broadcast %64 : vector<1x25xf32> to vector<32x25xf32>
    %66 = arith.mulf %62, %65 : vector<32x25xf32>
    %67 = arith.addf %52, %66 : vector<32x25xf32>
    %c2_28 = arith.constant 2 : index
    %c0_29 = arith.constant 0 : index
    %c0_30 = arith.constant 0 : index
    %68 = vector.load %arg7[%c2_28, %c0_29, %c0_30] : memref<4x32x32xf32, #tpu.memory_space<vmem>>, vector<1x32x32xf32>
    %69 = vector.shape_cast %68 : vector<1x32x32xf32> to vector<32x32xf32>
    %70 = vector.shape_cast %60 : vector<1x1xf32> to vector<1x1xf32>
    %71 = vector.broadcast %70 : vector<1x1xf32> to vector<1x32xf32>
    %72 = vector.broadcast %71 : vector<1x32xf32> to vector<32x32xf32>
    %73 = arith.mulf %69, %72 : vector<32x32xf32>
    %74 = arith.addf %59, %73 : vector<32x32xf32>
    %75 = vector.extract_strided_slice %31 {offsets = [3, 0], sizes = [1, 1], strides = [1, 1]} : vector<4x1xf32> to vector<1x1xf32>
    %c3 = arith.constant 3 : index
    %c0_31 = arith.constant 0 : index
    %c0_32 = arith.constant 0 : index
    %76 = vector.load %arg6[%c3, %c0_31, %c0_32] : memref<4x32x25xf32, #tpu.memory_space<vmem>>, vector<1x32x25xf32>
    %77 = vector.shape_cast %76 : vector<1x32x25xf32> to vector<32x25xf32>
    %78 = vector.shape_cast %75 : vector<1x1xf32> to vector<1x1xf32>
    %79 = vector.broadcast %78 : vector<1x1xf32> to vector<1x25xf32>
    %80 = vector.broadcast %79 : vector<1x25xf32> to vector<32x25xf32>
    %81 = arith.mulf %77, %80 : vector<32x25xf32>
    %82 = arith.addf %67, %81 : vector<32x25xf32>
    %c3_33 = arith.constant 3 : index
    %c0_34 = arith.constant 0 : index
    %c0_35 = arith.constant 0 : index
    %83 = vector.load %arg7[%c3_33, %c0_34, %c0_35] : memref<4x32x32xf32, #tpu.memory_space<vmem>>, vector<1x32x32xf32>
    %84 = vector.shape_cast %83 : vector<1x32x32xf32> to vector<32x32xf32>
    %85 = vector.shape_cast %75 : vector<1x1xf32> to vector<1x1xf32>
    %86 = vector.broadcast %85 : vector<1x1xf32> to vector<1x32xf32>
    %87 = vector.broadcast %86 : vector<1x32xf32> to vector<32x32xf32>
    %88 = arith.mulf %84, %87 : vector<32x32xf32>
    %89 = arith.addf %74, %88 : vector<32x32xf32>
    %c32_i32 = arith.constant 32 : i32
    %90 = tpu.dynamic_rotate %1 by %c32_i32 dim 1 : vector<32x256xf32>, i32 -> vector<32x256xf32>
    %c2_i32 = arith.constant 2 : i32
    %91 = tpu.dynamic_rotate %90 by %c2_i32 dim 1 : vector<32x256xf32>, i32 -> vector<32x256xf32>
    %c0_36 = arith.constant 0 : index
    %c0_37 = arith.constant 0 : index
    %92 = vector.load %arg2[%c0_36, %c0_37] : memref<25x256xf32, #tpu.memory_space<vmem>>, vector<1x256xf32>
    %93 = vector.broadcast %92 : vector<1x256xf32> to vector<32x256xf32>
    %94 = arith.mulf %91, %93 : vector<32x256xf32>
    %95 = vector.extract_strided_slice %82 {offsets = [0, 0], sizes = [32, 1], strides = [1, 1]} : vector<32x25xf32> to vector<32x1xf32>
    %96 = vector.broadcast %95 : vector<32x1xf32> to vector<32x256xf32>
    %97 = arith.mulf %94, %96 : vector<32x256xf32>
    %c1_i32 = arith.constant 1 : i32
    %98 = tpu.dynamic_rotate %90 by %c1_i32 dim 1 : vector<32x256xf32>, i32 -> vector<32x256xf32>
    %c1_38 = arith.constant 1 : index
    %c0_39 = arith.constant 0 : index
    %99 = vector.load %arg2[%c1_38, %c0_39] : memref<25x256xf32, #tpu.memory_space<vmem>>, vector<1x256xf32>
    %100 = vector.broadcast %99 : vector<1x256xf32> to vector<32x256xf32>
    %101 = arith.mulf %98, %100 : vector<32x256xf32>
    %102 = vector.extract_strided_slice %82 {offsets = [0, 1], sizes = [32, 1], strides = [1, 1]} : vector<32x25xf32> to vector<32x1xf32>
    %103 = vector.broadcast %102 : vector<32x1xf32> to vector<32x256xf32>
    %104 = arith.mulf %101, %103 : vector<32x256xf32>
    %105 = arith.addf %97, %104 : vector<32x256xf32>
    %c2_40 = arith.constant 2 : index
    %c0_41 = arith.constant 0 : index
    %106 = vector.load %arg2[%c2_40, %c0_41] : memref<25x256xf32, #tpu.memory_space<vmem>>, vector<1x256xf32>
    %107 = vector.broadcast %106 : vector<1x256xf32> to vector<32x256xf32>
    %108 = arith.mulf %90, %107 : vector<32x256xf32>
    %109 = vector.extract_strided_slice %82 {offsets = [0, 2], sizes = [32, 1], strides = [1, 1]} : vector<32x25xf32> to vector<32x1xf32>
    %110 = vector.broadcast %109 : vector<32x1xf32> to vector<32x256xf32>
    %111 = arith.mulf %108, %110 : vector<32x256xf32>
    %112 = arith.addf %105, %111 : vector<32x256xf32>
    %c255_i32 = arith.constant 255 : i32
    %113 = tpu.dynamic_rotate %90 by %c255_i32 dim 1 : vector<32x256xf32>, i32 -> vector<32x256xf32>
    %c3_42 = arith.constant 3 : index
    %c0_43 = arith.constant 0 : index
    %114 = vector.load %arg2[%c3_42, %c0_43] : memref<25x256xf32, #tpu.memory_space<vmem>>, vector<1x256xf32>
    %115 = vector.broadcast %114 : vector<1x256xf32> to vector<32x256xf32>
    %116 = arith.mulf %113, %115 : vector<32x256xf32>
    %117 = vector.extract_strided_slice %82 {offsets = [0, 3], sizes = [32, 1], strides = [1, 1]} : vector<32x25xf32> to vector<32x1xf32>
    %118 = vector.broadcast %117 : vector<32x1xf32> to vector<32x256xf32>
    %119 = arith.mulf %116, %118 : vector<32x256xf32>
    %120 = arith.addf %112, %119 : vector<32x256xf32>
    %c254_i32 = arith.constant 254 : i32
    %121 = tpu.dynamic_rotate %90 by %c254_i32 dim 1 : vector<32x256xf32>, i32 -> vector<32x256xf32>
    %c4 = arith.constant 4 : index
    %c0_44 = arith.constant 0 : index
    %122 = vector.load %arg2[%c4, %c0_44] : memref<25x256xf32, #tpu.memory_space<vmem>>, vector<1x256xf32>
    %123 = vector.broadcast %122 : vector<1x256xf32> to vector<32x256xf32>
    %124 = arith.mulf %121, %123 : vector<32x256xf32>
    %125 = vector.extract_strided_slice %82 {offsets = [0, 4], sizes = [32, 1], strides = [1, 1]} : vector<32x25xf32> to vector<32x1xf32>
    %126 = vector.broadcast %125 : vector<32x1xf32> to vector<32x256xf32>
    %127 = arith.mulf %124, %126 : vector<32x256xf32>
    %128 = arith.addf %120, %127 : vector<32x256xf32>
    %c16_i32 = arith.constant 16 : i32
    %129 = tpu.dynamic_rotate %1 by %c16_i32 dim 1 : vector<32x256xf32>, i32 -> vector<32x256xf32>
    %c2_i32_45 = arith.constant 2 : i32
    %130 = tpu.dynamic_rotate %129 by %c2_i32_45 dim 1 : vector<32x256xf32>, i32 -> vector<32x256xf32>
    %c5 = arith.constant 5 : index
    %c0_46 = arith.constant 0 : index
    %131 = vector.load %arg2[%c5, %c0_46] : memref<25x256xf32, #tpu.memory_space<vmem>>, vector<1x256xf32>
    %132 = vector.broadcast %131 : vector<1x256xf32> to vector<32x256xf32>
    %133 = arith.mulf %130, %132 : vector<32x256xf32>
    %134 = vector.extract_strided_slice %82 {offsets = [0, 5], sizes = [32, 1], strides = [1, 1]} : vector<32x25xf32> to vector<32x1xf32>
    %135 = vector.broadcast %134 : vector<32x1xf32> to vector<32x256xf32>
    %136 = arith.mulf %133, %135 : vector<32x256xf32>
    %137 = arith.addf %128, %136 : vector<32x256xf32>
    %c1_i32_47 = arith.constant 1 : i32
    %138 = tpu.dynamic_rotate %129 by %c1_i32_47 dim 1 : vector<32x256xf32>, i32 -> vector<32x256xf32>
    %c6 = arith.constant 6 : index
    %c0_48 = arith.constant 0 : index
    %139 = vector.load %arg2[%c6, %c0_48] : memref<25x256xf32, #tpu.memory_space<vmem>>, vector<1x256xf32>
    %140 = vector.broadcast %139 : vector<1x256xf32> to vector<32x256xf32>
    %141 = arith.mulf %138, %140 : vector<32x256xf32>
    %142 = vector.extract_strided_slice %82 {offsets = [0, 6], sizes = [32, 1], strides = [1, 1]} : vector<32x25xf32> to vector<32x1xf32>
    %143 = vector.broadcast %142 : vector<32x1xf32> to vector<32x256xf32>
    %144 = arith.mulf %141, %143 : vector<32x256xf32>
    %145 = arith.addf %137, %144 : vector<32x256xf32>
    %c7 = arith.constant 7 : index
    %c0_49 = arith.constant 0 : index
    %146 = vector.load %arg2[%c7, %c0_49] : memref<25x256xf32, #tpu.memory_space<vmem>>, vector<1x256xf32>
    %147 = vector.broadcast %146 : vector<1x256xf32> to vector<32x256xf32>
    %148 = arith.mulf %129, %147 : vector<32x256xf32>
    %149 = vector.extract_strided_slice %82 {offsets = [0, 7], sizes = [32, 1], strides = [1, 1]} : vector<32x25xf32> to vector<32x1xf32>
    %150 = vector.broadcast %149 : vector<32x1xf32> to vector<32x256xf32>
    %151 = arith.mulf %148, %150 : vector<32x256xf32>
    %152 = arith.addf %145, %151 : vector<32x256xf32>
    %c255_i32_50 = arith.constant 255 : i32
    %153 = tpu.dynamic_rotate %129 by %c255_i32_50 dim 1 : vector<32x256xf32>, i32 -> vector<32x256xf32>
    %c8 = arith.constant 8 : index
    %c0_51 = arith.constant 0 : index
    %154 = vector.load %arg2[%c8, %c0_51] : memref<25x256xf32, #tpu.memory_space<vmem>>, vector<1x256xf32>
    %155 = vector.broadcast %154 : vector<1x256xf32> to vector<32x256xf32>
    %156 = arith.mulf %153, %155 : vector<32x256xf32>
    %157 = vector.extract_strided_slice %82 {offsets = [0, 8], sizes = [32, 1], strides = [1, 1]} : vector<32x25xf32> to vector<32x1xf32>
    %158 = vector.broadcast %157 : vector<32x1xf32> to vector<32x256xf32>
    %159 = arith.mulf %156, %158 : vector<32x256xf32>
    %160 = arith.addf %152, %159 : vector<32x256xf32>
    %c254_i32_52 = arith.constant 254 : i32
    %161 = tpu.dynamic_rotate %129 by %c254_i32_52 dim 1 : vector<32x256xf32>, i32 -> vector<32x256xf32>
    %c9 = arith.constant 9 : index
    %c0_53 = arith.constant 0 : index
    %162 = vector.load %arg2[%c9, %c0_53] : memref<25x256xf32, #tpu.memory_space<vmem>>, vector<1x256xf32>
    %163 = vector.broadcast %162 : vector<1x256xf32> to vector<32x256xf32>
    %164 = arith.mulf %161, %163 : vector<32x256xf32>
    %165 = vector.extract_strided_slice %82 {offsets = [0, 9], sizes = [32, 1], strides = [1, 1]} : vector<32x25xf32> to vector<32x1xf32>
    %166 = vector.broadcast %165 : vector<32x1xf32> to vector<32x256xf32>
    %167 = arith.mulf %164, %166 : vector<32x256xf32>
    %168 = arith.addf %160, %167 : vector<32x256xf32>
    %c2_i32_54 = arith.constant 2 : i32
    %169 = tpu.dynamic_rotate %1 by %c2_i32_54 dim 1 : vector<32x256xf32>, i32 -> vector<32x256xf32>
    %c10 = arith.constant 10 : index
    %c0_55 = arith.constant 0 : index
    %170 = vector.load %arg2[%c10, %c0_55] : memref<25x256xf32, #tpu.memory_space<vmem>>, vector<1x256xf32>
    %171 = vector.broadcast %170 : vector<1x256xf32> to vector<32x256xf32>
    %172 = arith.mulf %169, %171 : vector<32x256xf32>
    %173 = vector.extract_strided_slice %82 {offsets = [0, 10], sizes = [32, 1], strides = [1, 1]} : vector<32x25xf32> to vector<32x1xf32>
    %174 = vector.broadcast %173 : vector<32x1xf32> to vector<32x256xf32>
    %175 = arith.mulf %172, %174 : vector<32x256xf32>
    %176 = arith.addf %168, %175 : vector<32x256xf32>
    %c1_i32_56 = arith.constant 1 : i32
    %177 = tpu.dynamic_rotate %1 by %c1_i32_56 dim 1 : vector<32x256xf32>, i32 -> vector<32x256xf32>
    %c11 = arith.constant 11 : index
    %c0_57 = arith.constant 0 : index
    %178 = vector.load %arg2[%c11, %c0_57] : memref<25x256xf32, #tpu.memory_space<vmem>>, vector<1x256xf32>
    %179 = vector.broadcast %178 : vector<1x256xf32> to vector<32x256xf32>
    %180 = arith.mulf %177, %179 : vector<32x256xf32>
    %181 = vector.extract_strided_slice %82 {offsets = [0, 11], sizes = [32, 1], strides = [1, 1]} : vector<32x25xf32> to vector<32x1xf32>
    %182 = vector.broadcast %181 : vector<32x1xf32> to vector<32x256xf32>
    %183 = arith.mulf %180, %182 : vector<32x256xf32>
    %184 = arith.addf %176, %183 : vector<32x256xf32>
    %185 = vector.extract_strided_slice %82 {offsets = [0, 12], sizes = [32, 1], strides = [1, 1]} : vector<32x25xf32> to vector<32x1xf32>
    %186 = vector.broadcast %185 : vector<32x1xf32> to vector<32x256xf32>
    %187 = arith.mulf %1, %186 : vector<32x256xf32>
    %188 = arith.addf %184, %187 : vector<32x256xf32>
    %c255_i32_58 = arith.constant 255 : i32
    %189 = tpu.dynamic_rotate %1 by %c255_i32_58 dim 1 : vector<32x256xf32>, i32 -> vector<32x256xf32>
    %c13 = arith.constant 13 : index
    %c0_59 = arith.constant 0 : index
    %190 = vector.load %arg2[%c13, %c0_59] : memref<25x256xf32, #tpu.memory_space<vmem>>, vector<1x256xf32>
    %191 = vector.broadcast %190 : vector<1x256xf32> to vector<32x256xf32>
    %192 = arith.mulf %189, %191 : vector<32x256xf32>
    %193 = vector.extract_strided_slice %82 {offsets = [0, 13], sizes = [32, 1], strides = [1, 1]} : vector<32x25xf32> to vector<32x1xf32>
    %194 = vector.broadcast %193 : vector<32x1xf32> to vector<32x256xf32>
    %195 = arith.mulf %192, %194 : vector<32x256xf32>
    %196 = arith.addf %188, %195 : vector<32x256xf32>
    %c254_i32_60 = arith.constant 254 : i32
    %197 = tpu.dynamic_rotate %1 by %c254_i32_60 dim 1 : vector<32x256xf32>, i32 -> vector<32x256xf32>
    %c14 = arith.constant 14 : index
    %c0_61 = arith.constant 0 : index
    %198 = vector.load %arg2[%c14, %c0_61] : memref<25x256xf32, #tpu.memory_space<vmem>>, vector<1x256xf32>
    %199 = vector.broadcast %198 : vector<1x256xf32> to vector<32x256xf32>
    %200 = arith.mulf %197, %199 : vector<32x256xf32>
    %201 = vector.extract_strided_slice %82 {offsets = [0, 14], sizes = [32, 1], strides = [1, 1]} : vector<32x25xf32> to vector<32x1xf32>
    %202 = vector.broadcast %201 : vector<32x1xf32> to vector<32x256xf32>
    %203 = arith.mulf %200, %202 : vector<32x256xf32>
    %204 = arith.addf %196, %203 : vector<32x256xf32>
    %c240_i32 = arith.constant 240 : i32
    %205 = tpu.dynamic_rotate %1 by %c240_i32 dim 1 : vector<32x256xf32>, i32 -> vector<32x256xf32>
    %c2_i32_62 = arith.constant 2 : i32
    %206 = tpu.dynamic_rotate %205 by %c2_i32_62 dim 1 : vector<32x256xf32>, i32 -> vector<32x256xf32>
    %c15 = arith.constant 15 : index
    %c0_63 = arith.constant 0 : index
    %207 = vector.load %arg2[%c15, %c0_63] : memref<25x256xf32, #tpu.memory_space<vmem>>, vector<1x256xf32>
    %208 = vector.broadcast %207 : vector<1x256xf32> to vector<32x256xf32>
    %209 = arith.mulf %206, %208 : vector<32x256xf32>
    %210 = vector.extract_strided_slice %82 {offsets = [0, 15], sizes = [32, 1], strides = [1, 1]} : vector<32x25xf32> to vector<32x1xf32>
    %211 = vector.broadcast %210 : vector<32x1xf32> to vector<32x256xf32>
    %212 = arith.mulf %209, %211 : vector<32x256xf32>
    %213 = arith.addf %204, %212 : vector<32x256xf32>
    %c1_i32_64 = arith.constant 1 : i32
    %214 = tpu.dynamic_rotate %205 by %c1_i32_64 dim 1 : vector<32x256xf32>, i32 -> vector<32x256xf32>
    %c16 = arith.constant 16 : index
    %c0_65 = arith.constant 0 : index
    %215 = vector.load %arg2[%c16, %c0_65] : memref<25x256xf32, #tpu.memory_space<vmem>>, vector<1x256xf32>
    %216 = vector.broadcast %215 : vector<1x256xf32> to vector<32x256xf32>
    %217 = arith.mulf %214, %216 : vector<32x256xf32>
    %218 = vector.extract_strided_slice %82 {offsets = [0, 16], sizes = [32, 1], strides = [1, 1]} : vector<32x25xf32> to vector<32x1xf32>
    %219 = vector.broadcast %218 : vector<32x1xf32> to vector<32x256xf32>
    %220 = arith.mulf %217, %219 : vector<32x256xf32>
    %221 = arith.addf %213, %220 : vector<32x256xf32>
    %c17 = arith.constant 17 : index
    %c0_66 = arith.constant 0 : index
    %222 = vector.load %arg2[%c17, %c0_66] : memref<25x256xf32, #tpu.memory_space<vmem>>, vector<1x256xf32>
    %223 = vector.broadcast %222 : vector<1x256xf32> to vector<32x256xf32>
    %224 = arith.mulf %205, %223 : vector<32x256xf32>
    %225 = vector.extract_strided_slice %82 {offsets = [0, 17], sizes = [32, 1], strides = [1, 1]} : vector<32x25xf32> to vector<32x1xf32>
    %226 = vector.broadcast %225 : vector<32x1xf32> to vector<32x256xf32>
    %227 = arith.mulf %224, %226 : vector<32x256xf32>
    %228 = arith.addf %221, %227 : vector<32x256xf32>
    %c255_i32_67 = arith.constant 255 : i32
    %229 = tpu.dynamic_rotate %205 by %c255_i32_67 dim 1 : vector<32x256xf32>, i32 -> vector<32x256xf32>
    %c18 = arith.constant 18 : index
    %c0_68 = arith.constant 0 : index
    %230 = vector.load %arg2[%c18, %c0_68] : memref<25x256xf32, #tpu.memory_space<vmem>>, vector<1x256xf32>
    %231 = vector.broadcast %230 : vector<1x256xf32> to vector<32x256xf32>
    %232 = arith.mulf %229, %231 : vector<32x256xf32>
    %233 = vector.extract_strided_slice %82 {offsets = [0, 18], sizes = [32, 1], strides = [1, 1]} : vector<32x25xf32> to vector<32x1xf32>
    %234 = vector.broadcast %233 : vector<32x1xf32> to vector<32x256xf32>
    %235 = arith.mulf %232, %234 : vector<32x256xf32>
    %236 = arith.addf %228, %235 : vector<32x256xf32>
    %c254_i32_69 = arith.constant 254 : i32
    %237 = tpu.dynamic_rotate %205 by %c254_i32_69 dim 1 : vector<32x256xf32>, i32 -> vector<32x256xf32>
    %c19 = arith.constant 19 : index
    %c0_70 = arith.constant 0 : index
    %238 = vector.load %arg2[%c19, %c0_70] : memref<25x256xf32, #tpu.memory_space<vmem>>, vector<1x256xf32>
    %239 = vector.broadcast %238 : vector<1x256xf32> to vector<32x256xf32>
    %240 = arith.mulf %237, %239 : vector<32x256xf32>
    %241 = vector.extract_strided_slice %82 {offsets = [0, 19], sizes = [32, 1], strides = [1, 1]} : vector<32x25xf32> to vector<32x1xf32>
    %242 = vector.broadcast %241 : vector<32x1xf32> to vector<32x256xf32>
    %243 = arith.mulf %240, %242 : vector<32x256xf32>
    %244 = arith.addf %236, %243 : vector<32x256xf32>
    %c224_i32 = arith.constant 224 : i32
    %245 = tpu.dynamic_rotate %1 by %c224_i32 dim 1 : vector<32x256xf32>, i32 -> vector<32x256xf32>
    %c2_i32_71 = arith.constant 2 : i32
    %246 = tpu.dynamic_rotate %245 by %c2_i32_71 dim 1 : vector<32x256xf32>, i32 -> vector<32x256xf32>
    %c20 = arith.constant 20 : index
    %c0_72 = arith.constant 0 : index
    %247 = vector.load %arg2[%c20, %c0_72] : memref<25x256xf32, #tpu.memory_space<vmem>>, vector<1x256xf32>
    %248 = vector.broadcast %247 : vector<1x256xf32> to vector<32x256xf32>
    %249 = arith.mulf %246, %248 : vector<32x256xf32>
    %250 = vector.extract_strided_slice %82 {offsets = [0, 20], sizes = [32, 1], strides = [1, 1]} : vector<32x25xf32> to vector<32x1xf32>
    %251 = vector.broadcast %250 : vector<32x1xf32> to vector<32x256xf32>
    %252 = arith.mulf %249, %251 : vector<32x256xf32>
    %253 = arith.addf %244, %252 : vector<32x256xf32>
    %c1_i32_73 = arith.constant 1 : i32
    %254 = tpu.dynamic_rotate %245 by %c1_i32_73 dim 1 : vector<32x256xf32>, i32 -> vector<32x256xf32>
    %c21 = arith.constant 21 : index
    %c0_74 = arith.constant 0 : index
    %255 = vector.load %arg2[%c21, %c0_74] : memref<25x256xf32, #tpu.memory_space<vmem>>, vector<1x256xf32>
    %256 = vector.broadcast %255 : vector<1x256xf32> to vector<32x256xf32>
    %257 = arith.mulf %254, %256 : vector<32x256xf32>
    %258 = vector.extract_strided_slice %82 {offsets = [0, 21], sizes = [32, 1], strides = [1, 1]} : vector<32x25xf32> to vector<32x1xf32>
    %259 = vector.broadcast %258 : vector<32x1xf32> to vector<32x256xf32>
    %260 = arith.mulf %257, %259 : vector<32x256xf32>
    %261 = arith.addf %253, %260 : vector<32x256xf32>
    %c22 = arith.constant 22 : index
    %c0_75 = arith.constant 0 : index
    %262 = vector.load %arg2[%c22, %c0_75] : memref<25x256xf32, #tpu.memory_space<vmem>>, vector<1x256xf32>
    %263 = vector.broadcast %262 : vector<1x256xf32> to vector<32x256xf32>
    %264 = arith.mulf %245, %263 : vector<32x256xf32>
    %265 = vector.extract_strided_slice %82 {offsets = [0, 22], sizes = [32, 1], strides = [1, 1]} : vector<32x25xf32> to vector<32x1xf32>
    %266 = vector.broadcast %265 : vector<32x1xf32> to vector<32x256xf32>
    %267 = arith.mulf %264, %266 : vector<32x256xf32>
    %268 = arith.addf %261, %267 : vector<32x256xf32>
    %c255_i32_76 = arith.constant 255 : i32
    %269 = tpu.dynamic_rotate %245 by %c255_i32_76 dim 1 : vector<32x256xf32>, i32 -> vector<32x256xf32>
    %c23 = arith.constant 23 : index
    %c0_77 = arith.constant 0 : index
    %270 = vector.load %arg2[%c23, %c0_77] : memref<25x256xf32, #tpu.memory_space<vmem>>, vector<1x256xf32>
    %271 = vector.broadcast %270 : vector<1x256xf32> to vector<32x256xf32>
    %272 = arith.mulf %269, %271 : vector<32x256xf32>
    %273 = vector.extract_strided_slice %82 {offsets = [0, 23], sizes = [32, 1], strides = [1, 1]} : vector<32x25xf32> to vector<32x1xf32>
    %274 = vector.broadcast %273 : vector<32x1xf32> to vector<32x256xf32>
    %275 = arith.mulf %272, %274 : vector<32x256xf32>
    %276 = arith.addf %268, %275 : vector<32x256xf32>
    %c254_i32_78 = arith.constant 254 : i32
    %277 = tpu.dynamic_rotate %245 by %c254_i32_78 dim 1 : vector<32x256xf32>, i32 -> vector<32x256xf32>
    %c24 = arith.constant 24 : index
    %c0_79 = arith.constant 0 : index
    %278 = vector.load %arg2[%c24, %c0_79] : memref<25x256xf32, #tpu.memory_space<vmem>>, vector<1x256xf32>
    %279 = vector.broadcast %278 : vector<1x256xf32> to vector<32x256xf32>
    %280 = arith.mulf %277, %279 : vector<32x256xf32>
    %281 = vector.extract_strided_slice %82 {offsets = [0, 24], sizes = [32, 1], strides = [1, 1]} : vector<32x25xf32> to vector<32x1xf32>
    %282 = vector.broadcast %281 : vector<32x1xf32> to vector<32x256xf32>
    %283 = arith.mulf %280, %282 : vector<32x256xf32>
    %284 = arith.addf %276, %283 : vector<32x256xf32>
    %c0_80 = arith.constant 0 : index
    %c0_81 = arith.constant 0 : index
    %285 = vector.load %arg11[%c0_80, %c0_81] : memref<32x8xf32, #tpu.memory_space<vmem>>, vector<32x1xf32>
    %286 = vector.broadcast %285 : vector<32x1xf32> to vector<32x256xf32>
    %287 = arith.mulf %284, %286 : vector<32x256xf32>
    %c0_82 = arith.constant 0 : index
    %c1_83 = arith.constant 1 : index
    %288 = vector.load %arg11[%c0_82, %c1_83] : memref<32x8xf32, #tpu.memory_space<vmem>>, vector<32x1xf32>
    %289 = vector.broadcast %288 : vector<32x1xf32> to vector<32x256xf32>
    %290 = arith.addf %287, %289 : vector<32x256xf32>
    %cst_84 = arith.constant 0.000000e+00 : f32
    %291 = vector.broadcast %cst_84 : f32 to vector<32x256xf32>
    %292 = arith.maximumf %290, %291 : vector<32x256xf32>
    %cst_85 = arith.constant dense<0.000000e+00> : vector<32xf32>
    %293 = vector.multi_reduction <add>, %292, %cst_85 [1] : vector<32x256xf32> to vector<32xf32>
    %294 = vector.shape_cast %293 : vector<32xf32> to vector<32x1xf32>
    %cst_86 = arith.constant 2.560000e+02 : f32
    %295 = vector.broadcast %cst_86 : f32 to vector<32x1xf32>
    %296 = arith.divf %294, %295 : vector<32x1xf32>
    %c0_87 = arith.constant 0 : index
    %c0_88 = arith.constant 0 : index
    %297 = vector.load %arg8[%c0_87, %c0_88] : memref<32x16xf32, #tpu.memory_space<vmem>>, vector<32x16xf32>
    %298 = vector.broadcast %296 : vector<32x1xf32> to vector<32x16xf32>
    %299 = arith.mulf %297, %298 : vector<32x16xf32>
    %cst_89 = arith.constant dense<0.000000e+00> : vector<16xf32>
    %300 = vector.multi_reduction <add>, %299, %cst_89 [0] : vector<32x16xf32> to vector<16xf32>
    %301 = vector.shape_cast %300 : vector<16xf32> to vector<1x16xf32>
    %c0_90 = arith.constant 0 : index
    %c0_91 = arith.constant 0 : index
    %302 = vector.load %arg9[%c0_90, %c0_91] : memref<1x16xf32, #tpu.memory_space<vmem>>, vector<1x16xf32>
    %303 = arith.addf %301, %302 : vector<1x16xf32>
    %cst_92 = arith.constant 0.000000e+00 : f32
    %304 = vector.broadcast %cst_92 : f32 to vector<1x16xf32>
    %305 = arith.maximumf %303, %304 : vector<1x16xf32>
    %c0_93 = arith.constant 0 : index
    %c0_94 = arith.constant 0 : index
    %306 = vector.load %arg10[%c0_93, %c0_94] : memref<32x16xf32, #tpu.memory_space<vmem>>, vector<32x16xf32>
    %307 = vector.broadcast %305 : vector<1x16xf32> to vector<32x16xf32>
    %308 = arith.mulf %306, %307 : vector<32x16xf32>
    %cst_95 = arith.constant dense<0.000000e+00> : vector<32xf32>
    %309 = vector.multi_reduction <add>, %308, %cst_95 [1] : vector<32x16xf32> to vector<32xf32>
    %310 = vector.shape_cast %309 : vector<32xf32> to vector<32x1xf32>
    %c0_96 = arith.constant 0 : index
    %c6_97 = arith.constant 6 : index
    %311 = vector.load %arg11[%c0_96, %c6_97] : memref<32x8xf32, #tpu.memory_space<vmem>>, vector<32x1xf32>
    %312 = arith.addf %310, %311 : vector<32x1xf32>
    %313 = arith.negf %312 : vector<32x1xf32>
    %314 = math.exp %313 : vector<32x1xf32>
    %cst_98 = arith.constant 1.000000e+00 : f32
    %315 = vector.broadcast %cst_98 : f32 to vector<32x1xf32>
    %316 = arith.addf %315, %314 : vector<32x1xf32>
    %317 = arith.divf %315, %316 : vector<32x1xf32>
    %318 = vector.broadcast %317 : vector<32x1xf32> to vector<32x256xf32>
    %319 = arith.mulf %292, %318 : vector<32x256xf32>
    %cst_99 = arith.constant dense<0.000000e+00> : vector<32x256xf32>
    %320 = tpu.matmul %89, %319, %cst_99 {dimension_numbers = #tpu.dot_dimension_numbers<[1], [0], [0], [1], [0, 0, 1, 1], [], []>} : vector<32x32xf32>, vector<32x256xf32>, vector<32x256xf32> -> vector<32x256xf32>
    %c0_100 = arith.constant 0 : index
    %c2_101 = arith.constant 2 : index
    %321 = vector.load %arg11[%c0_100, %c2_101] : memref<32x8xf32, #tpu.memory_space<vmem>>, vector<32x1xf32>
    %322 = vector.broadcast %321 : vector<32x1xf32> to vector<32x256xf32>
    %323 = arith.mulf %320, %322 : vector<32x256xf32>
    %c0_102 = arith.constant 0 : index
    %c3_103 = arith.constant 3 : index
    %324 = vector.load %arg11[%c0_102, %c3_103] : memref<32x8xf32, #tpu.memory_space<vmem>>, vector<32x1xf32>
    %325 = vector.broadcast %324 : vector<32x1xf32> to vector<32x256xf32>
    %326 = arith.addf %323, %325 : vector<32x256xf32>
    %cst_104 = arith.constant 0.000000e+00 : f32
    %327 = vector.broadcast %cst_104 : f32 to vector<32x256xf32>
    %328 = arith.maximumf %326, %327 : vector<32x256xf32>
    %329 = arith.addf %328, %1 : vector<32x256xf32>
    %cst_105 = arith.constant dense<0.000000e+00> : vector<256xf32>
    %330 = vector.multi_reduction <add>, %329, %cst_105 [0] : vector<32x256xf32> to vector<256xf32>
    %331 = vector.shape_cast %330 : vector<256xf32> to vector<1x256xf32>
    %cst_106 = arith.constant 3.200000e+01 : f32
    %332 = vector.broadcast %cst_106 : f32 to vector<1x256xf32>
    %333 = arith.divf %331, %332 : vector<1x256xf32>
    %334 = vector.broadcast %333 : vector<1x256xf32> to vector<32x256xf32>
    %335 = arith.subf %329, %334 : vector<32x256xf32>
    %336 = arith.mulf %335, %335 : vector<32x256xf32>
    %cst_107 = arith.constant dense<0.000000e+00> : vector<256xf32>
    %337 = vector.multi_reduction <add>, %336, %cst_107 [0] : vector<32x256xf32> to vector<256xf32>
    %338 = vector.shape_cast %337 : vector<256xf32> to vector<1x256xf32>
    %cst_108 = arith.constant 3.200000e+01 : f32
    %339 = vector.broadcast %cst_108 : f32 to vector<1x256xf32>
    %340 = arith.divf %338, %339 : vector<1x256xf32>
    %341 = vector.broadcast %333 : vector<1x256xf32> to vector<32x256xf32>
    %342 = arith.subf %329, %341 : vector<32x256xf32>
    %cst_109 = arith.constant 9.99999974E-6 : f32
    %343 = vector.broadcast %cst_109 : f32 to vector<1x256xf32>
    %344 = arith.addf %340, %343 : vector<1x256xf32>
    %345 = math.rsqrt %344 : vector<1x256xf32>
    %346 = vector.broadcast %345 : vector<1x256xf32> to vector<32x256xf32>
    %347 = arith.mulf %342, %346 : vector<32x256xf32>
    %c0_110 = arith.constant 0 : index
    %c4_111 = arith.constant 4 : index
    %348 = vector.load %arg11[%c0_110, %c4_111] : memref<32x8xf32, #tpu.memory_space<vmem>>, vector<32x1xf32>
    %349 = vector.broadcast %348 : vector<32x1xf32> to vector<32x256xf32>
    %350 = arith.mulf %347, %349 : vector<32x256xf32>
    %c0_112 = arith.constant 0 : index
    %c5_113 = arith.constant 5 : index
    %351 = vector.load %arg11[%c0_112, %c5_113] : memref<32x8xf32, #tpu.memory_space<vmem>>, vector<32x1xf32>
    %352 = vector.broadcast %351 : vector<32x1xf32> to vector<32x256xf32>
    %353 = arith.addf %350, %352 : vector<32x256xf32>
    %c0_114 = arith.constant 0 : index
    %c0_115 = arith.constant 0 : index
    %c0_116 = arith.constant 0 : index
    %354 = vector.load %arg12[%c0_114, %c0_115, %c0_116] : memref<1x32x256xf32, #tpu.memory_space<vmem>>, vector<1x32x256xf32>
    %355 = vector.shape_cast %354 : vector<1x32x256xf32> to vector<32x256xf32>
    %356 = vector.shape_cast %353 : vector<32x256xf32> to vector<1x32x256xf32>
    tpu.vector_store %arg12[%c0_114, %c0_115, %c0_116], %356 {strides = array<i32>} : memref<1x32x256xf32, #tpu.memory_space<vmem>>, vector<1x32x256xf32>,
    return
  }
  func.func @transform_0(%arg0: i32) -> (i32, i32, i32) {
    %c0_i32 = arith.constant 0 : i32
    %c0_i32_0 = arith.constant 0 : i32
    %c0_i32_1 = arith.constant 0 : i32
    return %arg0, %c0_i32, %c0_i32_0 : i32, i32, i32
  }
  func.func @transform_1(%arg0: i32) -> (i32, i32) {
    %c0_i32 = arith.constant 0 : i32
    %c0_i32_0 = arith.constant 0 : i32
    %c0_i32_1 = arith.constant 0 : i32
    return %c0_i32, %c0_i32_0 : i32, i32
  }
  func.func @transform_2(%arg0: i32) -> (i32, i32) {
    %c0_i32 = arith.constant 0 : i32
    %c0_i32_0 = arith.constant 0 : i32
    %c0_i32_1 = arith.constant 0 : i32
    return %c0_i32, %c0_i32_0 : i32, i32
  }
  func.func @transform_3(%arg0: i32) -> (i32, i32) {
    %c0_i32 = arith.constant 0 : i32
    %c0_i32_0 = arith.constant 0 : i32
    %c0_i32_1 = arith.constant 0 : i32
    return %c0_i32, %c0_i32_0 : i32, i32
  }
  func.func @transform_4(%arg0: i32) -> (i32, i32) {
    %c0_i32 = arith.constant 0 : i32
    %c0_i32_0 = arith.constant 0 : i32
    %c0_i32_1 = arith.constant 0 : i32
    return %c0_i32, %c0_i32_0 : i32, i32
  }
  func.func @transform_5(%arg0: i32) -> (i32, i32, i32) {
    %c0_i32 = arith.constant 0 : i32
    %c0_i32_0 = arith.constant 0 : i32
    %c0_i32_1 = arith.constant 0 : i32
    %c0_i32_2 = arith.constant 0 : i32
    return %c0_i32, %c0_i32_0, %c0_i32_1 : i32, i32, i32
  }
  func.func @transform_6(%arg0: i32) -> (i32, i32, i32) {
    %c0_i32 = arith.constant 0 : i32
    %c0_i32_0 = arith.constant 0 : i32
    %c0_i32_1 = arith.constant 0 : i32
    %c0_i32_2 = arith.constant 0 : i32
    return %c0_i32, %c0_i32_0, %c0_i32_1 : i32, i32, i32
  }
  func.func @transform_7(%arg0: i32) -> (i32, i32) {
    %c0_i32 = arith.constant 0 : i32
    %c0_i32_0 = arith.constant 0 : i32
    %c0_i32_1 = arith.constant 0 : i32
    return %c0_i32, %c0_i32_0 : i32, i32
  }
  func.func @transform_8(%arg0: i32) -> (i32, i32) {
    %c0_i32 = arith.constant 0 : i32
    %c0_i32_0 = arith.constant 0 : i32
    %c0_i32_1 = arith.constant 0 : i32
    return %c0_i32, %c0_i32_0 : i32, i32
  }
  func.func @transform_9(%arg0: i32) -> (i32, i32) {
    %c0_i32 = arith.constant 0 : i32
    %c0_i32_0 = arith.constant 0 : i32
    %c0_i32_1 = arith.constant 0 : i32
    return %c0_i32, %c0_i32_0 : i32, i32
  }
  func.func @transform_10(%arg0: i32) -> (i32, i32) {
    %c0_i32 = arith.constant 0 : i32
    %c0_i32_0 = arith.constant 0 : i32
    %c0_i32_1 = arith.constant 0 : i32
    return %c0_i32, %c0_i32_0 : i32, i32
  }
  func.func @transform_11(%arg0: i32) -> (i32, i32, i32) {
    %c0_i32 = arith.constant 0 : i32
    %c0_i32_0 = arith.constant 0 : i32
    %c0_i32_1 = arith.constant 0 : i32
    return %arg0, %c0_i32, %c0_i32_0 : i32, i32, i32
  }
}

</mosaic_0001>

<llo_original>
// kernel: tpu_custom_call.1
$region0: #{tpu_custom_call.1}
  #allocation0 [shape = 'u32[]', space=smem, size = 0x4, offset = 0x4, fixed_abs, tag = 'smem constant byte address 0x4 - core index']
  #allocation1 [shape = 'u32[72,128]{1,0:T(1,128)}', space=vmem, size = 0x9000, scoped, tag = 'internal scratch']
  %s0 = inlined_call_operand.vmem [shape: f32[2,32,256], index: 0, kind: input, shape index: {}]
  %s1 = inlined_call_operand.hbm [shape: f32[25,256], index: 1, kind: input, shape index: {}]
  %s2 = inlined_call_operand.hbm [shape: f32[32,32], index: 2, kind: input, shape index: {}]
  %s3 = inlined_call_operand.hbm [shape: f32[1,32], index: 3, kind: input, shape index: {}]
  %s4 = inlined_call_operand.hbm [shape: f32[4,32], index: 4, kind: input, shape index: {}]
  %s5 = inlined_call_operand.vmem [shape: f32[4,32,25], index: 5, kind: input, shape index: {}]
  %s6 = inlined_call_operand.vmem [shape: f32[4,32,32], index: 6, kind: input, shape index: {}]
  %s7 = inlined_call_operand.vmem [shape: f32[32,16], index: 7, kind: input, shape index: {}]
  %s8 = inlined_call_operand.hbm [shape: f32[1,16], index: 8, kind: input, shape index: {}]
  %s9 = inlined_call_operand.vmem [shape: f32[32,16], index: 9, kind: input, shape index: {}]
  %s10 = inlined_call_operand.vmem [shape: f32[32,8], index: 10, kind: input, shape index: {}]
  %s11 = inlined_call_operand.hbm [shape: f32[2,32,256], index: 11, kind: output, shape index: {}]
  %s12 = sld [smem:[#allocation0]]
  $region97: #{tpu_custom_call.1} parent=0
    _
  %s14 = ssub.s32 1, %s12
  %s15 = scalar_select 0, %s14, %s12
  $region1: #{tpu_custom_call.1} parent=0
    #allocation2 [shape = 'u8[32768]{0}', space=vmem, size = 0x8000, scoped, tag = 'input window, operand 1, single buffered']
    #allocation3 [shape = 's32[2]{0}', space=sflag, size = 0x8, scoped, tag = 'scoped memory for tpu_custom_call.1']
    #allocation4 [shape = 's32[2]{0}', space=sflag, size = 0x8, scoped, tag = 'scoped memory for tpu_custom_call.1']
    #allocation5 [shape = 'u8[16384]{0}', space=vmem, size = 0x4000, scoped, tag = 'input window, operand 2, single buffered']
    #allocation6 [shape = 's32[1]{0}', space=sflag, size = 0x4, scoped, tag = 'scoped memory for tpu_custom_call.1']
    #allocation7 [shape = 'u8[512]{0}', space=vmem, size = 0x400, scoped, tag = 'input window, operand 3, single buffered']
    #allocation8 [shape = 'u8[2048]{0}', space=vmem, size = 0x800, scoped, tag = 'input window, operand 4, single buffered']
    #allocation9 [shape = 's32[1]{0}', space=sflag, size = 0x4, scoped, tag = 'scoped memory for tpu_custom_call.1']
    #allocation10 [shape = 'u8[512]{0}', space=vmem, size = 0x400, scoped, tag = 'input window, operand 8, single buffered']
    #allocation11 [shape = 'u8[65536]{0}', space=vmem, size = 0x10000, scoped, tag = 'output window, operand 0']
    %16 = vsyncpa [#allocation3], 0
    %17 = vsyncpa [#allocation6], 0
    %18 = vsyncpa [#allocation9], 0
    %19 = vsyncpa [#allocation4], 0
    %s20 = scalar_lea.sflag [#allocation4], 1
    %21 = vsyncpa %s20, 0
    loop: start=0, step=1, limit=4
    $region2: #{tpu_custom_call.1} parent=1 // loop_pre_header
      _
    $region3: #{tpu_custom_call.1} parent=1 // loop_header
      %s23 = sphi 0, %s27
      %p24 = scmp.ge.s32.totalorder %s23, 4
      %s33 = sphi 0, %s35
      %s36 = sphi 0, %s33
      %s37 = sphi 0, %s36
      %s53 = sphi 0, %s37
      %s57 = sphi 0, %s57
      %s59 = sphi 0, %s57
      %s60 = sphi 0, %s59
      %s74 = sphi 0, %s60
      %s78 = sphi 0, %s78
      %s80 = sphi 0, %s78
      %s81 = sphi 0, %s80
      %s95 = sphi 0, %s81
      %s99 = sphi 0, %s99
      %s101 = sphi 0, %s99
      %s102 = sphi 0, %s101
      %s116 = sphi 0, %s102
      %s120 = sphi 0, %s120
      %s122 = sphi 0, %s120
      %s123 = sphi 0, %s122
      %s137 = sphi 0, %s123
      %s141 = sphi 0, %s141
      %s143 = sphi 0, %s141
      %s144 = sphi 0, %s143
      %s158 = sphi 0, %s144
      %s162 = sphi 0, %s162
      %s164 = sphi 0, %s162
      %s165 = sphi 0, %s164
      %s179 = sphi 0, %s165
      %s183 = sphi 0, %s183
      %s185 = sphi 0, %s183
      %s186 = sphi 0, %s185
      %s200 = sphi 0, %s186
      %s204 = sphi 0, %s204
      %s206 = sphi 0, %s204
      %s207 = sphi 0, %s206
      %s221 = sphi 0, %s207
      %s225 = sphi 0, %s225
      %s227 = sphi 0, %s225
      %s228 = sphi 0, %s227
      %s242 = sphi 0, %s228
      %s246 = sphi 0, %s246
      %s248 = sphi 0, %s246
      %s249 = sphi 0, %s248
      %s263 = sphi 0, %s249
      %s269 = sphi 0, %s271
      %s272 = sphi 0, %s269
      %s273 = sphi 0, %s272
      %s289 = sphi 0, %s273
    $region4: #{tpu_custom_call.1} parent=1 // loop_header_branch
      %26 = sbr.rel (%p24) target = $region8
    $region5: #{tpu_custom_call.1} parent=1 // loop_body
      %s28 = ssub.s32 %s23, 1
      %s29 = ssub.s32 %s23, 2
      %s30 = sadd.s32 %s23, 1
      %s31 = ssub.s32 %s23, %s30
      %p32 = scmp.eq.s32.totalorder %s31, 0
      %s34 = sadd.s32 %s33, 1
      %s35 = scalar_select %p32, %s33, %s34
      %p38 = pneg %p32
      %p39 = scmp.eq.s32.totalorder %s23, 1
      %p40 = por %p38, %p39
      %p41 = scmp.ne.s32.totalorder %s33, %s36
      %p42 = scmp.eq.s32.totalorder %s23, 0
      %p43 = por %p41, %p42
      %p44 = scmp.ne.s32.totalorder %s33, %s36
      %p45 = scmp.eq.s32.totalorder %s28, 1
      %p46 = por %p44, %p45
      %p47 = scmp.ne.s32.totalorder %s36, %s37
      %p48 = scmp.eq.s32.totalorder %s28, 0
      %p49 = por %p47, %p48
      %p50 = scmp.ne.s32.totalorder %s36, %s37
      %p51 = scmp.eq.s32.totalorder %s29, 1
      %p52 = por %p50, %p51
      %p54 = scmp.ne.s32.totalorder %s37, %s53
      %p55 = scmp.eq.s32.totalorder %s29, 0
      %p56 = por %p54, %p55
      %s58 = sadd.s32 %s57, 1
      %p61 = scmp.eq.s32.totalorder %s23, 1
      %p62 = scmp.ne.s32.totalorder %s57, %s59
      %p63 = scmp.eq.s32.totalorder %s23, 0
      %p64 = por %p62, %p63
      %p65 = scmp.ne.s32.totalorder %s57, %s59
      %p66 = scmp.eq.s32.totalorder %s28, 1
      %p67 = por %p65, %p66
      %p68 = scmp.ne.s32.totalorder %s59, %s60
      %p69 = scmp.eq.s32.totalorder %s28, 0
      %p70 = por %p68, %p69
      %p71 = scmp.ne.s32.totalorder %s59, %s60
      %p72 = scmp.eq.s32.totalorder %s29, 1
      %p73 = por %p71, %p72
      %p75 = scmp.ne.s32.totalorder %s60, %s74
      %p76 = scmp.eq.s32.totalorder %s29, 0
      %p77 = por %p75, %p76
      %s79 = sadd.s32 %s78, 1
      %p82 = scmp.eq.s32.totalorder %s23, 1
      %p83 = scmp.ne.s32.totalorder %s78, %s80
      %p84 = scmp.eq.s32.totalorder %s23, 0
      %p85 = por %p83, %p84
      %p86 = scmp.ne.s32.totalorder %s78, %s80
      %p87 = scmp.eq.s32.totalorder %s28, 1
      %p88 = por %p86, %p87
      %p89 = scmp.ne.s32.totalorder %s80, %s81
      %p90 = scmp.eq.s32.totalorder %s28, 0
      %p91 = por %p89, %p90
      %p92 = scmp.ne.s32.totalorder %s80, %s81
      %p93 = scmp.eq.s32.totalorder %s29, 1
      %p94 = por %p92, %p93
      %p96 = scmp.ne.s32.totalorder %s81, %s95
      %p97 = scmp.eq.s32.totalorder %s29, 0
      %p98 = por %p96, %p97
      %s100 = sadd.s32 %s99, 1
      %p103 = scmp.eq.s32.totalorder %s23, 1
      %p104 = scmp.ne.s32.totalorder %s99, %s101
      %p105 = scmp.eq.s32.totalorder %s23, 0
      %p106 = por %p104, %p105
      %p107 = scmp.ne.s32.totalorder %s99, %s101
      %p108 = scmp.eq.s32.totalorder %s28, 1
      %p109 = por %p107, %p108
      %p110 = scmp.ne.s32.totalorder %s101, %s102
      %p111 = scmp.eq.s32.totalorder %s28, 0
      %p112 = por %p110, %p111
      %p113 = scmp.ne.s32.totalorder %s101, %s102
      %p114 = scmp.eq.s32.totalorder %s29, 1
      %p115 = por %p113, %p114
      %p117 = scmp.ne.s32.totalorder %s102, %s116
      %p118 = scmp.eq.s32.totalorder %s29, 0
      %p119 = por %p117, %p118
      %s121 = sadd.s32 %s120, 1
      %p124 = scmp.eq.s32.totalorder %s23, 1
      %p125 = scmp.ne.s32.totalorder %s120, %s122
      %p126 = scmp.eq.s32.totalorder %s23, 0
      %p127 = por %p125, %p126
      %p128 = scmp.ne.s32.totalorder %s120, %s122
      %p129 = scmp.eq.s32.totalorder %s28, 1
      %p130 = por %p128, %p129
      %p131 = scmp.ne.s32.totalorder %s122, %s123
      %p132 = scmp.eq.s32.totalorder %s28, 0
      %p133 = por %p131, %p132
      %p134 = scmp.ne.s32.totalorder %s122, %s123
      %p135 = scmp.eq.s32.totalorder %s29, 1
      %p136 = por %p134, %p135
      %p138 = scmp.ne.s32.totalorder %s123, %s137
      %p139 = scmp.eq.s32.totalorder %s29, 0
      %p140 = por %p138, %p139
      %s142 = sadd.s32 %s141, 1
      %p145 = scmp.eq.s32.totalorder %s23, 1
      %p146 = scmp.ne.s32.totalorder %s141, %s143
      %p147 = scmp.eq.s32.totalorder %s23, 0
      %p148 = por %p146, %p147
      %p149 = scmp.ne.s32.totalorder %s141, %s143
      %p150 = scmp.eq.s32.totalorder %s28, 1
      %p151 = por %p149, %p150
      %p152 = scmp.ne.s32.totalorder %s143, %s144
      %p153 = scmp.eq.s32.totalorder %s28, 0
      %p154 = por %p152, %p153
      %p155 = scmp.ne.s32.totalorder %s143, %s144
      %p156 = scmp.eq.s32.totalorder %s29, 1
      %p157 = por %p155, %p156
      %p159 = scmp.ne.s32.totalorder %s144, %s158
      %p160 = scmp.eq.s32.totalorder %s29, 0
      %p161 = por %p159, %p160
      %s163 = sadd.s32 %s162, 1
      %p166 = scmp.eq.s32.totalorder %s23, 1
      %p167 = scmp.ne.s32.totalorder %s162, %s164
      %p168 = scmp.eq.s32.totalorder %s23, 0
      %p169 = por %p167, %p168
      %p170 = scmp.ne.s32.totalorder %s162, %s164
      %p171 = scmp.eq.s32.totalorder %s28, 1
      %p172 = por %p170, %p171
      %p173 = scmp.ne.s32.totalorder %s164, %s165
      %p174 = scmp.eq.s32.totalorder %s28, 0
      %p175 = por %p173, %p174
      %p176 = scmp.ne.s32.totalorder %s164, %s165
      %p177 = scmp.eq.s32.totalorder %s29, 1
      %p178 = por %p176, %p177
      %p180 = scmp.ne.s32.totalorder %s165, %s179
      %p181 = scmp.eq.s32.totalorder %s29, 0
      %p182 = por %p180, %p181
      %s184 = sadd.s32 %s183, 1
      %p187 = scmp.eq.s32.totalorder %s23, 1
      %p188 = scmp.ne.s32.totalorder %s183, %s185
      %p189 = scmp.eq.s32.totalorder %s23, 0
      %p190 = por %p188, %p189
      %p191 = scmp.ne.s32.totalorder %s183, %s185
      %p192 = scmp.eq.s32.totalorder %s28, 1
      %p193 = por %p191, %p192
      %p194 = scmp.ne.s32.totalorder %s185, %s186
      %p195 = scmp.eq.s32.totalorder %s28, 0
      %p196 = por %p194, %p195
      %p197 = scmp.ne.s32.totalorder %s185, %s186
      %p198 = scmp.eq.s32.totalorder %s29, 1
      %p199 = por %p197, %p198
      %p201 = scmp.ne.s32.totalorder %s186, %s200
      %p202 = scmp.eq.s32.totalorder %s29, 0
      %p203 = por %p201, %p202
      %s205 = sadd.s32 %s204, 1
      %p208 = scmp.eq.s32.totalorder %s23, 1
      %p209 = scmp.ne.s32.totalorder %s204, %s206
      %p210 = scmp.eq.s32.totalorder %s23, 0
      %p211 = por %p209, %p210
      %p212 = scmp.ne.s32.totalorder %s204, %s206
      %p213 = scmp.eq.s32.totalorder %s28, 1
      %p214 = por %p212, %p213
      %p215 = scmp.ne.s32.totalorder %s206, %s207
      %p216 = scmp.eq.s32.totalorder %s28, 0
      %p217 = por %p215, %p216
      %p218 = scmp.ne.s32.totalorder %s206, %s207
      %p219 = scmp.eq.s32.totalorder %s29, 1
      %p220 = por %p218, %p219
      %p222 = scmp.ne.s32.totalorder %s207, %s221
      %p223 = scmp.eq.s32.totalorder %s29, 0
      %p224 = por %p222, %p223
      %s226 = sadd.s32 %s225, 1
      %p229 = scmp.eq.s32.totalorder %s23, 1
      %p230 = scmp.ne.s32.totalorder %s225, %s227
      %p231 = scmp.eq.s32.totalorder %s23, 0
      %p232 = por %p230, %p231
      %p233 = scmp.ne.s32.totalorder %s225, %s227
      %p234 = scmp.eq.s32.totalorder %s28, 1
      %p235 = por %p233, %p234
      %p236 = scmp.ne.s32.totalorder %s227, %s228
      %p237 = scmp.eq.s32.totalorder %s28, 0
      %p238 = por %p236, %p237
      %p239 = scmp.ne.s32.totalorder %s227, %s228
      %p240 = scmp.eq.s32.totalorder %s29, 1
      %p241 = por %p239, %p240
      %p243 = scmp.ne.s32.totalorder %s228, %s242
      %p244 = scmp.eq.s32.totalorder %s29, 0
      %p245 = por %p243, %p244
      %s247 = sadd.s32 %s246, 1
      %p250 = scmp.eq.s32.totalorder %s23, 1
      %p251 = scmp.ne.s32.totalorder %s246, %s248
      %p252 = scmp.eq.s32.totalorder %s23, 0
      %p253 = por %p251, %p252
      %p254 = scmp.ne.s32.totalorder %s246, %s248
      %p255 = scmp.eq.s32.totalorder %s28, 1
      %p256 = por %p254, %p255
      %p257 = scmp.ne.s32.totalorder %s248, %s249
      %p258 = scmp.eq.s32.totalorder %s28, 0
      %p259 = por %p257, %p258
      %p260 = scmp.ne.s32.totalorder %s248, %s249
      %p261 = scmp.eq.s32.totalorder %s29, 1
      %p262 = por %p260, %p261
      %p264 = scmp.ne.s32.totalorder %s249, %s263
      %p265 = scmp.eq.s32.totalorder %s29, 0
      %p266 = por %p264, %p265
      %s267 = ssub.s32 %s23, %s30
      %p268 = scmp.eq.s32.totalorder %s267, 0
      %s270 = sadd.s32 %s269, 1
      %s271 = scalar_select %p268, %s269, %s270
      %p274 = pneg %p268
      %p275 = scmp.eq.s32.totalorder %s23, 1
      %p276 = por %p274, %p275
      %p277 = scmp.ne.s32.totalorder %s269, %s272
      %p278 = scmp.eq.s32.totalorder %s23, 0
      %p279 = por %p277, %p278
      %p280 = scmp.ne.s32.totalorder %s269, %s272
      %p281 = scmp.eq.s32.totalorder %s28, 1
      %p282 = por %p280, %p281
      %p283 = scmp.ne.s32.totalorder %s272, %s273
      %p284 = scmp.eq.s32.totalorder %s28, 0
      %p285 = por %p283, %p284
      %p286 = scmp.ne.s32.totalorder %s272, %s273
      %p287 = scmp.eq.s32.totalorder %s29, 1
      %p288 = por %p286, %p287
      %p290 = scmp.ne.s32.totalorder %s273, %s289
      %p291 = scmp.eq.s32.totalorder %s29, 0
      %p292 = por %p290, %p291
      %p293 = scmp.le.s32.totalorder 1, %s23
      %p294 = scmp.lt.s32.totalorder %s23, 3
      %p295 = pnand %p293, %p294
      %p296 = pneg %p295
      // Predicated region
      $region9: #{tpu_custom_call.1} parent=5 // pred_check
        _
      $region10: #{tpu_custom_call.1} parent=5 // pred_check_branch
        %298 = sbr.rel (%p295) target = $region12
      $region11: #{tpu_custom_call.1} parent=5 // pred_region
        %s299 = ssub.s32 %s23, 1
        // Predicated region
        $region13: #{tpu_custom_call.1} parent=11 // pred_check
          %p300 = pneg %p70
        $region14: #{tpu_custom_call.1} parent=11 // pred_check_branch
          %302 = sbr.rel (%p300) target = $region16
        $region15: #{tpu_custom_call.1} parent=11 // pred_region
          %304 = vsyncadd [#allocation3], 0
          %s305 = sshll.u32 %s1, 4
          %s306 = int_to_ptr.hbm [resolvable:$true] %s305
          %s307 = sshll.u32 [#allocation2], 4
          %s308 = int_to_ptr.vmem [resolvable:$true] %s307
          %313 = dma.hbm_to_vmem [thread:$0]  %s306, 1024, %s308, [#allocation3], 256, 256, 16
        $region16: #{tpu_custom_call.1} parent=11 // pred_fallthru
          _
        // Predicated region
        $region17: #{tpu_custom_call.1} parent=11 // pred_check
          %p314 = pneg %p91
        $region18: #{tpu_custom_call.1} parent=11 // pred_check_branch
          %316 = sbr.rel (%p314) target = $region20
        $region19: #{tpu_custom_call.1} parent=11 // pred_region
          %318 = vsyncadd [#allocation6], 0
          %s319 = sshll.u32 %s2, 4
          %s320 = int_to_ptr.hbm [resolvable:$true] %s319
          %s321 = sshll.u32 [#allocation5], 4
          %s322 = int_to_ptr.vmem [resolvable:$true] %s321
          %327 = dma.hbm_to_vmem [thread:$0]  %s320, 512, %s322, [#allocation6], 128, 128, 8
        $region20: #{tpu_custom_call.1} parent=11 // pred_fallthru
          _
        // Predicated region
        $region21: #{tpu_custom_call.1} parent=11 // pred_check
          %p328 = pneg %p112
        $region22: #{tpu_custom_call.1} parent=11 // pred_check_branch
          %330 = sbr.rel (%p328) target = $region24
        $region23: #{tpu_custom_call.1} parent=11 // pred_region
          %332 = vsyncadd [#allocation6], 0
          %s334 = sshll.u32 %s3, 4
          %s335 = int_to_ptr.hbm [resolvable:$true] %s334
          %s336 = sshll.u32 [#allocation7], 4
          %s337 = int_to_ptr.vmem [resolvable:$true] %s336
          %339 = dma.hbm_to_vmem [thread:$0]  %s335, 16, %s337, [#allocation6]
        $region24: #{tpu_custom_call.1} parent=11 // pred_fallthru
          _
        // Predicated region
        $region25: #{tpu_custom_call.1} parent=11 // pred_check
          %p340 = pneg %p133
        $region26: #{tpu_custom_call.1} parent=11 // pred_check_branch
          %342 = sbr.rel (%p340) target = $region28
        $region27: #{tpu_custom_call.1} parent=11 // pred_region
          %344 = vsyncadd [#allocation9], 0
          %s346 = sshll.u32 %s4, 4
          %s347 = int_to_ptr.hbm [resolvable:$true] %s346
          %s348 = sshll.u32 [#allocation8], 4
          %s349 = int_to_ptr.vmem [resolvable:$true] %s348
          %351 = dma.hbm_to_vmem [thread:$0]  %s347, 64, %s349, [#allocation9]
        $region28: #{tpu_custom_call.1} parent=11 // pred_fallthru
          _
        // Predicated region
        $region29: #{tpu_custom_call.1} parent=11 // pred_check
          %p352 = pneg %p154
        $region30: #{tpu_custom_call.1} parent=11 // pred_check_branch
          %354 = sbr.rel (%p352) target = $region32
        $region31: #{tpu_custom_call.1} parent=11 // pred_region
          _
        $region32: #{tpu_custom_call.1} parent=11 // pred_fallthru
          _
        // Predicated region
        $region33: #{tpu_custom_call.1} parent=11 // pred_check
          %p355 = pneg %p175
        $region34: #{tpu_custom_call.1} parent=11 // pred_check_branch
          %357 = sbr.rel (%p355) target = $region36
        $region35: #{tpu_custom_call.1} parent=11 // pred_region
          _
        $region36: #{tpu_custom_call.1} parent=11 // pred_fallthru
          _
        // Predicated region
        $region37: #{tpu_custom_call.1} parent=11 // pred_check
          %p358 = pneg %p196
        $region38: #{tpu_custom_call.1} parent=11 // pred_check_branch
          %360 = sbr.rel (%p358) target = $region40
        $region39: #{tpu_custom_call.1} parent=11 // pred_region
          _
        $region40: #{tpu_custom_call.1} parent=11 // pred_fallthru
          _
        // Predicated region
        $region41: #{tpu_custom_call.1} parent=11 // pred_check
          %p361 = pneg %p217
        $region42: #{tpu_custom_call.1} parent=11 // pred_check_branch
          %363 = sbr.rel (%p361) target = $region44
        $region43: #{tpu_custom_call.1} parent=11 // pred_region
          %365 = vsyncadd [#allocation9], 0
          %s367 = sshll.u32 %s8, 4
          %s368 = int_to_ptr.hbm [resolvable:$true] %s367
          %s369 = sshll.u32 [#allocation10], 4
          %s370 = int_to_ptr.vmem [resolvable:$true] %s369
          %372 = dma.hbm_to_vmem [thread:$0]  %s368, 16, %s370, [#allocation9]
        $region44: #{tpu_custom_call.1} parent=11 // pred_fallthru
          _
        // Predicated region
        $region45: #{tpu_custom_call.1} parent=11 // pred_check
          %p373 = pneg %p238
        $region46: #{tpu_custom_call.1} parent=11 // pred_check_branch
          %375 = sbr.rel (%p373) target = $region48
        $region47: #{tpu_custom_call.1} parent=11 // pred_region
          _
        $region48: #{tpu_custom_call.1} parent=11 // pred_fallthru
          _
        // Predicated region
        $region49: #{tpu_custom_call.1} parent=11 // pred_check
          %p376 = pneg %p259
        $region50: #{tpu_custom_call.1} parent=11 // pred_check_branch
          %378 = sbr.rel (%p376) target = $region52
        $region51: #{tpu_custom_call.1} parent=11 // pred_region
          _
        $region52: #{tpu_custom_call.1} parent=11 // pred_fallthru
          _
      $region12: #{tpu_custom_call.1} parent=5 // pred_fallthru
        _
      %p379 = scmp.lt.s32.totalorder %s23, 2
      // Predicated region
      $region53: #{tpu_custom_call.1} parent=5 // pred_check
        %p380 = pneg %p379
      $region54: #{tpu_custom_call.1} parent=5 // pred_check_branch
        %382 = sbr.rel (%p380) target = $region56
      $region55: #{tpu_custom_call.1} parent=5 // pred_region
        // Predicated region
        $region57: #{tpu_custom_call.1} parent=55 // pred_check
          %p383 = pneg %p43
        $region58: #{tpu_custom_call.1} parent=55 // pred_check_branch
          %385 = sbr.rel (%p383) target = $region60
        $region59: #{tpu_custom_call.1} parent=55 // pred_region
          %p386 = scmp.lt.s32.totalorder %s23, 1
          %s387 = scalar_select %p386, %s23, 1
          %s388 = smul.addr %s387, 8
          %s389 = smul.addr %s388, 8
          %s390 = scalar_lea.vmem %s0, %s389
        $region60: #{tpu_custom_call.1} parent=55 // pred_fallthru
          _
      $region56: #{tpu_custom_call.1} parent=5 // pred_fallthru
        _
      %p391 = scmp.le.s32.totalorder 1, %s23
      %p392 = scmp.lt.s32.totalorder %s23, 3
      %p393 = pnand %p391, %p392
      %p394 = pneg %p393
      // Predicated region
      $region61: #{tpu_custom_call.1} parent=5 // pred_check
        _
      $region62: #{tpu_custom_call.1} parent=5 // pred_check_branch
        %396 = sbr.rel (%p393) target = $region64
      $region63: #{tpu_custom_call.1} parent=5 // pred_region
        %s397 = ssub.s32 %s23, 1
        // Predicated region
        $region65: #{tpu_custom_call.1} parent=63 // pred_check
          %p398 = pneg %p70
        $region66: #{tpu_custom_call.1} parent=63 // pred_check_branch
          %400 = sbr.rel (%p398) target = $region68
        $region67: #{tpu_custom_call.1} parent=63 // pred_region
          %402 = dma.done [#allocation3], 1024
        $region68: #{tpu_custom_call.1} parent=63 // pred_fallthru
          _
        // Predicated region
        $region69: #{tpu_custom_call.1} parent=63 // pred_check
          %p403 = pneg %p91
        $region70: #{tpu_custom_call.1} parent=63 // pred_check_branch
          %405 = sbr.rel (%p403) target = $region72
        $region71: #{tpu_custom_call.1} parent=63 // pred_region
          %407 = dma.done [#allocation6], 512
        $region72: #{tpu_custom_call.1} parent=63 // pred_fallthru
          _
        // Predicated region
        $region73: #{tpu_custom_call.1} parent=63 // pred_check
          %p408 = pneg %p112
        $region74: #{tpu_custom_call.1} parent=63 // pred_check_branch
          %410 = sbr.rel (%p408) target = $region76
        $region75: #{tpu_custom_call.1} parent=63 // pred_region
          %412 = dma.done [#allocation6], 16
        $region76: #{tpu_custom_call.1} parent=63 // pred_fallthru
          _
        // Predicated region
        $region77: #{tpu_custom_call.1} parent=63 // pred_check
          %p413 = pneg %p133
        $region78: #{tpu_custom_call.1} parent=63 // pred_check_branch
          %415 = sbr.rel (%p413) target = $region80
        $region79: #{tpu_custom_call.1} parent=63 // pred_region
          %417 = dma.done [#allocation9], 64
        $region80: #{tpu_custom_call.1} parent=63 // pred_fallthru
          _
        // Predicated region
        $region81: #{tpu_custom_call.1} parent=63 // pred_check
          %p418 = pneg %p217
        $region82: #{tpu_custom_call.1} parent=63 // pred_check_branch
          %420 = sbr.rel (%p418) target = $region84
        $region83: #{tpu_custom_call.1} parent=63 // pred_region
          %422 = dma.done [#allocation9], 16
        $region84: #{tpu_custom_call.1} parent=63 // pred_fallthru
          _
        %p423 = scmp.lt.s32.totalorder %s28, 1
        %s424 = scalar_select %p423, %s28, 1
        %s425 = smul.addr %s424, 8
        %s426 = smul.addr %s425, 8
        %s427 = scalar_lea.vmem %s0, %s426
        %p428 = pneg %p49
        %p429 = pneg %p46
        %p430 = pneg %p70
        %p431 = pneg %p67
        %p432 = pneg %p91
        %p433 = pneg %p88
        %p434 = pneg %p112
        %p435 = pneg %p109
        %p436 = pneg %p133
        %p437 = pneg %p130
        %p438 = pneg %p154
        %p439 = pneg %p151
        %p440 = pneg %p175
        %p441 = pneg %p172
        %p442 = pneg %p196
        %p443 = pneg %p193
        %p444 = pneg %p217
        %p445 = pneg %p214
        %p446 = pneg %p238
        %p447 = pneg %p235
        %p448 = pneg %p259
        %p449 = pneg %p256
        %p450 = pneg %p285
        %p451 = pneg %p282
        %s452 = sand.u32 %s272, 1
        %s453 = scalar_lea.sflag [#allocation4], %s452
        %s454 = sand.u32 %s272, 1
        %s455 = smul.addr %s454, 64
        %s456 = scalar_lea.vmem [#allocation11], %s455
        %p457 = scmp.lt.s32.totalorder %s28, 1
        %s458 = scalar_select %p457, %s28, 1
        %s459 = smul.addr %s458, 8
        %s460 = smul.addr %s459, 8
        %s461 = scalar_lea.vmem %s0, %s460
        %v462 = vld [vmem:[%s461] sm:$0xff]
        %v463 = vld [vmem:[%s461 + $0x8] sm:$0xff]
        %v464 = vld [vmem:[%s461 + $0x10] sm:$0xff]
        %v465 = vld [vmem:[%s461 + $0x18] sm:$0xff]
        %v466 = vld [vmem:[%s461 + $0x20] sm:$0xff]
        %v467 = vld [vmem:[%s461 + $0x28] sm:$0xff]
        %v468 = vld [vmem:[%s461 + $0x30] sm:$0xff]
        %v469 = vld [vmem:[%s461 + $0x38] sm:$0xff]
        %v470 = vadd.f32 %v462, %v463
        %471 = vadd.xlane.f32.xlu0 %v470
        %v472 = vpop.xlane.xlu0 %471
        %v473 = vadd.f32 %v464, %v465
        %474 = vadd.xlane.f32.xlu0 %v473
        %v475 = vpop.xlane.xlu0 %474
        %v476 = vadd.f32 %v466, %v467
        %477 = vadd.xlane.f32.xlu0 %v476
        %v478 = vpop.xlane.xlu0 %477
        %v479 = vadd.f32 %v468, %v469
        %480 = vadd.xlane.f32.xlu0 %v479
        %v481 = vpop.xlane.xlu0 %480
        %v482 = vrcp.pop 256.0
        %v483 = vmul.f32 256.0, %v482
        %v484 = vsub.f32 1.0, %v483
        %v485 = vmul.f32 %v482, %v484
        %v486 = vadd.f32 %v482, %v485
        %vm487 = vweird.f32 %v482
        %v488 = vsel %vm487, %v482, %v486
        %v489 = vmul.f32 %v472, %v488
        %v490 = vmul.f32 %v475, %v488
        %v491 = vmul.f32 %v478, %v488
        %v492 = vmul.f32 %v481, %v488
        %v493 = vld [vmem:[#allocation5] sm:$0xff]
        %v494 = vld [vmem:[#allocation5 + $0x8] sm:$0xff]
        %v495 = vld [vmem:[#allocation5 + $0x10] sm:$0xff]
        %v496 = vld [vmem:[#allocation5 + $0x18] sm:$0xff]
        %v497 = vmul.f32 %v493, %v489
        %v498 = vmul.f32 %v494, %v490
        %v499 = vmul.f32 %v495, %v491
        %v500 = vmul.f32 %v496, %v492
        %vm501 = vcmask 261120
        %v502 = vsel %vm501, %v497, 0.0
        %v503 = vsel %vm501, %v498, 0.0
        %v504 = vadd.f32 %v502, %v503
        %v505 = vsel %vm501, %v499, 0.0
        %v506 = vadd.f32 %v504, %v505
        %v507 = vsel %vm501, %v500, 0.0
        %v508 = vadd.f32 %v506, %v507
        %v509 = vrot.slane %v508, 4
        %v510 = vadd.f32 %v508, %v509
        %v511 = vrot.slane %v510, 2
        %v512 = vadd.f32 %v510, %v511
        %v513 = vrot.slane %v512, 1
        %v514 = vadd.f32 %v512, %v513
        %v515 = vld [vmem:[#allocation7] sm:$0x1]
        %v516 = vadd.f32 %v514, %v515
        %v517 = vmax.f32 %v516, 0.0
        %v518 = vld [vmem:[#allocation8] sm:$0xf]
        %v519 = vperm.slane %v517, 0
        %v520 = vmul.f32 %v518, %v519
        %vm521 = vcmask 257024
        %v522 = vsel %vm521, %v520, 0.0
        %523 = vadd.xlane.f32.xlu0 %v522
        %v524 = vpop.xlane.xlu0 %523
        %v525 = vmul.f32 %v524, 0.088388346
        %vm526 = vcmask 1043456
        %v527 = vsel %vm526, %v525, -inf
        %v528 = vrot.slane %v527, 4
        %v529 = vmax.f32 %v527, %v528
        %v530 = vrot.slane %v529, 2
        %v531 = vmax.f32 %v529, %v530
        %v532 = vrot.slane %v531, 1
        %v533 = vmax.f32 %v531, %v532
        %v534 = vsub.f32 %v525, %v533
        %v535 = vmul.f32 %v534, 1.442695
        %v536 = vpow.pop %v535
        %v537 = vsel %vm526, %v536, 0.0
        %v538 = vrot.slane %v537, 4
        %v539 = vadd.f32 %v537, %v538
        %v540 = vrot.slane %v539, 2
        %v541 = vadd.f32 %v539, %v540
        %v542 = vrot.slane %v541, 1
        %v543 = vadd.f32 %v541, %v542
        %v544 = vrcp.pop %v543
        %v545 = vmul.f32 %v536, %v544
        %v546 = vld [vmem:[%s5] sm:$0xff]
        %v547 = vld [vmem:[%s5 + $0x8] sm:$0xff]
        %v548 = vld [vmem:[%s5 + $0x10] sm:$0xff]
        %v549 = vld [vmem:[%s5 + $0x18] sm:$0xff]
        %v550 = vperm.slane %v545, 0
        %v551 = vmul.f32 %v546, %v550
        %v552 = vmul.f32 %v547, %v550
        %v553 = vmul.f32 %v548, %v550
        %v554 = vmul.f32 %v549, %v550
        %v555 = vld [vmem:[%s6] sm:$0xff]
        %v556 = vld [vmem:[%s6 + $0x8] sm:$0xff]
        %v557 = vld [vmem:[%s6 + $0x10] sm:$0xff]
        %v558 = vld [vmem:[%s6 + $0x18] sm:$0xff]
        %v559 = vmul.f32 %v555, %v550
        %v560 = vmul.f32 %v556, %v550
        %v561 = vmul.f32 %v557, %v550
        %v562 = vmul.f32 %v558, %v550
        %s563 = scalar_lea.vmem %s5, 32
        %v564 = vld [vmem:[%s563] sm:$0xff]
        %v565 = vld [vmem:[%s563 + $0x8] sm:$0xff]
        %v566 = vld [vmem:[%s563 + $0x10] sm:$0xff]
        %v567 = vld [vmem:[%s563 + $0x18] sm:$0xff]
        %v568 = vperm.slane %v545, 1
        %v569 = vmul.f32 %v564, %v568
        %v570 = vmul.f32 %v565, %v568
        %v571 = vmul.f32 %v566, %v568
        %v572 = vmul.f32 %v567, %v568
        %v573 = vadd.f32 %v551, %v569
        %v574 = vadd.f32 %v552, %v570
        %v575 = vadd.f32 %v553, %v571
        %v576 = vadd.f32 %v554, %v572
        %s577 = scalar_lea.vmem %s6, 32
        %v578 = vld [vmem:[%s577] sm:$0xff]
        %v579 = vld [vmem:[%s577 + $0x8] sm:$0xff]
        %v580 = vld [vmem:[%s577 + $0x10] sm:$0xff]
        %v581 = vld [vmem:[%s577 + $0x18] sm:$0xff]
        %v582 = vmul.f32 %v578, %v568
        %v583 = vmul.f32 %v579, %v568
        %v584 = vmul.f32 %v580, %v568
        %v585 = vmul.f32 %v581, %v568
        %v586 = vadd.f32 %v559, %v582
        %v587 = vadd.f32 %v560, %v583
        %v588 = vadd.f32 %v561, %v584
        %v589 = vadd.f32 %v562, %v585
        %s590 = scalar_lea.vmem %s5, 64
        %v591 = vld [vmem:[%s590] sm:$0xff]
        %v592 = vld [vmem:[%s590 + $0x8] sm:$0xff]
        %v593 = vld [vmem:[%s590 + $0x10] sm:$0xff]
        %v594 = vld [vmem:[%s590 + $0x18] sm:$0xff]
        %v595 = vperm.slane %v545, 2
        %v596 = vmul.f32 %v591, %v595
        %v597 = vmul.f32 %v592, %v595
        %v598 = vmul.f32 %v593, %v595
        %v599 = vmul.f32 %v594, %v595
        %v600 = vadd.f32 %v573, %v596
        %v601 = vadd.f32 %v574, %v597
        %v602 = vadd.f32 %v575, %v598
        %v603 = vadd.f32 %v576, %v599
        %s604 = scalar_lea.vmem %s6, 64
        %v605 = vld [vmem:[%s604] sm:$0xff]
        %v606 = vld [vmem:[%s604 + $0x8] sm:$0xff]
        %v607 = vld [vmem:[%s604 + $0x10] sm:$0xff]
        %v608 = vld [vmem:[%s604 + $0x18] sm:$0xff]
        %v609 = vmul.f32 %v605, %v595
        %v610 = vmul.f32 %v606, %v595
        %v611 = vmul.f32 %v607, %v595
        %v612 = vmul.f32 %v608, %v595
        %v613 = vadd.f32 %v586, %v609
        %v614 = vadd.f32 %v587, %v610
        %v615 = vadd.f32 %v588, %v611
        %v616 = vadd.f32 %v589, %v612
        %s617 = scalar_lea.vmem %s5, 96
        %v618 = vld [vmem:[%s617] sm:$0xff]
        %v619 = vld [vmem:[%s617 + $0x8] sm:$0xff]
        %v620 = vld [vmem:[%s617 + $0x10] sm:$0xff]
        %v621 = vld [vmem:[%s617 + $0x18] sm:$0xff]
        %v622 = vperm.slane %v545, 3
        %v623 = vmul.f32 %v618, %v622
        %v624 = vmul.f32 %v619, %v622
        %v625 = vmul.f32 %v620, %v622
        %v626 = vmul.f32 %v621, %v622
        %v627 = vadd.f32 %v600, %v623
        %v628 = vadd.f32 %v601, %v624
        %v629 = vadd.f32 %v602, %v625
        %v630 = vadd.f32 %v603, %v626
        %s631 = scalar_lea.vmem %s6, 96
        %v632 = vld [vmem:[%s631] sm:$0xff]
        %v633 = vld [vmem:[%s631 + $0x8] sm:$0xff]
        %v634 = vld [vmem:[%s631 + $0x10] sm:$0xff]
        %v635 = vld [vmem:[%s631 + $0x18] sm:$0xff]
        %v636 = vmul.f32 %v632, %v622
        %v637 = vmul.f32 %v633, %v622
        %v638 = vmul.f32 %v634, %v622
        %v639 = vmul.f32 %v635, %v622
        %v640 = vadd.f32 %v613, %v636
        %v641 = vadd.f32 %v614, %v637
        %v642 = vadd.f32 %v615, %v638
        %v643 = vadd.f32 %v616, %v639
        %644 = vrot.lane.b32.xlu0 %v462, 32
        %v645 = vpop.permute.xlu0 %644
        %646 = vrot.lane.b32.xlu0 %v464, 32
        %v647 = vpop.permute.xlu0 %646
        %648 = vrot.lane.b32.xlu0 %v466, 32
        %v649 = vpop.permute.xlu0 %648
        %650 = vrot.lane.b32.xlu0 %v468, 32
        %v651 = vpop.permute.xlu0 %650
        %652 = vrot.lane.b32.xlu0 %v463, 32
        %v653 = vpop.permute.xlu0 %652
        %654 = vrot.lane.b32.xlu0 %v465, 32
        %v655 = vpop.permute.xlu0 %654
        %656 = vrot.lane.b32.xlu0 %v467, 32
        %v657 = vpop.permute.xlu0 %656
        %658 = vrot.lane.b32.xlu0 %v469, 32
        %v659 = vpop.permute.xlu0 %658
        %v660 = vlaneseq
        %v661 = vand.u32 %v660, 127
        %vm662 = vcmp.lt.s32.totalorder %v661, 32
        %v663 = vsel %vm662, %v645, %v653
        %v664 = vsel %vm662, %v647, %v655
        %v665 = vsel %vm662, %v649, %v657
        %v666 = vsel %vm662, %v651, %v659
        %v667 = vsel %vm662, %v653, %v645
        %v668 = vsel %vm662, %v655, %v647
        %v669 = vsel %vm662, %v657, %v649
        %v670 = vsel %vm662, %v659, %v651
        %671 = vrot.lane.b32.xlu0 %v667, 2
        %v672 = vpop.permute.xlu0 %671
        %673 = vrot.lane.b32.xlu0 %v668, 2
        %v674 = vpop.permute.xlu0 %673
        %675 = vrot.lane.b32.xlu0 %v669, 2
        %v676 = vpop.permute.xlu0 %675
        %677 = vrot.lane.b32.xlu0 %v670, 2
        %v678 = vpop.permute.xlu0 %677
        %679 = vrot.lane.b32.xlu0 %v663, 2
        %v680 = vpop.permute.xlu0 %679
        %681 = vrot.lane.b32.xlu0 %v664, 2
        %v682 = vpop.permute.xlu0 %681
        %683 = vrot.lane.b32.xlu0 %v665, 2
        %v684 = vpop.permute.xlu0 %683
        %685 = vrot.lane.b32.xlu0 %v666, 2
        %v686 = vpop.permute.xlu0 %685
        %vm687 = vcmp.lt.s32.totalorder %v661, 2
        %v688 = vsel %vm687, %v672, %v680
        %v689 = vsel %vm687, %v674, %v682
        %v690 = vsel %vm687, %v676, %v684
        %v691 = vsel %vm687, %v678, %v686
        %v692 = vsel %vm687, %v680, %v672
        %v693 = vsel %vm687, %v682, %v674
        %v694 = vsel %vm687, %v684, %v676
        %v695 = vsel %vm687, %v686, %v678
        %v696 = vld [vmem:[#allocation2] ss:$8 sm:$0x3]
        %v698 = vperm.slane %v696, 0
        %v699 = vperm.slane %v696, 1
        %v702 = vmul.f32 %v692, %v698
        %v703 = vmul.f32 %v688, %v699
        %v704 = vmul.f32 %v693, %v698
        %v705 = vmul.f32 %v689, %v699
        %v706 = vmul.f32 %v694, %v698
        %v707 = vmul.f32 %v690, %v699
        %v708 = vmul.f32 %v695, %v698
        %v709 = vmul.f32 %v691, %v699
        %711 = vset.pattern.permute.xlu0 0
        %712 = vperm.xlu0 %711, %v627
        %v713 = vpop.permute.xlu0 %712
        %716 = vset.pattern.permute.xlu0 0
        %717 = vperm.xlu0 %716, %v628
        %v718 = vpop.permute.xlu0 %717
        %721 = vset.pattern.permute.xlu0 0
        %722 = vperm.xlu0 %721, %v629
        %v723 = vpop.permute.xlu0 %722
        %726 = vset.pattern.permute.xlu0 0
        %727 = vperm.xlu0 %726, %v630
        %v728 = vpop.permute.xlu0 %727
        %v730 = vmul.f32 %v702, %v713
        %v731 = vmul.f32 %v703, %v713
        %v732 = vmul.f32 %v704, %v718
        %v733 = vmul.f32 %v705, %v718
        %v734 = vmul.f32 %v706, %v723
        %v735 = vmul.f32 %v707, %v723
        %v736 = vmul.f32 %v708, %v728
        %v737 = vmul.f32 %v709, %v728
        %738 = vrot.lane.b32.xlu0 %v667, 1
        %v739 = vpop.permute.xlu0 %738
        %740 = vrot.lane.b32.xlu0 %v668, 1
        %v741 = vpop.permute.xlu0 %740
        %742 = vrot.lane.b32.xlu0 %v669, 1
        %v743 = vpop.permute.xlu0 %742
        %744 = vrot.lane.b32.xlu0 %v670, 1
        %v745 = vpop.permute.xlu0 %744
        %746 = vrot.lane.b32.xlu0 %v663, 1
        %v747 = vpop.permute.xlu0 %746
        %748 = vrot.lane.b32.xlu0 %v664, 1
        %v749 = vpop.permute.xlu0 %748
        %750 = vrot.lane.b32.xlu0 %v665, 1
        %v751 = vpop.permute.xlu0 %750
        %752 = vrot.lane.b32.xlu0 %v666, 1
        %v753 = vpop.permute.xlu0 %752
        %vm754 = vcmp.lt.s32.totalorder %v661, 1
        %v755 = vsel %vm754, %v739, %v747
        %v756 = vsel %vm754, %v741, %v749
        %v757 = vsel %vm754, %v743, %v751
        %v758 = vsel %vm754, %v745, %v753
        %v759 = vsel %vm754, %v747, %v739
        %v760 = vsel %vm754, %v749, %v741
        %v761 = vsel %vm754, %v751, %v743
        %v762 = vsel %vm754, %v753, %v745
        %s763 = scalar_lea.vmem [#allocation2], 1
        %v764 = vld [vmem:[%s763] ss:$8 sm:$0x3]
        %v766 = vperm.slane %v764, 0
        %v767 = vperm.slane %v764, 1
        %v770 = vmul.f32 %v759, %v766
        %v771 = vmul.f32 %v755, %v767
        %v772 = vmul.f32 %v760, %v766
        %v773 = vmul.f32 %v756, %v767
        %v774 = vmul.f32 %v761, %v766
        %v775 = vmul.f32 %v757, %v767
        %v776 = vmul.f32 %v762, %v766
        %v777 = vmul.f32 %v758, %v767
        %778 = vset.pattern.permute.xlu0 1
        %779 = vperm.xlu0 %778, %v627
        %v780 = vpop.permute.xlu0 %779
        %782 = vset.pattern.permute.xlu0 1
        %783 = vperm.xlu0 %782, %v628
        %v784 = vpop.permute.xlu0 %783
        %786 = vset.pattern.permute.xlu0 1
        %787 = vperm.xlu0 %786, %v629
        %v788 = vpop.permute.xlu0 %787
        %790 = vset.pattern.permute.xlu0 1
        %791 = vperm.xlu0 %790, %v630
        %v792 = vpop.permute.xlu0 %791
        %v794 = vmul.f32 %v770, %v780
        %v795 = vmul.f32 %v771, %v780
        %v796 = vmul.f32 %v772, %v784
        %v797 = vmul.f32 %v773, %v784
        %v798 = vmul.f32 %v774, %v788
        %v799 = vmul.f32 %v775, %v788
        %v800 = vmul.f32 %v776, %v792
        %v801 = vmul.f32 %v777, %v792
        %v802 = vadd.f32 %v730, %v794
        %v803 = vadd.f32 %v731, %v795
        %v804 = vadd.f32 %v732, %v796
        %v805 = vadd.f32 %v733, %v797
        %v806 = vadd.f32 %v734, %v798
        %v807 = vadd.f32 %v735, %v799
        %v808 = vadd.f32 %v736, %v800
        %v809 = vadd.f32 %v737, %v801
        %s810 = scalar_lea.vmem [#allocation2], 2
        %v811 = vld [vmem:[%s810] ss:$8 sm:$0x3]
        %v813 = vperm.slane %v811, 0
        %v814 = vperm.slane %v811, 1
        %v817 = vmul.f32 %v667, %v813
        %v818 = vmul.f32 %v663, %v814
        %v819 = vmul.f32 %v668, %v813
        %v820 = vmul.f32 %v664, %v814
        %v821 = vmul.f32 %v669, %v813
        %v822 = vmul.f32 %v665, %v814
        %v823 = vmul.f32 %v670, %v813
        %v824 = vmul.f32 %v666, %v814
        %825 = vset.pattern.permute.xlu0 2
        %826 = vperm.xlu0 %825, %v627
        %v827 = vpop.permute.xlu0 %826
        %829 = vset.pattern.permute.xlu0 2
        %830 = vperm.xlu0 %829, %v628
        %v831 = vpop.permute.xlu0 %830
        %833 = vset.pattern.permute.xlu0 2
        %834 = vperm.xlu0 %833, %v629
        %v835 = vpop.permute.xlu0 %834
        %837 = vset.pattern.permute.xlu0 2
        %838 = vperm.xlu0 %837, %v630
        %v839 = vpop.permute.xlu0 %838
        %v841 = vmul.f32 %v817, %v827
        %v842 = vmul.f32 %v818, %v827
        %v843 = vmul.f32 %v819, %v831
        %v844 = vmul.f32 %v820, %v831
        %v845 = vmul.f32 %v821, %v835
        %v846 = vmul.f32 %v822, %v835
        %v847 = vmul.f32 %v823, %v839
        %v848 = vmul.f32 %v824, %v839
        %v849 = vadd.f32 %v802, %v841
        %v850 = vadd.f32 %v803, %v842
        %v851 = vadd.f32 %v804, %v843
        %v852 = vadd.f32 %v805, %v844
        %v853 = vadd.f32 %v806, %v845
        %v854 = vadd.f32 %v807, %v846
        %v855 = vadd.f32 %v808, %v847
        %v856 = vadd.f32 %v809, %v848
        %857 = vrot.lane.b32.xlu0 %v667, 127
        %v858 = vpop.permute.xlu0 %857
        %859 = vrot.lane.b32.xlu0 %v668, 127
        %v860 = vpop.permute.xlu0 %859
        %861 = vrot.lane.b32.xlu0 %v669, 127
        %v862 = vpop.permute.xlu0 %861
        %863 = vrot.lane.b32.xlu0 %v670, 127
        %v864 = vpop.permute.xlu0 %863
        %865 = vrot.lane.b32.xlu0 %v663, 127
        %v866 = vpop.permute.xlu0 %865
        %867 = vrot.lane.b32.xlu0 %v664, 127
        %v868 = vpop.permute.xlu0 %867
        %869 = vrot.lane.b32.xlu0 %v665, 127
        %v870 = vpop.permute.xlu0 %869
        %871 = vrot.lane.b32.xlu0 %v666, 127
        %v872 = vpop.permute.xlu0 %871
        %vm873 = vcmp.lt.s32.totalorder %v661, 127
        %v874 = vsel %vm873, %v858, %v866
        %v875 = vsel %vm873, %v860, %v868
        %v876 = vsel %vm873, %v862, %v870
        %v877 = vsel %vm873, %v864, %v872
        %v878 = vsel %vm873, %v866, %v858
        %v879 = vsel %vm873, %v868, %v860
        %v880 = vsel %vm873, %v870, %v862
        %v881 = vsel %vm873, %v872, %v864
        %s882 = scalar_lea.vmem [#allocation2], 3
        %v883 = vld [vmem:[%s882] ss:$8 sm:$0x3]
        %v885 = vperm.slane %v883, 0
        %v886 = vperm.slane %v883, 1
        %v889 = vmul.f32 %v874, %v885
        %v890 = vmul.f32 %v878, %v886
        %v891 = vmul.f32 %v875, %v885
        %v892 = vmul.f32 %v879, %v886
        %v893 = vmul.f32 %v876, %v885
        %v894 = vmul.f32 %v880, %v886
        %v895 = vmul.f32 %v877, %v885
        %v896 = vmul.f32 %v881, %v886
        %897 = vset.pattern.permute.xlu0 3
        %898 = vperm.xlu0 %897, %v627
        %v899 = vpop.permute.xlu0 %898
        %901 = vset.pattern.permute.xlu0 3
        %902 = vperm.xlu0 %901, %v628
        %v903 = vpop.permute.xlu0 %902
        %905 = vset.pattern.permute.xlu0 3
        %906 = vperm.xlu0 %905, %v629
        %v907 = vpop.permute.xlu0 %906
        %909 = vset.pattern.permute.xlu0 3
        %910 = vperm.xlu0 %909, %v630
        %v911 = vpop.permute.xlu0 %910
        %v913 = vmul.f32 %v889, %v899
        %v914 = vmul.f32 %v890, %v899
        %v915 = vmul.f32 %v891, %v903
        %v916 = vmul.f32 %v892, %v903
        %v917 = vmul.f32 %v893, %v907
        %v918 = vmul.f32 %v894, %v907
        %v919 = vmul.f32 %v895, %v911
        %v920 = vmul.f32 %v896, %v911
        %v921 = vadd.f32 %v849, %v913
        %v922 = vadd.f32 %v850, %v914
        %v923 = vadd.f32 %v851, %v915
        %v924 = vadd.f32 %v852, %v916
        %v925 = vadd.f32 %v853, %v917
        %v926 = vadd.f32 %v854, %v918
        %v927 = vadd.f32 %v855, %v919
        %v928 = vadd.f32 %v856, %v920
        %929 = vrot.lane.b32.xlu0 %v667, 126
        %v930 = vpop.permute.xlu0 %929
        %931 = vrot.lane.b32.xlu0 %v668, 126
        %v932 = vpop.permute.xlu0 %931
        %933 = vrot.lane.b32.xlu0 %v669, 126
        %v934 = vpop.permute.xlu0 %933
        %935 = vrot.lane.b32.xlu0 %v670, 126
        %v936 = vpop.permute.xlu0 %935
        %937 = vrot.lane.b32.xlu0 %v663, 126
        %v938 = vpop.permute.xlu0 %937
        %939 = vrot.lane.b32.xlu0 %v664, 126
        %v940 = vpop.permute.xlu0 %939
        %941 = vrot.lane.b32.xlu0 %v665, 126
        %v942 = vpop.permute.xlu0 %941
        %943 = vrot.lane.b32.xlu0 %v666, 126
        %v944 = vpop.permute.xlu0 %943
        %vm945 = vcmp.lt.s32.totalorder %v661, 126
        %v946 = vsel %vm945, %v930, %v938
        %v947 = vsel %vm945, %v932, %v940
        %v948 = vsel %vm945, %v934, %v942
        %v949 = vsel %vm945, %v936, %v944
        %v950 = vsel %vm945, %v938, %v930
        %v951 = vsel %vm945, %v940, %v932
        %v952 = vsel %vm945, %v942, %v934
        %v953 = vsel %vm945, %v944, %v936
        %s954 = scalar_lea.vmem [#allocation2], 4
        %v955 = vld [vmem:[%s954] ss:$8 sm:$0x3]
        %v957 = vperm.slane %v955, 0
        %v958 = vperm.slane %v955, 1
        %v961 = vmul.f32 %v946, %v957
        %v962 = vmul.f32 %v950, %v958
        %v963 = vmul.f32 %v947, %v957
        %v964 = vmul.f32 %v951, %v958
        %v965 = vmul.f32 %v948, %v957
        %v966 = vmul.f32 %v952, %v958
        %v967 = vmul.f32 %v949, %v957
        %v968 = vmul.f32 %v953, %v958
        %969 = vset.pattern.permute.xlu0 4
        %970 = vperm.xlu0 %969, %v627
        %v971 = vpop.permute.xlu0 %970
        %973 = vset.pattern.permute.xlu0 4
        %974 = vperm.xlu0 %973, %v628
        %v975 = vpop.permute.xlu0 %974
        %977 = vset.pattern.permute.xlu0 4
        %978 = vperm.xlu0 %977, %v629
        %v979 = vpop.permute.xlu0 %978
        %981 = vset.pattern.permute.xlu0 4
        %982 = vperm.xlu0 %981, %v630
        %v983 = vpop.permute.xlu0 %982
        %v985 = vmul.f32 %v961, %v971
        %v986 = vmul.f32 %v962, %v971
        %v987 = vmul.f32 %v963, %v975
        %v988 = vmul.f32 %v964, %v975
        %v989 = vmul.f32 %v965, %v979
        %v990 = vmul.f32 %v966, %v979
        %v991 = vmul.f32 %v967, %v983
        %v992 = vmul.f32 %v968, %v983
        %v993 = vadd.f32 %v921, %v985
        %v994 = vadd.f32 %v922, %v986
        %v995 = vadd.f32 %v923, %v987
        %v996 = vadd.f32 %v924, %v988
        %v997 = vadd.f32 %v925, %v989
        %v998 = vadd.f32 %v926, %v990
        %v999 = vadd.f32 %v927, %v991
        %v1000 = vadd.f32 %v928, %v992
        %1001 = vrot.lane.b32.xlu0 %v462, 16
        %v1002 = vpop.permute.xlu0 %1001
        %1003 = vrot.lane.b32.xlu0 %v464, 16
        %v1004 = vpop.permute.xlu0 %1003
        %1005 = vrot.lane.b32.xlu0 %v466, 16
        %v1006 = vpop.permute.xlu0 %1005
        %1007 = vrot.lane.b32.xlu0 %v468, 16
        %v1008 = vpop.permute.xlu0 %1007
        %1009 = vrot.lane.b32.xlu0 %v463, 16
        %v1010 = vpop.permute.xlu0 %1009
        %1011 = vrot.lane.b32.xlu0 %v465, 16
        %v1012 = vpop.permute.xlu0 %1011
        %1013 = vrot.lane.b32.xlu0 %v467, 16
        %v1014 = vpop.permute.xlu0 %1013
        %1015 = vrot.lane.b32.xlu0 %v469, 16
        %v1016 = vpop.permute.xlu0 %1015
        %vm1017 = vcmp.lt.s32.totalorder %v661, 16
        %v1018 = vsel %vm1017, %v1002, %v1010
        %v1019 = vsel %vm1017, %v1004, %v1012
        %v1020 = vsel %vm1017, %v1006, %v1014
        %v1021 = vsel %vm1017, %v1008, %v1016
        %v1022 = vsel %vm1017, %v1010, %v1002
        %v1023 = vsel %vm1017, %v1012, %v1004
        %v1024 = vsel %vm1017, %v1014, %v1006
        %v1025 = vsel %vm1017, %v1016, %v1008
        %1026 = vrot.lane.b32.xlu0 %v1022, 2
        %v1027 = vpop.permute.xlu0 %1026
        %1028 = vrot.lane.b32.xlu0 %v1023, 2
        %v1029 = vpop.permute.xlu0 %1028
        %1030 = vrot.lane.b32.xlu0 %v1024, 2
        %v1031 = vpop.permute.xlu0 %1030
        %1032 = vrot.lane.b32.xlu0 %v1025, 2
        %v1033 = vpop.permute.xlu0 %1032
        %1034 = vrot.lane.b32.xlu0 %v1018, 2
        %v1035 = vpop.permute.xlu0 %1034
        %1036 = vrot.lane.b32.xlu0 %v1019, 2
        %v1037 = vpop.permute.xlu0 %1036
        %1038 = vrot.lane.b32.xlu0 %v1020, 2
        %v1039 = vpop.permute.xlu0 %1038
        %1040 = vrot.lane.b32.xlu0 %v1021, 2
        %v1041 = vpop.permute.xlu0 %1040
        %v1042 = vsel %vm687, %v1027, %v1035
        %v1043 = vsel %vm687, %v1029, %v1037
        %v1044 = vsel %vm687, %v1031, %v1039
        %v1045 = vsel %vm687, %v1033, %v1041
        %v1046 = vsel %vm687, %v1035, %v1027
        %v1047 = vsel %vm687, %v1037, %v1029
        %v1048 = vsel %vm687, %v1039, %v1031
        %v1049 = vsel %vm687, %v1041, %v1033
        %s1050 = scalar_lea.vmem [#allocation2], 5
        %v1051 = vld [vmem:[%s1050] ss:$8 sm:$0x3]
        %v1053 = vperm.slane %v1051, 0
        %v1054 = vperm.slane %v1051, 1
        %v1057 = vmul.f32 %v1046, %v1053
        %v1058 = vmul.f32 %v1042, %v1054
        %v1059 = vmul.f32 %v1047, %v1053
        %v1060 = vmul.f32 %v1043, %v1054
        %v1061 = vmul.f32 %v1048, %v1053
        %v1062 = vmul.f32 %v1044, %v1054
        %v1063 = vmul.f32 %v1049, %v1053
        %v1064 = vmul.f32 %v1045, %v1054
        %1065 = vset.pattern.permute.xlu0 5
        %1066 = vperm.xlu0 %1065, %v627
        %v1067 = vpop.permute.xlu0 %1066
        %1069 = vset.pattern.permute.xlu0 5
        %1070 = vperm.xlu0 %1069, %v628
        %v1071 = vpop.permute.xlu0 %1070
        %1073 = vset.pattern.permute.xlu0 5
        %1074 = vperm.xlu0 %1073, %v629
        %v1075 = vpop.permute.xlu0 %1074
        %1077 = vset.pattern.permute.xlu0 5
        %1078 = vperm.xlu0 %1077, %v630
        %v1079 = vpop.permute.xlu0 %1078
        %v1081 = vmul.f32 %v1057, %v1067
        %v1082 = vmul.f32 %v1058, %v1067
        %v1083 = vmul.f32 %v1059, %v1071
        %v1084 = vmul.f32 %v1060, %v1071
        %v1085 = vmul.f32 %v1061, %v1075
        %v1086 = vmul.f32 %v1062, %v1075
        %v1087 = vmul.f32 %v1063, %v1079
        %v1088 = vmul.f32 %v1064, %v1079
        %v1089 = vadd.f32 %v993, %v1081
        %v1090 = vadd.f32 %v994, %v1082
        %v1091 = vadd.f32 %v995, %v1083
        %v1092 = vadd.f32 %v996, %v1084
        %v1093 = vadd.f32 %v997, %v1085
        %v1094 = vadd.f32 %v998, %v1086
        %v1095 = vadd.f32 %v999, %v1087
        %v1096 = vadd.f32 %v1000, %v1088
        %1097 = vrot.lane.b32.xlu0 %v1022, 1
        %v1098 = vpop.permute.xlu0 %1097
        %1099 = vrot.lane.b32.xlu0 %v1023, 1
        %v1100 = vpop.permute.xlu0 %1099
        %1101 = vrot.lane.b32.xlu0 %v1024, 1
        %v1102 = vpop.permute.xlu0 %1101
        %1103 = vrot.lane.b32.xlu0 %v1025, 1
        %v1104 = vpop.permute.xlu0 %1103
        %1105 = vrot.lane.b32.xlu0 %v1018, 1
        %v1106 = vpop.permute.xlu0 %1105
        %1107 = vrot.lane.b32.xlu0 %v1019, 1
        %v1108 = vpop.permute.xlu0 %1107
        %1109 = vrot.lane.b32.xlu0 %v1020, 1
        %v1110 = vpop.permute.xlu0 %1109
        %1111 = vrot.lane.b32.xlu0 %v1021, 1
        %v1112 = vpop.permute.xlu0 %1111
        %v1113 = vsel %vm754, %v1098, %v1106
        %v1114 = vsel %vm754, %v1100, %v1108
        %v1115 = vsel %vm754, %v1102, %v1110
        %v1116 = vsel %vm754, %v1104, %v1112
        %v1117 = vsel %vm754, %v1106, %v1098
        %v1118 = vsel %vm754, %v1108, %v1100
        %v1119 = vsel %vm754, %v1110, %v1102
        %v1120 = vsel %vm754, %v1112, %v1104
        %s1121 = scalar_lea.vmem [#allocation2], 6
        %v1122 = vld [vmem:[%s1121] ss:$8 sm:$0x3]
        %v1124 = vperm.slane %v1122, 0
        %v1125 = vperm.slane %v1122, 1
        %v1128 = vmul.f32 %v1117, %v1124
        %v1129 = vmul.f32 %v1113, %v1125
        %v1130 = vmul.f32 %v1118, %v1124
        %v1131 = vmul.f32 %v1114, %v1125
        %v1132 = vmul.f32 %v1119, %v1124
        %v1133 = vmul.f32 %v1115, %v1125
        %v1134 = vmul.f32 %v1120, %v1124
        %v1135 = vmul.f32 %v1116, %v1125
        %1136 = vset.pattern.permute.xlu0 6
        %1137 = vperm.xlu0 %1136, %v627
        %v1138 = vpop.permute.xlu0 %1137
        %1140 = vset.pattern.permute.xlu0 6
        %1141 = vperm.xlu0 %1140, %v628
        %v1142 = vpop.permute.xlu0 %1141
        %1144 = vset.pattern.permute.xlu0 6
        %1145 = vperm.xlu0 %1144, %v629
        %v1146 = vpop.permute.xlu0 %1145
        %1148 = vset.pattern.permute.xlu0 6
        %1149 = vperm.xlu0 %1148, %v630
        %v1150 = vpop.permute.xlu0 %1149
        %v1152 = vmul.f32 %v1128, %v1138
        %v1153 = vmul.f32 %v1129, %v1138
        %v1154 = vmul.f32 %v1130, %v1142
        %v1155 = vmul.f32 %v1131, %v1142
        %v1156 = vmul.f32 %v1132, %v1146
        %v1157 = vmul.f32 %v1133, %v1146
        %v1158 = vmul.f32 %v1134, %v1150
        %v1159 = vmul.f32 %v1135, %v1150
        %v1160 = vadd.f32 %v1089, %v1152
        %v1161 = vadd.f32 %v1090, %v1153
        %v1162 = vadd.f32 %v1091, %v1154
        %v1163 = vadd.f32 %v1092, %v1155
        %v1164 = vadd.f32 %v1093, %v1156
        %v1165 = vadd.f32 %v1094, %v1157
        %v1166 = vadd.f32 %v1095, %v1158
        %v1167 = vadd.f32 %v1096, %v1159
        %s1168 = scalar_lea.vmem [#allocation2], 7
        %v1169 = vld [vmem:[%s1168] ss:$8 sm:$0x3]
        %v1171 = vperm.slane %v1169, 0
        %v1172 = vperm.slane %v1169, 1
        %v1175 = vmul.f32 %v1022, %v1171
        %v1176 = vmul.f32 %v1018, %v1172
        %v1177 = vmul.f32 %v1023, %v1171
        %v1178 = vmul.f32 %v1019, %v1172
        %v1179 = vmul.f32 %v1024, %v1171
        %v1180 = vmul.f32 %v1020, %v1172
        %v1181 = vmul.f32 %v1025, %v1171
        %v1182 = vmul.f32 %v1021, %v1172
        %1183 = vset.pattern.permute.xlu0 7
        %1184 = vperm.xlu0 %1183, %v627
        %v1185 = vpop.permute.xlu0 %1184
        %1187 = vset.pattern.permute.xlu0 7
        %1188 = vperm.xlu0 %1187, %v628
        %v1189 = vpop.permute.xlu0 %1188
        %1191 = vset.pattern.permute.xlu0 7
        %1192 = vperm.xlu0 %1191, %v629
        %v1193 = vpop.permute.xlu0 %1192
        %1195 = vset.pattern.permute.xlu0 7
        %1196 = vperm.xlu0 %1195, %v630
        %v1197 = vpop.permute.xlu0 %1196
        %v1199 = vmul.f32 %v1175, %v1185
        %v1200 = vmul.f32 %v1176, %v1185
        %v1201 = vmul.f32 %v1177, %v1189
        %v1202 = vmul.f32 %v1178, %v1189
        %v1203 = vmul.f32 %v1179, %v1193
        %v1204 = vmul.f32 %v1180, %v1193
        %v1205 = vmul.f32 %v1181, %v1197
        %v1206 = vmul.f32 %v1182, %v1197
        %v1207 = vadd.f32 %v1160, %v1199
        %v1208 = vadd.f32 %v1161, %v1200
        %v1209 = vadd.f32 %v1162, %v1201
        %v1210 = vadd.f32 %v1163, %v1202
        %v1211 = vadd.f32 %v1164, %v1203
        %v1212 = vadd.f32 %v1165, %v1204
        %v1213 = vadd.f32 %v1166, %v1205
        %v1214 = vadd.f32 %v1167, %v1206
        %1215 = vrot.lane.b32.xlu0 %v1022, 127
        %v1216 = vpop.permute.xlu0 %1215
        %1217 = vrot.lane.b32.xlu0 %v1023, 127
        %v1218 = vpop.permute.xlu0 %1217
        %1219 = vrot.lane.b32.xlu0 %v1024, 127
        %v1220 = vpop.permute.xlu0 %1219
        %1221 = vrot.lane.b32.xlu0 %v1025, 127
        %v1222 = vpop.permute.xlu0 %1221
        %1223 = vrot.lane.b32.xlu0 %v1018, 127
        %v1224 = vpop.permute.xlu0 %1223
        %1225 = vrot.lane.b32.xlu0 %v1019, 127
        %v1226 = vpop.permute.xlu0 %1225
        %1227 = vrot.lane.b32.xlu0 %v1020, 127
        %v1228 = vpop.permute.xlu0 %1227
        %1229 = vrot.lane.b32.xlu0 %v1021, 127
        %v1230 = vpop.permute.xlu0 %1229
        %v1231 = vsel %vm873, %v1216, %v1224
        %v1232 = vsel %vm873, %v1218, %v1226
        %v1233 = vsel %vm873, %v1220, %v1228
        %v1234 = vsel %vm873, %v1222, %v1230
        %v1235 = vsel %vm873, %v1224, %v1216
        %v1236 = vsel %vm873, %v1226, %v1218
        %v1237 = vsel %vm873, %v1228, %v1220
        %v1238 = vsel %vm873, %v1230, %v1222
        %s1239 = scalar_lea.vmem [#allocation2], 16
        %v1240 = vld [vmem:[%s1239] ss:$8 sm:$0x3]
        %v1242 = vperm.slane %v1240, 0
        %v1243 = vperm.slane %v1240, 1
        %v1246 = vmul.f32 %v1231, %v1242
        %v1247 = vmul.f32 %v1235, %v1243
        %v1248 = vmul.f32 %v1232, %v1242
        %v1249 = vmul.f32 %v1236, %v1243
        %v1250 = vmul.f32 %v1233, %v1242
        %v1251 = vmul.f32 %v1237, %v1243
        %v1252 = vmul.f32 %v1234, %v1242
        %v1253 = vmul.f32 %v1238, %v1243
        %1254 = vset.pattern.permute.xlu0 8
        %1255 = vperm.xlu0 %1254, %v627
        %v1256 = vpop.permute.xlu0 %1255
        %1258 = vset.pattern.permute.xlu0 8
        %1259 = vperm.xlu0 %1258, %v628
        %v1260 = vpop.permute.xlu0 %1259
        %1262 = vset.pattern.permute.xlu0 8
        %1263 = vperm.xlu0 %1262, %v629
        %v1264 = vpop.permute.xlu0 %1263
        %1266 = vset.pattern.permute.xlu0 8
        %1267 = vperm.xlu0 %1266, %v630
        %v1268 = vpop.permute.xlu0 %1267
        %v1270 = vmul.f32 %v1246, %v1256
        %v1271 = vmul.f32 %v1247, %v1256
        %v1272 = vmul.f32 %v1248, %v1260
        %v1273 = vmul.f32 %v1249, %v1260
        %v1274 = vmul.f32 %v1250, %v1264
        %v1275 = vmul.f32 %v1251, %v1264
        %v1276 = vmul.f32 %v1252, %v1268
        %v1277 = vmul.f32 %v1253, %v1268
        %v1278 = vadd.f32 %v1207, %v1270
        %v1279 = vadd.f32 %v1208, %v1271
        %v1280 = vadd.f32 %v1209, %v1272
        %v1281 = vadd.f32 %v1210, %v1273
        %v1282 = vadd.f32 %v1211, %v1274
        %v1283 = vadd.f32 %v1212, %v1275
        %v1284 = vadd.f32 %v1213, %v1276
        %v1285 = vadd.f32 %v1214, %v1277
        %1286 = vrot.lane.b32.xlu0 %v1022, 126
        %v1287 = vpop.permute.xlu0 %1286
        %1288 = vrot.lane.b32.xlu0 %v1023, 126
        %v1289 = vpop.permute.xlu0 %1288
        %1290 = vrot.lane.b32.xlu0 %v1024, 126
        %v1291 = vpop.permute.xlu0 %1290
        %1292 = vrot.lane.b32.xlu0 %v1025, 126
        %v1293 = vpop.permute.xlu0 %1292
        %1294 = vrot.lane.b32.xlu0 %v1018, 126
        %v1295 = vpop.permute.xlu0 %1294
        %1296 = vrot.lane.b32.xlu0 %v1019, 126
        %v1297 = vpop.permute.xlu0 %1296
        %1298 = vrot.lane.b32.xlu0 %v1020, 126
        %v1299 = vpop.permute.xlu0 %1298
        %1300 = vrot.lane.b32.xlu0 %v1021, 126
        %v1301 = vpop.permute.xlu0 %1300
        %v1302 = vsel %vm945, %v1287, %v1295
        %v1303 = vsel %vm945, %v1289, %v1297
        %v1304 = vsel %vm945, %v1291, %v1299
        %v1305 = vsel %vm945, %v1293, %v1301
        %v1306 = vsel %vm945, %v1295, %v1287
        %v1307 = vsel %vm945, %v1297, %v1289
        %v1308 = vsel %vm945, %v1299, %v1291
        %v1309 = vsel %vm945, %v1301, %v1293
        %s1310 = scalar_lea.vmem [#allocation2], 17
        %v1311 = vld [vmem:[%s1310] ss:$8 sm:$0x3]
        %v1313 = vperm.slane %v1311, 0
        %v1314 = vperm.slane %v1311, 1
        %v1317 = vmul.f32 %v1302, %v1313
        %v1318 = vmul.f32 %v1306, %v1314
        %v1319 = vmul.f32 %v1303, %v1313
        %v1320 = vmul.f32 %v1307, %v1314
        %v1321 = vmul.f32 %v1304, %v1313
        %v1322 = vmul.f32 %v1308, %v1314
        %v1323 = vmul.f32 %v1305, %v1313
        %v1324 = vmul.f32 %v1309, %v1314
        %1325 = vset.pattern.permute.xlu0 9
        %1326 = vperm.xlu0 %1325, %v627
        %v1327 = vpop.permute.xlu0 %1326
        %1329 = vset.pattern.permute.xlu0 9
        %1330 = vperm.xlu0 %1329, %v628
        %v1331 = vpop.permute.xlu0 %1330
        %1333 = vset.pattern.permute.xlu0 9
        %1334 = vperm.xlu0 %1333, %v629
        %v1335 = vpop.permute.xlu0 %1334
        %1337 = vset.pattern.permute.xlu0 9
        %1338 = vperm.xlu0 %1337, %v630
        %v1339 = vpop.permute.xlu0 %1338
        %v1341 = vmul.f32 %v1317, %v1327
        %v1342 = vmul.f32 %v1318, %v1327
        %v1343 = vmul.f32 %v1319, %v1331
        %v1344 = vmul.f32 %v1320, %v1331
        %v1345 = vmul.f32 %v1321, %v1335
        %v1346 = vmul.f32 %v1322, %v1335
        %v1347 = vmul.f32 %v1323, %v1339
        %v1348 = vmul.f32 %v1324, %v1339
        %v1349 = vadd.f32 %v1278, %v1341
        %v1350 = vadd.f32 %v1279, %v1342
        %v1351 = vadd.f32 %v1280, %v1343
        %v1352 = vadd.f32 %v1281, %v1344
        %v1353 = vadd.f32 %v1282, %v1345
        %v1354 = vadd.f32 %v1283, %v1346
        %v1355 = vadd.f32 %v1284, %v1347
        %v1356 = vadd.f32 %v1285, %v1348
        %1357 = vrot.lane.b32.xlu0 %v462, 2
        %v1358 = vpop.permute.xlu0 %1357
        %1359 = vrot.lane.b32.xlu0 %v464, 2
        %v1360 = vpop.permute.xlu0 %1359
        %1361 = vrot.lane.b32.xlu0 %v466, 2
        %v1362 = vpop.permute.xlu0 %1361
        %1363 = vrot.lane.b32.xlu0 %v468, 2
        %v1364 = vpop.permute.xlu0 %1363
        %1365 = vrot.lane.b32.xlu0 %v463, 2
        %v1366 = vpop.permute.xlu0 %1365
        %1367 = vrot.lane.b32.xlu0 %v465, 2
        %v1368 = vpop.permute.xlu0 %1367
        %1369 = vrot.lane.b32.xlu0 %v467, 2
        %v1370 = vpop.permute.xlu0 %1369
        %1371 = vrot.lane.b32.xlu0 %v469, 2
        %v1372 = vpop.permute.xlu0 %1371
        %v1373 = vsel %vm687, %v1358, %v1366
        %v1374 = vsel %vm687, %v1360, %v1368
        %v1375 = vsel %vm687, %v1362, %v1370
        %v1376 = vsel %vm687, %v1364, %v1372
        %v1377 = vsel %vm687, %v1366, %v1358
        %v1378 = vsel %vm687, %v1368, %v1360
        %v1379 = vsel %vm687, %v1370, %v1362
        %v1380 = vsel %vm687, %v1372, %v1364
        %s1381 = scalar_lea.vmem [#allocation2], 18
        %v1382 = vld [vmem:[%s1381] ss:$8 sm:$0x3]
        %v1384 = vperm.slane %v1382, 0
        %v1385 = vperm.slane %v1382, 1
        %v1388 = vmul.f32 %v1377, %v1384
        %v1389 = vmul.f32 %v1373, %v1385
        %v1390 = vmul.f32 %v1378, %v1384
        %v1391 = vmul.f32 %v1374, %v1385
        %v1392 = vmul.f32 %v1379, %v1384
        %v1393 = vmul.f32 %v1375, %v1385
        %v1394 = vmul.f32 %v1380, %v1384
        %v1395 = vmul.f32 %v1376, %v1385
        %1396 = vset.pattern.permute.xlu0 10
        %1397 = vperm.xlu0 %1396, %v627
        %v1398 = vpop.permute.xlu0 %1397
        %1400 = vset.pattern.permute.xlu0 10
        %1401 = vperm.xlu0 %1400, %v628
        %v1402 = vpop.permute.xlu0 %1401
        %1404 = vset.pattern.permute.xlu0 10
        %1405 = vperm.xlu0 %1404, %v629
        %v1406 = vpop.permute.xlu0 %1405
        %1408 = vset.pattern.permute.xlu0 10
        %1409 = vperm.xlu0 %1408, %v630
        %v1410 = vpop.permute.xlu0 %1409
        %v1412 = vmul.f32 %v1388, %v1398
        %v1413 = vmul.f32 %v1389, %v1398
        %v1414 = vmul.f32 %v1390, %v1402
        %v1415 = vmul.f32 %v1391, %v1402
        %v1416 = vmul.f32 %v1392, %v1406
        %v1417 = vmul.f32 %v1393, %v1406
        %v1418 = vmul.f32 %v1394, %v1410
        %v1419 = vmul.f32 %v1395, %v1410
        %v1420 = vadd.f32 %v1349, %v1412
        %v1421 = vadd.f32 %v1350, %v1413
        %v1422 = vadd.f32 %v1351, %v1414
        %v1423 = vadd.f32 %v1352, %v1415
        %v1424 = vadd.f32 %v1353, %v1416
        %v1425 = vadd.f32 %v1354, %v1417
        %v1426 = vadd.f32 %v1355, %v1418
        %v1427 = vadd.f32 %v1356, %v1419
        %1428 = vrot.lane.b32.xlu0 %v462, 1
        %v1429 = vpop.permute.xlu0 %1428
        %1430 = vrot.lane.b32.xlu0 %v464, 1
        %v1431 = vpop.permute.xlu0 %1430
        %1432 = vrot.lane.b32.xlu0 %v466, 1
        %v1433 = vpop.permute.xlu0 %1432
        %1434 = vrot.lane.b32.xlu0 %v468, 1
        %v1435 = vpop.permute.xlu0 %1434
        %1436 = vrot.lane.b32.xlu0 %v463, 1
        %v1437 = vpop.permute.xlu0 %1436
        %1438 = vrot.lane.b32.xlu0 %v465, 1
        %v1439 = vpop.permute.xlu0 %1438
        %1440 = vrot.lane.b32.xlu0 %v467, 1
        %v1441 = vpop.permute.xlu0 %1440
        %1442 = vrot.lane.b32.xlu0 %v469, 1
        %v1443 = vpop.permute.xlu0 %1442
        %v1444 = vsel %vm754, %v1429, %v1437
        %v1445 = vsel %vm754, %v1431, %v1439
        %v1446 = vsel %vm754, %v1433, %v1441
        %v1447 = vsel %vm754, %v1435, %v1443
        %v1448 = vsel %vm754, %v1437, %v1429
        %v1449 = vsel %vm754, %v1439, %v1431
        %v1450 = vsel %vm754, %v1441, %v1433
        %v1451 = vsel %vm754, %v1443, %v1435
        %s1452 = scalar_lea.vmem [#allocation2], 19
        %v1453 = vld [vmem:[%s1452] ss:$8 sm:$0x3]
        %v1455 = vperm.slane %v1453, 0
        %v1456 = vperm.slane %v1453, 1
        %v1459 = vmul.f32 %v1448, %v1455
        %v1460 = vmul.f32 %v1444, %v1456
        %v1461 = vmul.f32 %v1449, %v1455
        %v1462 = vmul.f32 %v1445, %v1456
        %v1463 = vmul.f32 %v1450, %v1455
        %v1464 = vmul.f32 %v1446, %v1456
        %v1465 = vmul.f32 %v1451, %v1455
        %v1466 = vmul.f32 %v1447, %v1456
        %1467 = vset.pattern.permute.xlu0 11
        %1468 = vperm.xlu0 %1467, %v627
        %v1469 = vpop.permute.xlu0 %1468
        %1471 = vset.pattern.permute.xlu0 11
        %1472 = vperm.xlu0 %1471, %v628
        %v1473 = vpop.permute.xlu0 %1472
        %1475 = vset.pattern.permute.xlu0 11
        %1476 = vperm.xlu0 %1475, %v629
        %v1477 = vpop.permute.xlu0 %1476
        %1479 = vset.pattern.permute.xlu0 11
        %1480 = vperm.xlu0 %1479, %v630
        %v1481 = vpop.permute.xlu0 %1480
        %v1483 = vmul.f32 %v1459, %v1469
        %v1484 = vmul.f32 %v1460, %v1469
        %v1485 = vmul.f32 %v1461, %v1473
        %v1486 = vmul.f32 %v1462, %v1473
        %v1487 = vmul.f32 %v1463, %v1477
        %v1488 = vmul.f32 %v1464, %v1477
        %v1489 = vmul.f32 %v1465, %v1481
        %v1490 = vmul.f32 %v1466, %v1481
        %v1491 = vadd.f32 %v1420, %v1483
        %v1492 = vadd.f32 %v1421, %v1484
        %v1493 = vadd.f32 %v1422, %v1485
        %v1494 = vadd.f32 %v1423, %v1486
        %v1495 = vadd.f32 %v1424, %v1487
        %v1496 = vadd.f32 %v1425, %v1488
        %v1497 = vadd.f32 %v1426, %v1489
        %v1498 = vadd.f32 %v1427, %v1490
        %1499 = vset.pattern.permute.xlu0 12
        %1500 = vperm.xlu0 %1499, %v627
        %v1501 = vpop.permute.xlu0 %1500
        %1503 = vset.pattern.permute.xlu0 12
        %1504 = vperm.xlu0 %1503, %v628
        %v1505 = vpop.permute.xlu0 %1504
        %1507 = vset.pattern.permute.xlu0 12
        %1508 = vperm.xlu0 %1507, %v629
        %v1509 = vpop.permute.xlu0 %1508
        %1511 = vset.pattern.permute.xlu0 12
        %1512 = vperm.xlu0 %1511, %v630
        %v1513 = vpop.permute.xlu0 %1512
        %v1515 = vmul.f32 %v462, %v1501
        %v1516 = vmul.f32 %v463, %v1501
        %v1517 = vmul.f32 %v464, %v1505
        %v1518 = vmul.f32 %v465, %v1505
        %v1519 = vmul.f32 %v466, %v1509
        %v1520 = vmul.f32 %v467, %v1509
        %v1521 = vmul.f32 %v468, %v1513
        %v1522 = vmul.f32 %v469, %v1513
        %v1523 = vadd.f32 %v1491, %v1515
        %v1524 = vadd.f32 %v1492, %v1516
        %v1525 = vadd.f32 %v1493, %v1517
        %v1526 = vadd.f32 %v1494, %v1518
        %v1527 = vadd.f32 %v1495, %v1519
        %v1528 = vadd.f32 %v1496, %v1520
        %v1529 = vadd.f32 %v1497, %v1521
        %v1530 = vadd.f32 %v1498, %v1522
        %1531 = vrot.lane.b32.xlu0 %v462, 127
        %v1532 = vpop.permute.xlu0 %1531
        %1533 = vrot.lane.b32.xlu0 %v464, 127
        %v1534 = vpop.permute.xlu0 %1533
        %1535 = vrot.lane.b32.xlu0 %v466, 127
        %v1536 = vpop.permute.xlu0 %1535
        %1537 = vrot.lane.b32.xlu0 %v468, 127
        %v1538 = vpop.permute.xlu0 %1537
        %1539 = vrot.lane.b32.xlu0 %v463, 127
        %v1540 = vpop.permute.xlu0 %1539
        %1541 = vrot.lane.b32.xlu0 %v465, 127
        %v1542 = vpop.permute.xlu0 %1541
        %1543 = vrot.lane.b32.xlu0 %v467, 127
        %v1544 = vpop.permute.xlu0 %1543
        %1545 = vrot.lane.b32.xlu0 %v469, 127
        %v1546 = vpop.permute.xlu0 %1545
        %v1547 = vsel %vm873, %v1532, %v1540
        %v1548 = vsel %vm873, %v1534, %v1542
        %v1549 = vsel %vm873, %v1536, %v1544
        %v1550 = vsel %vm873, %v1538, %v1546
        %v1551 = vsel %vm873, %v1540, %v1532
        %v1552 = vsel %vm873, %v1542, %v1534
        %v1553 = vsel %vm873, %v1544, %v1536
        %v1554 = vsel %vm873, %v1546, %v1538
        %s1555 = scalar_lea.vmem [#allocation2], 21
        %v1556 = vld [vmem:[%s1555] ss:$8 sm:$0x3]
        %v1558 = vperm.slane %v1556, 0
        %v1559 = vperm.slane %v1556, 1
        %v1562 = vmul.f32 %v1547, %v1558
        %v1563 = vmul.f32 %v1551, %v1559
        %v1564 = vmul.f32 %v1548, %v1558
        %v1565 = vmul.f32 %v1552, %v1559
        %v1566 = vmul.f32 %v1549, %v1558
        %v1567 = vmul.f32 %v1553, %v1559
        %v1568 = vmul.f32 %v1550, %v1558
        %v1569 = vmul.f32 %v1554, %v1559
        %1570 = vset.pattern.permute.xlu0 13
        %1571 = vperm.xlu0 %1570, %v627
        %v1572 = vpop.permute.xlu0 %1571
        %1574 = vset.pattern.permute.xlu0 13
        %1575 = vperm.xlu0 %1574, %v628
        %v1576 = vpop.permute.xlu0 %1575
        %1578 = vset.pattern.permute.xlu0 13
        %1579 = vperm.xlu0 %1578, %v629
        %v1580 = vpop.permute.xlu0 %1579
        %1582 = vset.pattern.permute.xlu0 13
        %1583 = vperm.xlu0 %1582, %v630
        %v1584 = vpop.permute.xlu0 %1583
        %v1586 = vmul.f32 %v1562, %v1572
        %v1587 = vmul.f32 %v1563, %v1572
        %v1588 = vmul.f32 %v1564, %v1576
        %v1589 = vmul.f32 %v1565, %v1576
        %v1590 = vmul.f32 %v1566, %v1580
        %v1591 = vmul.f32 %v1567, %v1580
        %v1592 = vmul.f32 %v1568, %v1584
        %v1593 = vmul.f32 %v1569, %v1584
        %v1594 = vadd.f32 %v1523, %v1586
        %v1595 = vadd.f32 %v1524, %v1587
        %v1596 = vadd.f32 %v1525, %v1588
        %v1597 = vadd.f32 %v1526, %v1589
        %v1598 = vadd.f32 %v1527, %v1590
        %v1599 = vadd.f32 %v1528, %v1591
        %v1600 = vadd.f32 %v1529, %v1592
        %v1601 = vadd.f32 %v1530, %v1593
        %1602 = vrot.lane.b32.xlu0 %v462, 126
        %v1603 = vpop.permute.xlu0 %1602
        %1604 = vrot.lane.b32.xlu0 %v464, 126
        %v1605 = vpop.permute.xlu0 %1604
        %1606 = vrot.lane.b32.xlu0 %v466, 126
        %v1607 = vpop.permute.xlu0 %1606
        %1608 = vrot.lane.b32.xlu0 %v468, 126
        %v1609 = vpop.permute.xlu0 %1608
        %1610 = vrot.lane.b32.xlu0 %v463, 126
        %v1611 = vpop.permute.xlu0 %1610
        %1612 = vrot.lane.b32.xlu0 %v465, 126
        %v1613 = vpop.permute.xlu0 %1612
        %1614 = vrot.lane.b32.xlu0 %v467, 126
        %v1615 = vpop.permute.xlu0 %1614
        %1616 = vrot.lane.b32.xlu0 %v469, 126
        %v1617 = vpop.permute.xlu0 %1616
        %v1618 = vsel %vm945, %v1603, %v1611
        %v1619 = vsel %vm945, %v1605, %v1613
        %v1620 = vsel %vm945, %v1607, %v1615
        %v1621 = vsel %vm945, %v1609, %v1617
        %v1622 = vsel %vm945, %v1611, %v1603
        %v1623 = vsel %vm945, %v1613, %v1605
        %v1624 = vsel %vm945, %v1615, %v1607
        %v1625 = vsel %vm945, %v1617, %v1609
        %s1626 = scalar_lea.vmem [#allocation2], 22
        %v1627 = vld [vmem:[%s1626] ss:$8 sm:$0x3]
        %v1629 = vperm.slane %v1627, 0
        %v1630 = vperm.slane %v1627, 1
        %v1633 = vmul.f32 %v1618, %v1629
        %v1634 = vmul.f32 %v1622, %v1630
        %v1635 = vmul.f32 %v1619, %v1629
        %v1636 = vmul.f32 %v1623, %v1630
        %v1637 = vmul.f32 %v1620, %v1629
        %v1638 = vmul.f32 %v1624, %v1630
        %v1639 = vmul.f32 %v1621, %v1629
        %v1640 = vmul.f32 %v1625, %v1630
        %1641 = vset.pattern.permute.xlu0 14
        %1642 = vperm.xlu0 %1641, %v627
        %v1643 = vpop.permute.xlu0 %1642
        %1645 = vset.pattern.permute.xlu0 14
        %1646 = vperm.xlu0 %1645, %v628
        %v1647 = vpop.permute.xlu0 %1646
        %1649 = vset.pattern.permute.xlu0 14
        %1650 = vperm.xlu0 %1649, %v629
        %v1651 = vpop.permute.xlu0 %1650
        %1653 = vset.pattern.permute.xlu0 14
        %1654 = vperm.xlu0 %1653, %v630
        %v1655 = vpop.permute.xlu0 %1654
        %v1657 = vmul.f32 %v1633, %v1643
        %v1658 = vmul.f32 %v1634, %v1643
        %v1659 = vmul.f32 %v1635, %v1647
        %v1660 = vmul.f32 %v1636, %v1647
        %v1661 = vmul.f32 %v1637, %v1651
        %v1662 = vmul.f32 %v1638, %v1651
        %v1663 = vmul.f32 %v1639, %v1655
        %v1664 = vmul.f32 %v1640, %v1655
        %v1665 = vadd.f32 %v1594, %v1657
        %v1666 = vadd.f32 %v1595, %v1658
        %v1667 = vadd.f32 %v1596, %v1659
        %v1668 = vadd.f32 %v1597, %v1660
        %v1669 = vadd.f32 %v1598, %v1661
        %v1670 = vadd.f32 %v1599, %v1662
        %v1671 = vadd.f32 %v1600, %v1663
        %v1672 = vadd.f32 %v1601, %v1664
        %1673 = vrot.lane.b32.xlu0 %v462, 112
        %v1674 = vpop.permute.xlu0 %1673
        %1675 = vrot.lane.b32.xlu0 %v464, 112
        %v1676 = vpop.permute.xlu0 %1675
        %1677 = vrot.lane.b32.xlu0 %v466, 112
        %v1678 = vpop.permute.xlu0 %1677
        %1679 = vrot.lane.b32.xlu0 %v468, 112
        %v1680 = vpop.permute.xlu0 %1679
        %1681 = vrot.lane.b32.xlu0 %v463, 112
        %v1682 = vpop.permute.xlu0 %1681
        %1683 = vrot.lane.b32.xlu0 %v465, 112
        %v1684 = vpop.permute.xlu0 %1683
        %1685 = vrot.lane.b32.xlu0 %v467, 112
        %v1686 = vpop.permute.xlu0 %1685
        %1687 = vrot.lane.b32.xlu0 %v469, 112
        %v1688 = vpop.permute.xlu0 %1687
        %vm1689 = vcmp.lt.s32.totalorder %v661, 112
        %v1690 = vsel %vm1689, %v1674, %v1682
        %v1691 = vsel %vm1689, %v1676, %v1684
        %v1692 = vsel %vm1689, %v1678, %v1686
        %v1693 = vsel %vm1689, %v1680, %v1688
        %v1694 = vsel %vm1689, %v1682, %v1674
        %v1695 = vsel %vm1689, %v1684, %v1676
        %v1696 = vsel %vm1689, %v1686, %v1678
        %v1697 = vsel %vm1689, %v1688, %v1680
        %1698 = vrot.lane.b32.xlu0 %v1690, 2
        %v1699 = vpop.permute.xlu0 %1698
        %1700 = vrot.lane.b32.xlu0 %v1691, 2
        %v1701 = vpop.permute.xlu0 %1700
        %1702 = vrot.lane.b32.xlu0 %v1692, 2
        %v1703 = vpop.permute.xlu0 %1702
        %1704 = vrot.lane.b32.xlu0 %v1693, 2
        %v1705 = vpop.permute.xlu0 %1704
        %1706 = vrot.lane.b32.xlu0 %v1694, 2
        %v1707 = vpop.permute.xlu0 %1706
        %1708 = vrot.lane.b32.xlu0 %v1695, 2
        %v1709 = vpop.permute.xlu0 %1708
        %1710 = vrot.lane.b32.xlu0 %v1696, 2
        %v1711 = vpop.permute.xlu0 %1710
        %1712 = vrot.lane.b32.xlu0 %v1697, 2
        %v1713 = vpop.permute.xlu0 %1712
        %v1714 = vsel %vm687, %v1699, %v1707
        %v1715 = vsel %vm687, %v1701, %v1709
        %v1716 = vsel %vm687, %v1703, %v1711
        %v1717 = vsel %vm687, %v1705, %v1713
        %v1718 = vsel %vm687, %v1707, %v1699
        %v1719 = vsel %vm687, %v1709, %v1701
        %v1720 = vsel %vm687, %v1711, %v1703
        %v1721 = vsel %vm687, %v1713, %v1705
        %s1722 = scalar_lea.vmem [#allocation2], 23
        %v1723 = vld [vmem:[%s1722] ss:$8 sm:$0x3]
        %v1725 = vperm.slane %v1723, 0
        %v1726 = vperm.slane %v1723, 1
        %v1729 = vmul.f32 %v1718, %v1725
        %v1730 = vmul.f32 %v1714, %v1726
        %v1731 = vmul.f32 %v1719, %v1725
        %v1732 = vmul.f32 %v1715, %v1726
        %v1733 = vmul.f32 %v1720, %v1725
        %v1734 = vmul.f32 %v1716, %v1726
        %v1735 = vmul.f32 %v1721, %v1725
        %v1736 = vmul.f32 %v1717, %v1726
        %1737 = vset.pattern.permute.xlu0 15
        %1738 = vperm.xlu0 %1737, %v627
        %v1739 = vpop.permute.xlu0 %1738
        %1741 = vset.pattern.permute.xlu0 15
        %1742 = vperm.xlu0 %1741, %v628
        %v1743 = vpop.permute.xlu0 %1742
        %1745 = vset.pattern.permute.xlu0 15
        %1746 = vperm.xlu0 %1745, %v629
        %v1747 = vpop.permute.xlu0 %1746
        %1749 = vset.pattern.permute.xlu0 15
        %1750 = vperm.xlu0 %1749, %v630
        %v1751 = vpop.permute.xlu0 %1750
        %v1753 = vmul.f32 %v1729, %v1739
        %v1754 = vmul.f32 %v1730, %v1739
        %v1755 = vmul.f32 %v1731, %v1743
        %v1756 = vmul.f32 %v1732, %v1743
        %v1757 = vmul.f32 %v1733, %v1747
        %v1758 = vmul.f32 %v1734, %v1747
        %v1759 = vmul.f32 %v1735, %v1751
        %v1760 = vmul.f32 %v1736, %v1751
        %v1761 = vadd.f32 %v1665, %v1753
        %v1762 = vadd.f32 %v1666, %v1754
        %v1763 = vadd.f32 %v1667, %v1755
        %v1764 = vadd.f32 %v1668, %v1756
        %v1765 = vadd.f32 %v1669, %v1757
        %v1766 = vadd.f32 %v1670, %v1758
        %v1767 = vadd.f32 %v1671, %v1759
        %v1768 = vadd.f32 %v1672, %v1760
        %1769 = vrot.lane.b32.xlu0 %v1690, 1
        %v1770 = vpop.permute.xlu0 %1769
        %1771 = vrot.lane.b32.xlu0 %v1691, 1
        %v1772 = vpop.permute.xlu0 %1771
        %1773 = vrot.lane.b32.xlu0 %v1692, 1
        %v1774 = vpop.permute.xlu0 %1773
        %1775 = vrot.lane.b32.xlu0 %v1693, 1
        %v1776 = vpop.permute.xlu0 %1775
        %1777 = vrot.lane.b32.xlu0 %v1694, 1
        %v1778 = vpop.permute.xlu0 %1777
        %1779 = vrot.lane.b32.xlu0 %v1695, 1
        %v1780 = vpop.permute.xlu0 %1779
        %1781 = vrot.lane.b32.xlu0 %v1696, 1
        %v1782 = vpop.permute.xlu0 %1781
        %1783 = vrot.lane.b32.xlu0 %v1697, 1
        %v1784 = vpop.permute.xlu0 %1783
        %v1785 = vsel %vm754, %v1770, %v1778
        %v1786 = vsel %vm754, %v1772, %v1780
        %v1787 = vsel %vm754, %v1774, %v1782
        %v1788 = vsel %vm754, %v1776, %v1784
        %v1789 = vsel %vm754, %v1778, %v1770
        %v1790 = vsel %vm754, %v1780, %v1772
        %v1791 = vsel %vm754, %v1782, %v1774
        %v1792 = vsel %vm754, %v1784, %v1776
        %s1793 = scalar_lea.vmem [#allocation2], 32
        %v1794 = vld [vmem:[%s1793] ss:$8 sm:$0x3]
        %v1796 = vperm.slane %v1794, 0
        %v1797 = vperm.slane %v1794, 1
        %v1800 = vmul.f32 %v1789, %v1796
        %v1801 = vmul.f32 %v1785, %v1797
        %v1802 = vmul.f32 %v1790, %v1796
        %v1803 = vmul.f32 %v1786, %v1797
        %v1804 = vmul.f32 %v1791, %v1796
        %v1805 = vmul.f32 %v1787, %v1797
        %v1806 = vmul.f32 %v1792, %v1796
        %v1807 = vmul.f32 %v1788, %v1797
        %1808 = vset.pattern.permute.xlu0 16
        %1809 = vperm.xlu0 %1808, %v627
        %v1810 = vpop.permute.xlu0 %1809
        %1812 = vset.pattern.permute.xlu0 16
        %1813 = vperm.xlu0 %1812, %v628
        %v1814 = vpop.permute.xlu0 %1813
        %1816 = vset.pattern.permute.xlu0 16
        %1817 = vperm.xlu0 %1816, %v629
        %v1818 = vpop.permute.xlu0 %1817
        %1820 = vset.pattern.permute.xlu0 16
        %1821 = vperm.xlu0 %1820, %v630
        %v1822 = vpop.permute.xlu0 %1821
        %v1824 = vmul.f32 %v1800, %v1810
        %v1825 = vmul.f32 %v1801, %v1810
        %v1826 = vmul.f32 %v1802, %v1814
        %v1827 = vmul.f32 %v1803, %v1814
        %v1828 = vmul.f32 %v1804, %v1818
        %v1829 = vmul.f32 %v1805, %v1818
        %v1830 = vmul.f32 %v1806, %v1822
        %v1831 = vmul.f32 %v1807, %v1822
        %v1832 = vadd.f32 %v1761, %v1824
        %v1833 = vadd.f32 %v1762, %v1825
        %v1834 = vadd.f32 %v1763, %v1826
        %v1835 = vadd.f32 %v1764, %v1827
        %v1836 = vadd.f32 %v1765, %v1828
        %v1837 = vadd.f32 %v1766, %v1829
        %v1838 = vadd.f32 %v1767, %v1830
        %v1839 = vadd.f32 %v1768, %v1831
        %s1840 = scalar_lea.vmem [#allocation2], 33
        %v1841 = vld [vmem:[%s1840] ss:$8 sm:$0x3]
        %v1843 = vperm.slane %v1841, 0
        %v1844 = vperm.slane %v1841, 1
        %v1847 = vmul.f32 %v1690, %v1843
        %v1848 = vmul.f32 %v1694, %v1844
        %v1849 = vmul.f32 %v1691, %v1843
        %v1850 = vmul.f32 %v1695, %v1844
        %v1851 = vmul.f32 %v1692, %v1843
        %v1852 = vmul.f32 %v1696, %v1844
        %v1853 = vmul.f32 %v1693, %v1843
        %v1854 = vmul.f32 %v1697, %v1844
        %1855 = vset.pattern.permute.xlu0 17
        %1856 = vperm.xlu0 %1855, %v627
        %v1857 = vpop.permute.xlu0 %1856
        %1859 = vset.pattern.permute.xlu0 17
        %1860 = vperm.xlu0 %1859, %v628
        %v1861 = vpop.permute.xlu0 %1860
        %1863 = vset.pattern.permute.xlu0 17
        %1864 = vperm.xlu0 %1863, %v629
        %v1865 = vpop.permute.xlu0 %1864
        %1867 = vset.pattern.permute.xlu0 17
        %1868 = vperm.xlu0 %1867, %v630
        %v1869 = vpop.permute.xlu0 %1868
        %v1871 = vmul.f32 %v1847, %v1857
        %v1872 = vmul.f32 %v1848, %v1857
        %v1873 = vmul.f32 %v1849, %v1861
        %v1874 = vmul.f32 %v1850, %v1861
        %v1875 = vmul.f32 %v1851, %v1865
        %v1876 = vmul.f32 %v1852, %v1865
        %v1877 = vmul.f32 %v1853, %v1869
        %v1878 = vmul.f32 %v1854, %v1869
        %v1879 = vadd.f32 %v1832, %v1871
        %v1880 = vadd.f32 %v1833, %v1872
        %v1881 = vadd.f32 %v1834, %v1873
        %v1882 = vadd.f32 %v1835, %v1874
        %v1883 = vadd.f32 %v1836, %v1875
        %v1884 = vadd.f32 %v1837, %v1876
        %v1885 = vadd.f32 %v1838, %v1877
        %v1886 = vadd.f32 %v1839, %v1878
        %1887 = vrot.lane.b32.xlu0 %v1690, 127
        %v1888 = vpop.permute.xlu0 %1887
        %1889 = vrot.lane.b32.xlu0 %v1691, 127
        %v1890 = vpop.permute.xlu0 %1889
        %1891 = vrot.lane.b32.xlu0 %v1692, 127
        %v1892 = vpop.permute.xlu0 %1891
        %1893 = vrot.lane.b32.xlu0 %v1693, 127
        %v1894 = vpop.permute.xlu0 %1893
        %1895 = vrot.lane.b32.xlu0 %v1694, 127
        %v1896 = vpop.permute.xlu0 %1895
        %1897 = vrot.lane.b32.xlu0 %v1695, 127
        %v1898 = vpop.permute.xlu0 %1897
        %1899 = vrot.lane.b32.xlu0 %v1696, 127
        %v1900 = vpop.permute.xlu0 %1899
        %1901 = vrot.lane.b32.xlu0 %v1697, 127
        %v1902 = vpop.permute.xlu0 %1901
        %v1903 = vsel %vm873, %v1888, %v1896
        %v1904 = vsel %vm873, %v1890, %v1898
        %v1905 = vsel %vm873, %v1892, %v1900
        %v1906 = vsel %vm873, %v1894, %v1902
        %v1907 = vsel %vm873, %v1896, %v1888
        %v1908 = vsel %vm873, %v1898, %v1890
        %v1909 = vsel %vm873, %v1900, %v1892
        %v1910 = vsel %vm873, %v1902, %v1894
        %s1911 = scalar_lea.vmem [#allocation2], 34
        %v1912 = vld [vmem:[%s1911] ss:$8 sm:$0x3]
        %v1914 = vperm.slane %v1912, 0
        %v1915 = vperm.slane %v1912, 1
        %v1918 = vmul.f32 %v1903, %v1914
        %v1919 = vmul.f32 %v1907, %v1915
        %v1920 = vmul.f32 %v1904, %v1914
        %v1921 = vmul.f32 %v1908, %v1915
        %v1922 = vmul.f32 %v1905, %v1914
        %v1923 = vmul.f32 %v1909, %v1915
        %v1924 = vmul.f32 %v1906, %v1914
        %v1925 = vmul.f32 %v1910, %v1915
        %1926 = vset.pattern.permute.xlu0 18
        %1927 = vperm.xlu0 %1926, %v627
        %v1928 = vpop.permute.xlu0 %1927
        %1930 = vset.pattern.permute.xlu0 18
        %1931 = vperm.xlu0 %1930, %v628
        %v1932 = vpop.permute.xlu0 %1931
        %1934 = vset.pattern.permute.xlu0 18
        %1935 = vperm.xlu0 %1934, %v629
        %v1936 = vpop.permute.xlu0 %1935
        %1938 = vset.pattern.permute.xlu0 18
        %1939 = vperm.xlu0 %1938, %v630
        %v1940 = vpop.permute.xlu0 %1939
        %v1942 = vmul.f32 %v1918, %v1928
        %v1943 = vmul.f32 %v1919, %v1928
        %v1944 = vmul.f32 %v1920, %v1932
        %v1945 = vmul.f32 %v1921, %v1932
        %v1946 = vmul.f32 %v1922, %v1936
        %v1947 = vmul.f32 %v1923, %v1936
        %v1948 = vmul.f32 %v1924, %v1940
        %v1949 = vmul.f32 %v1925, %v1940
        %v1950 = vadd.f32 %v1879, %v1942
        %v1951 = vadd.f32 %v1880, %v1943
        %v1952 = vadd.f32 %v1881, %v1944
        %v1953 = vadd.f32 %v1882, %v1945
        %v1954 = vadd.f32 %v1883, %v1946
        %v1955 = vadd.f32 %v1884, %v1947
        %v1956 = vadd.f32 %v1885, %v1948
        %v1957 = vadd.f32 %v1886, %v1949
        %1958 = vrot.lane.b32.xlu0 %v1690, 126
        %v1959 = vpop.permute.xlu0 %1958
        %1960 = vrot.lane.b32.xlu0 %v1691, 126
        %v1961 = vpop.permute.xlu0 %1960
        %1962 = vrot.lane.b32.xlu0 %v1692, 126
        %v1963 = vpop.permute.xlu0 %1962
        %1964 = vrot.lane.b32.xlu0 %v1693, 126
        %v1965 = vpop.permute.xlu0 %1964
        %1966 = vrot.lane.b32.xlu0 %v1694, 126
        %v1967 = vpop.permute.xlu0 %1966
        %1968 = vrot.lane.b32.xlu0 %v1695, 126
        %v1969 = vpop.permute.xlu0 %1968
        %1970 = vrot.lane.b32.xlu0 %v1696, 126
        %v1971 = vpop.permute.xlu0 %1970
        %1972 = vrot.lane.b32.xlu0 %v1697, 126
        %v1973 = vpop.permute.xlu0 %1972
        %v1974 = vsel %vm945, %v1959, %v1967
        %v1975 = vsel %vm945, %v1961, %v1969
        %v1976 = vsel %vm945, %v1963, %v1971
        %v1977 = vsel %vm945, %v1965, %v1973
        %v1978 = vsel %vm945, %v1967, %v1959
        %v1979 = vsel %vm945, %v1969, %v1961
        %v1980 = vsel %vm945, %v1971, %v1963
        %v1981 = vsel %vm945, %v1973, %v1965
        %s1982 = scalar_lea.vmem [#allocation2], 35
        %v1983 = vld [vmem:[%s1982] ss:$8 sm:$0x3]
        %v1985 = vperm.slane %v1983, 0
        %v1986 = vperm.slane %v1983, 1
        %v1989 = vmul.f32 %v1974, %v1985
        %v1990 = vmul.f32 %v1978, %v1986
        %v1991 = vmul.f32 %v1975, %v1985
        %v1992 = vmul.f32 %v1979, %v1986
        %v1993 = vmul.f32 %v1976, %v1985
        %v1994 = vmul.f32 %v1980, %v1986
        %v1995 = vmul.f32 %v1977, %v1985
        %v1996 = vmul.f32 %v1981, %v1986
        %1997 = vset.pattern.permute.xlu0 19
        %1998 = vperm.xlu0 %1997, %v627
        %v1999 = vpop.permute.xlu0 %1998
        %2001 = vset.pattern.permute.xlu0 19
        %2002 = vperm.xlu0 %2001, %v628
        %v2003 = vpop.permute.xlu0 %2002
        %2005 = vset.pattern.permute.xlu0 19
        %2006 = vperm.xlu0 %2005, %v629
        %v2007 = vpop.permute.xlu0 %2006
        %2009 = vset.pattern.permute.xlu0 19
        %2010 = vperm.xlu0 %2009, %v630
        %v2011 = vpop.permute.xlu0 %2010
        %v2013 = vmul.f32 %v1989, %v1999
        %v2014 = vmul.f32 %v1990, %v1999
        %v2015 = vmul.f32 %v1991, %v2003
        %v2016 = vmul.f32 %v1992, %v2003
        %v2017 = vmul.f32 %v1993, %v2007
        %v2018 = vmul.f32 %v1994, %v2007
        %v2019 = vmul.f32 %v1995, %v2011
        %v2020 = vmul.f32 %v1996, %v2011
        %v2021 = vadd.f32 %v1950, %v2013
        %v2022 = vadd.f32 %v1951, %v2014
        %v2023 = vadd.f32 %v1952, %v2015
        %v2024 = vadd.f32 %v1953, %v2016
        %v2025 = vadd.f32 %v1954, %v2017
        %v2026 = vadd.f32 %v1955, %v2018
        %v2027 = vadd.f32 %v1956, %v2019
        %v2028 = vadd.f32 %v1957, %v2020
        %2029 = vrot.lane.b32.xlu0 %v462, 96
        %v2030 = vpop.permute.xlu0 %2029
        %2031 = vrot.lane.b32.xlu0 %v464, 96
        %v2032 = vpop.permute.xlu0 %2031
        %2033 = vrot.lane.b32.xlu0 %v466, 96
        %v2034 = vpop.permute.xlu0 %2033
        %2035 = vrot.lane.b32.xlu0 %v468, 96
        %v2036 = vpop.permute.xlu0 %2035
        %2037 = vrot.lane.b32.xlu0 %v463, 96
        %v2038 = vpop.permute.xlu0 %2037
        %2039 = vrot.lane.b32.xlu0 %v465, 96
        %v2040 = vpop.permute.xlu0 %2039
        %2041 = vrot.lane.b32.xlu0 %v467, 96
        %v2042 = vpop.permute.xlu0 %2041
        %2043 = vrot.lane.b32.xlu0 %v469, 96
        %v2044 = vpop.permute.xlu0 %2043
        %vm2045 = vcmp.lt.s32.totalorder %v661, 96
        %v2046 = vsel %vm2045, %v2030, %v2038
        %v2047 = vsel %vm2045, %v2032, %v2040
        %v2048 = vsel %vm2045, %v2034, %v2042
        %v2049 = vsel %vm2045, %v2036, %v2044
        %v2050 = vsel %vm2045, %v2038, %v2030
        %v2051 = vsel %vm2045, %v2040, %v2032
        %v2052 = vsel %vm2045, %v2042, %v2034
        %v2053 = vsel %vm2045, %v2044, %v2036
        %2054 = vrot.lane.b32.xlu0 %v2046, 2
        %v2055 = vpop.permute.xlu0 %2054
        %2056 = vrot.lane.b32.xlu0 %v2047, 2
        %v2057 = vpop.permute.xlu0 %2056
        %2058 = vrot.lane.b32.xlu0 %v2048, 2
        %v2059 = vpop.permute.xlu0 %2058
        %2060 = vrot.lane.b32.xlu0 %v2049, 2
        %v2061 = vpop.permute.xlu0 %2060
        %2062 = vrot.lane.b32.xlu0 %v2050, 2
        %v2063 = vpop.permute.xlu0 %2062
        %2064 = vrot.lane.b32.xlu0 %v2051, 2
        %v2065 = vpop.permute.xlu0 %2064
        %2066 = vrot.lane.b32.xlu0 %v2052, 2
        %v2067 = vpop.permute.xlu0 %2066
        %2068 = vrot.lane.b32.xlu0 %v2053, 2
        %v2069 = vpop.permute.xlu0 %2068
        %v2070 = vsel %vm687, %v2055, %v2063
        %v2071 = vsel %vm687, %v2057, %v2065
        %v2072 = vsel %vm687, %v2059, %v2067
        %v2073 = vsel %vm687, %v2061, %v2069
        %v2074 = vsel %vm687, %v2063, %v2055
        %v2075 = vsel %vm687, %v2065, %v2057
        %v2076 = vsel %vm687, %v2067, %v2059
        %v2077 = vsel %vm687, %v2069, %v2061
        %s2078 = scalar_lea.vmem [#allocation2], 36
        %v2079 = vld [vmem:[%s2078] ss:$8 sm:$0x3]
        %v2081 = vperm.slane %v2079, 0
        %v2082 = vperm.slane %v2079, 1
        %v2085 = vmul.f32 %v2074, %v2081
        %v2086 = vmul.f32 %v2070, %v2082
        %v2087 = vmul.f32 %v2075, %v2081
        %v2088 = vmul.f32 %v2071, %v2082
        %v2089 = vmul.f32 %v2076, %v2081
        %v2090 = vmul.f32 %v2072, %v2082
        %v2091 = vmul.f32 %v2077, %v2081
        %v2092 = vmul.f32 %v2073, %v2082
        %2093 = vset.pattern.permute.xlu0 20
        %2094 = vperm.xlu0 %2093, %v627
        %v2095 = vpop.permute.xlu0 %2094
        %2097 = vset.pattern.permute.xlu0 20
        %2098 = vperm.xlu0 %2097, %v628
        %v2099 = vpop.permute.xlu0 %2098
        %2101 = vset.pattern.permute.xlu0 20
        %2102 = vperm.xlu0 %2101, %v629
        %v2103 = vpop.permute.xlu0 %2102
        %2105 = vset.pattern.permute.xlu0 20
        %2106 = vperm.xlu0 %2105, %v630
        %v2107 = vpop.permute.xlu0 %2106
        %v2109 = vmul.f32 %v2085, %v2095
        %v2110 = vmul.f32 %v2086, %v2095
        %v2111 = vmul.f32 %v2087, %v2099
        %v2112 = vmul.f32 %v2088, %v2099
        %v2113 = vmul.f32 %v2089, %v2103
        %v2114 = vmul.f32 %v2090, %v2103
        %v2115 = vmul.f32 %v2091, %v2107
        %v2116 = vmul.f32 %v2092, %v2107
        %v2117 = vadd.f32 %v2021, %v2109
        %v2118 = vadd.f32 %v2022, %v2110
        %v2119 = vadd.f32 %v2023, %v2111
        %v2120 = vadd.f32 %v2024, %v2112
        %v2121 = vadd.f32 %v2025, %v2113
        %v2122 = vadd.f32 %v2026, %v2114
        %v2123 = vadd.f32 %v2027, %v2115
        %v2124 = vadd.f32 %v2028, %v2116
        %2125 = vrot.lane.b32.xlu0 %v2046, 1
        %v2126 = vpop.permute.xlu0 %2125
        %2127 = vrot.lane.b32.xlu0 %v2047, 1
        %v2128 = vpop.permute.xlu0 %2127
        %2129 = vrot.lane.b32.xlu0 %v2048, 1
        %v2130 = vpop.permute.xlu0 %2129
        %2131 = vrot.lane.b32.xlu0 %v2049, 1
        %v2132 = vpop.permute.xlu0 %2131
        %2133 = vrot.lane.b32.xlu0 %v2050, 1
        %v2134 = vpop.permute.xlu0 %2133
        %2135 = vrot.lane.b32.xlu0 %v2051, 1
        %v2136 = vpop.permute.xlu0 %2135
        %2137 = vrot.lane.b32.xlu0 %v2052, 1
        %v2138 = vpop.permute.xlu0 %2137
        %2139 = vrot.lane.b32.xlu0 %v2053, 1
        %v2140 = vpop.permute.xlu0 %2139
        %v2141 = vsel %vm754, %v2126, %v2134
        %v2142 = vsel %vm754, %v2128, %v2136
        %v2143 = vsel %vm754, %v2130, %v2138
        %v2144 = vsel %vm754, %v2132, %v2140
        %v2145 = vsel %vm754, %v2134, %v2126
        %v2146 = vsel %vm754, %v2136, %v2128
        %v2147 = vsel %vm754, %v2138, %v2130
        %v2148 = vsel %vm754, %v2140, %v2132
        %s2149 = scalar_lea.vmem [#allocation2], 37
        %v2150 = vld [vmem:[%s2149] ss:$8 sm:$0x3]
        %v2152 = vperm.slane %v2150, 0
        %v2153 = vperm.slane %v2150, 1
        %v2156 = vmul.f32 %v2145, %v2152
        %v2157 = vmul.f32 %v2141, %v2153
        %v2158 = vmul.f32 %v2146, %v2152
        %v2159 = vmul.f32 %v2142, %v2153
        %v2160 = vmul.f32 %v2147, %v2152
        %v2161 = vmul.f32 %v2143, %v2153
        %v2162 = vmul.f32 %v2148, %v2152
        %v2163 = vmul.f32 %v2144, %v2153
        %2164 = vset.pattern.permute.xlu0 21
        %2165 = vperm.xlu0 %2164, %v627
        %v2166 = vpop.permute.xlu0 %2165
        %2168 = vset.pattern.permute.xlu0 21
        %2169 = vperm.xlu0 %2168, %v628
        %v2170 = vpop.permute.xlu0 %2169
        %2172 = vset.pattern.permute.xlu0 21
        %2173 = vperm.xlu0 %2172, %v629
        %v2174 = vpop.permute.xlu0 %2173
        %2176 = vset.pattern.permute.xlu0 21
        %2177 = vperm.xlu0 %2176, %v630
        %v2178 = vpop.permute.xlu0 %2177
        %v2180 = vmul.f32 %v2156, %v2166
        %v2181 = vmul.f32 %v2157, %v2166
        %v2182 = vmul.f32 %v2158, %v2170
        %v2183 = vmul.f32 %v2159, %v2170
        %v2184 = vmul.f32 %v2160, %v2174
        %v2185 = vmul.f32 %v2161, %v2174
        %v2186 = vmul.f32 %v2162, %v2178
        %v2187 = vmul.f32 %v2163, %v2178
        %v2188 = vadd.f32 %v2117, %v2180
        %v2189 = vadd.f32 %v2118, %v2181
        %v2190 = vadd.f32 %v2119, %v2182
        %v2191 = vadd.f32 %v2120, %v2183
        %v2192 = vadd.f32 %v2121, %v2184
        %v2193 = vadd.f32 %v2122, %v2185
        %v2194 = vadd.f32 %v2123, %v2186
        %v2195 = vadd.f32 %v2124, %v2187
        %s2196 = scalar_lea.vmem [#allocation2], 38
        %v2197 = vld [vmem:[%s2196] ss:$8 sm:$0x3]
        %v2199 = vperm.slane %v2197, 0
        %v2200 = vperm.slane %v2197, 1
        %v2203 = vmul.f32 %v2046, %v2199
        %v2204 = vmul.f32 %v2050, %v2200
        %v2205 = vmul.f32 %v2047, %v2199
        %v2206 = vmul.f32 %v2051, %v2200
        %v2207 = vmul.f32 %v2048, %v2199
        %v2208 = vmul.f32 %v2052, %v2200
        %v2209 = vmul.f32 %v2049, %v2199
        %v2210 = vmul.f32 %v2053, %v2200
        %2211 = vset.pattern.permute.xlu0 22
        %2212 = vperm.xlu0 %2211, %v627
        %v2213 = vpop.permute.xlu0 %2212
        %2215 = vset.pattern.permute.xlu0 22
        %2216 = vperm.xlu0 %2215, %v628
        %v2217 = vpop.permute.xlu0 %2216
        %2219 = vset.pattern.permute.xlu0 22
        %2220 = vperm.xlu0 %2219, %v629
        %v2221 = vpop.permute.xlu0 %2220
        %2223 = vset.pattern.permute.xlu0 22
        %2224 = vperm.xlu0 %2223, %v630
        %v2225 = vpop.permute.xlu0 %2224
        %v2227 = vmul.f32 %v2203, %v2213
        %v2228 = vmul.f32 %v2204, %v2213
        %v2229 = vmul.f32 %v2205, %v2217
        %v2230 = vmul.f32 %v2206, %v2217
        %v2231 = vmul.f32 %v2207, %v2221
        %v2232 = vmul.f32 %v2208, %v2221
        %v2233 = vmul.f32 %v2209, %v2225
        %v2234 = vmul.f32 %v2210, %v2225
        %v2235 = vadd.f32 %v2188, %v2227
        %v2236 = vadd.f32 %v2189, %v2228
        %v2237 = vadd.f32 %v2190, %v2229
        %v2238 = vadd.f32 %v2191, %v2230
        %v2239 = vadd.f32 %v2192, %v2231
        %v2240 = vadd.f32 %v2193, %v2232
        %v2241 = vadd.f32 %v2194, %v2233
        %v2242 = vadd.f32 %v2195, %v2234
        %2243 = vrot.lane.b32.xlu0 %v2046, 127
        %v2244 = vpop.permute.xlu0 %2243
        %2245 = vrot.lane.b32.xlu0 %v2047, 127
        %v2246 = vpop.permute.xlu0 %2245
        %2247 = vrot.lane.b32.xlu0 %v2048, 127
        %v2248 = vpop.permute.xlu0 %2247
        %2249 = vrot.lane.b32.xlu0 %v2049, 127
        %v2250 = vpop.permute.xlu0 %2249
        %2251 = vrot.lane.b32.xlu0 %v2050, 127
        %v2252 = vpop.permute.xlu0 %2251
        %2253 = vrot.lane.b32.xlu0 %v2051, 127
        %v2254 = vpop.permute.xlu0 %2253
        %2255 = vrot.lane.b32.xlu0 %v2052, 127
        %v2256 = vpop.permute.xlu0 %2255
        %2257 = vrot.lane.b32.xlu0 %v2053, 127
        %v2258 = vpop.permute.xlu0 %2257
        %v2259 = vsel %vm873, %v2244, %v2252
        %v2260 = vsel %vm873, %v2246, %v2254
        %v2261 = vsel %vm873, %v2248, %v2256
        %v2262 = vsel %vm873, %v2250, %v2258
        %v2263 = vsel %vm873, %v2252, %v2244
        %v2264 = vsel %vm873, %v2254, %v2246
        %v2265 = vsel %vm873, %v2256, %v2248
        %v2266 = vsel %vm873, %v2258, %v2250
        %s2267 = scalar_lea.vmem [#allocation2], 39
        %v2268 = vld [vmem:[%s2267] ss:$8 sm:$0x3]
        %v2270 = vperm.slane %v2268, 0
        %v2271 = vperm.slane %v2268, 1
        %v2274 = vmul.f32 %v2259, %v2270
        %v2275 = vmul.f32 %v2263, %v2271
        %v2276 = vmul.f32 %v2260, %v2270
        %v2277 = vmul.f32 %v2264, %v2271
        %v2278 = vmul.f32 %v2261, %v2270
        %v2279 = vmul.f32 %v2265, %v2271
        %v2280 = vmul.f32 %v2262, %v2270
        %v2281 = vmul.f32 %v2266, %v2271
        %2282 = vset.pattern.permute.xlu0 23
        %2283 = vperm.xlu0 %2282, %v627
        %v2284 = vpop.permute.xlu0 %2283
        %2286 = vset.pattern.permute.xlu0 23
        %2287 = vperm.xlu0 %2286, %v628
        %v2288 = vpop.permute.xlu0 %2287
        %2290 = vset.pattern.permute.xlu0 23
        %2291 = vperm.xlu0 %2290, %v629
        %v2292 = vpop.permute.xlu0 %2291
        %2294 = vset.pattern.permute.xlu0 23
        %2295 = vperm.xlu0 %2294, %v630
        %v2296 = vpop.permute.xlu0 %2295
        %v2298 = vmul.f32 %v2274, %v2284
        %v2299 = vmul.f32 %v2275, %v2284
        %v2300 = vmul.f32 %v2276, %v2288
        %v2301 = vmul.f32 %v2277, %v2288
        %v2302 = vmul.f32 %v2278, %v2292
        %v2303 = vmul.f32 %v2279, %v2292
        %v2304 = vmul.f32 %v2280, %v2296
        %v2305 = vmul.f32 %v2281, %v2296
        %v2306 = vadd.f32 %v2235, %v2298
        %v2307 = vadd.f32 %v2236, %v2299
        %v2308 = vadd.f32 %v2237, %v2300
        %v2309 = vadd.f32 %v2238, %v2301
        %v2310 = vadd.f32 %v2239, %v2302
        %v2311 = vadd.f32 %v2240, %v2303
        %v2312 = vadd.f32 %v2241, %v2304
        %v2313 = vadd.f32 %v2242, %v2305
        %2314 = vrot.lane.b32.xlu0 %v2046, 126
        %v2315 = vpop.permute.xlu0 %2314
        %2316 = vrot.lane.b32.xlu0 %v2047, 126
        %v2317 = vpop.permute.xlu0 %2316
        %2318 = vrot.lane.b32.xlu0 %v2048, 126
        %v2319 = vpop.permute.xlu0 %2318
        %2320 = vrot.lane.b32.xlu0 %v2049, 126
        %v2321 = vpop.permute.xlu0 %2320
        %2322 = vrot.lane.b32.xlu0 %v2050, 126
        %v2323 = vpop.permute.xlu0 %2322
        %2324 = vrot.lane.b32.xlu0 %v2051, 126
        %v2325 = vpop.permute.xlu0 %2324
        %2326 = vrot.lane.b32.xlu0 %v2052, 126
        %v2327 = vpop.permute.xlu0 %2326
        %2328 = vrot.lane.b32.xlu0 %v2053, 126
        %v2329 = vpop.permute.xlu0 %2328
        %v2330 = vsel %vm945, %v2315, %v2323
        %v2331 = vsel %vm945, %v2317, %v2325
        %v2332 = vsel %vm945, %v2319, %v2327
        %v2333 = vsel %vm945, %v2321, %v2329
        %v2334 = vsel %vm945, %v2323, %v2315
        %v2335 = vsel %vm945, %v2325, %v2317
        %v2336 = vsel %vm945, %v2327, %v2319
        %v2337 = vsel %vm945, %v2329, %v2321
        %s2338 = scalar_lea.vmem [#allocation2], 48
        %v2339 = vld [vmem:[%s2338] ss:$8 sm:$0x3]
        %v2341 = vperm.slane %v2339, 0
        %v2342 = vperm.slane %v2339, 1
        %v2345 = vmul.f32 %v2330, %v2341
        %v2346 = vmul.f32 %v2334, %v2342
        %v2347 = vmul.f32 %v2331, %v2341
        %v2348 = vmul.f32 %v2335, %v2342
        %v2349 = vmul.f32 %v2332, %v2341
        %v2350 = vmul.f32 %v2336, %v2342
        %v2351 = vmul.f32 %v2333, %v2341
        %v2352 = vmul.f32 %v2337, %v2342
        %2353 = vset.pattern.permute.xlu0 24
        %2354 = vperm.xlu0 %2353, %v627
        %v2355 = vpop.permute.xlu0 %2354
        %2357 = vset.pattern.permute.xlu0 24
        %2358 = vperm.xlu0 %2357, %v628
        %v2359 = vpop.permute.xlu0 %2358
        %2361 = vset.pattern.permute.xlu0 24
        %2362 = vperm.xlu0 %2361, %v629
        %v2363 = vpop.permute.xlu0 %2362
        %2365 = vset.pattern.permute.xlu0 24
        %2366 = vperm.xlu0 %2365, %v630
        %v2367 = vpop.permute.xlu0 %2366
        %v2369 = vmul.f32 %v2345, %v2355
        %v2370 = vmul.f32 %v2346, %v2355
        %v2371 = vmul.f32 %v2347, %v2359
        %v2372 = vmul.f32 %v2348, %v2359
        %v2373 = vmul.f32 %v2349, %v2363
        %v2374 = vmul.f32 %v2350, %v2363
        %v2375 = vmul.f32 %v2351, %v2367
        %v2376 = vmul.f32 %v2352, %v2367
        %v2377 = vadd.f32 %v2306, %v2369
        %v2378 = vadd.f32 %v2307, %v2370
        %v2379 = vadd.f32 %v2308, %v2371
        %v2380 = vadd.f32 %v2309, %v2372
        %v2381 = vadd.f32 %v2310, %v2373
        %v2382 = vadd.f32 %v2311, %v2374
        %v2383 = vadd.f32 %v2312, %v2375
        %v2384 = vadd.f32 %v2313, %v2376
        %v2385 = vld [vmem:[%s10] sm:$0xff]
        %v2386 = vld [vmem:[%s10 + $0x8] sm:$0xff]
        %v2387 = vld [vmem:[%s10 + $0x10] sm:$0xff]
        %v2388 = vld [vmem:[%s10 + $0x18] sm:$0xff]
        %2390 = vset.pattern.permute.xlu0 0
        %2391 = vperm.xlu0 %2390, %v2385
        %v2392 = vpop.permute.xlu0 %2391
        %2395 = vset.pattern.permute.xlu0 0
        %2396 = vperm.xlu0 %2395, %v2386
        %v2397 = vpop.permute.xlu0 %2396
        %2400 = vset.pattern.permute.xlu0 0
        %2401 = vperm.xlu0 %2400, %v2387
        %v2402 = vpop.permute.xlu0 %2401
        %2405 = vset.pattern.permute.xlu0 0
        %2406 = vperm.xlu0 %2405, %v2388
        %v2407 = vpop.permute.xlu0 %2406
        %v2409 = vmul.f32 %v2377, %v2392
        %v2410 = vmul.f32 %v2378, %v2392
        %v2411 = vmul.f32 %v2379, %v2397
        %v2412 = vmul.f32 %v2380, %v2397
        %v2413 = vmul.f32 %v2381, %v2402
        %v2414 = vmul.f32 %v2382, %v2402
        %v2415 = vmul.f32 %v2383, %v2407
        %v2416 = vmul.f32 %v2384, %v2407
        %2417 = vset.pattern.permute.xlu0 1
        %2418 = vperm.xlu0 %2417, %v2385
        %v2419 = vpop.permute.xlu0 %2418
        %2421 = vset.pattern.permute.xlu0 1
        %2422 = vperm.xlu0 %2421, %v2386
        %v2423 = vpop.permute.xlu0 %2422
        %2425 = vset.pattern.permute.xlu0 1
        %2426 = vperm.xlu0 %2425, %v2387
        %v2427 = vpop.permute.xlu0 %2426
        %2429 = vset.pattern.permute.xlu0 1
        %2430 = vperm.xlu0 %2429, %v2388
        %v2431 = vpop.permute.xlu0 %2430
        %v2433 = vadd.f32 %v2409, %v2419
        %v2434 = vadd.f32 %v2410, %v2419
        %v2435 = vadd.f32 %v2411, %v2423
        %v2436 = vadd.f32 %v2412, %v2423
        %v2437 = vadd.f32 %v2413, %v2427
        %v2438 = vadd.f32 %v2414, %v2427
        %v2439 = vadd.f32 %v2415, %v2431
        %v2440 = vadd.f32 %v2416, %v2431
        %v2441 = vmax.f32 %v2433, 0.0
        %v2442 = vmax.f32 %v2434, 0.0
        %v2443 = vmax.f32 %v2435, 0.0
        %v2444 = vmax.f32 %v2436, 0.0
        %v2445 = vmax.f32 %v2437, 0.0
        %v2446 = vmax.f32 %v2438, 0.0
        %v2447 = vmax.f32 %v2439, 0.0
        %v2448 = vmax.f32 %v2440, 0.0
        %v2449 = vadd.f32 %v2441, %v2442
        %2450 = vadd.xlane.f32.xlu0 %v2449
        %v2451 = vpop.xlane.xlu0 %2450
        %v2452 = vadd.f32 %v2443, %v2444
        %2453 = vadd.xlane.f32.xlu0 %v2452
        %v2454 = vpop.xlane.xlu0 %2453
        %v2455 = vadd.f32 %v2445, %v2446
        %2456 = vadd.xlane.f32.xlu0 %v2455
        %v2457 = vpop.xlane.xlu0 %2456
        %v2458 = vadd.f32 %v2447, %v2448
        %2459 = vadd.xlane.f32.xlu0 %v2458
        %v2460 = vpop.xlane.xlu0 %2459
        %v2461 = vmul.f32 %v2451, %v488
        %v2462 = vmul.f32 %v2454, %v488
        %v2463 = vmul.f32 %v2457, %v488
        %v2464 = vmul.f32 %v2460, %v488
        %v2465 = vld [vmem:[%s7] sm:$0xff]
        %v2466 = vld [vmem:[%s7 + $0x8] sm:$0xff]
        %v2467 = vld [vmem:[%s7 + $0x10] sm:$0xff]
        %v2468 = vld [vmem:[%s7 + $0x18] sm:$0xff]
        %v2469 = vmul.f32 %v2465, %v2461
        %v2470 = vmul.f32 %v2466, %v2462
        %v2471 = vmul.f32 %v2467, %v2463
        %v2472 = vmul.f32 %v2468, %v2464
        %vm2473 = vcmask 130048
        %v2474 = vsel %vm2473, %v2469, 0.0
        %v2475 = vsel %vm2473, %v2470, 0.0
        %v2476 = vadd.f32 %v2474, %v2475
        %v2477 = vsel %vm2473, %v2471, 0.0
        %v2478 = vadd.f32 %v2476, %v2477
        %v2479 = vsel %vm2473, %v2472, 0.0
        %v2480 = vadd.f32 %v2478, %v2479
        %v2481 = vrot.slane %v2480, 4
        %v2482 = vadd.f32 %v2480, %v2481
        %v2483 = vrot.slane %v2482, 2
        %v2484 = vadd.f32 %v2482, %v2483
        %v2485 = vrot.slane %v2484, 1
        %v2486 = vadd.f32 %v2484, %v2485
        %v2487 = vld [vmem:[#allocation10] sm:$0x1]
        %v2488 = vadd.f32 %v2486, %v2487
        %v2489 = vmax.f32 %v2488, 0.0
        %v2490 = vld [vmem:[%s9] sm:$0xff]
        %v2491 = vld [vmem:[%s9 + $0x8] sm:$0xff]
        %v2492 = vld [vmem:[%s9 + $0x10] sm:$0xff]
        %v2493 = vld [vmem:[%s9 + $0x18] sm:$0xff]
        %v2494 = vperm.slane %v2489, 0
        %v2495 = vmul.f32 %v2490, %v2494
        %v2496 = vmul.f32 %v2491, %v2494
        %v2497 = vmul.f32 %v2492, %v2494
        %v2498 = vmul.f32 %v2493, %v2494
        %v2499 = vsel %vm2473, %v2495, 0.0
        %2500 = vadd.xlane.f32.xlu0 %v2499
        %v2501 = vpop.xlane.xlu0 %2500
        %v2502 = vsel %vm2473, %v2496, 0.0
        %2503 = vadd.xlane.f32.xlu0 %v2502
        %v2504 = vpop.xlane.xlu0 %2503
        %v2505 = vsel %vm2473, %v2497, 0.0
        %2506 = vadd.xlane.f32.xlu0 %v2505
        %v2507 = vpop.xlane.xlu0 %2506
        %v2508 = vsel %vm2473, %v2498, 0.0
        %2509 = vadd.xlane.f32.xlu0 %v2508
        %v2510 = vpop.xlane.xlu0 %2509
        %v2511 = vadd.f32 %v2501, %v2385
        %v2512 = vadd.f32 %v2504, %v2386
        %v2513 = vadd.f32 %v2507, %v2387
        %v2514 = vadd.f32 %v2510, %v2388
        %v2515 = vxor.u32 %v2511, 2147483648
        %v2516 = vxor.u32 %v2512, 2147483648
        %v2517 = vxor.u32 %v2513, 2147483648
        %v2518 = vxor.u32 %v2514, 2147483648
        %v2519 = vmul.f32 %v2515, 1.442695
        %v2520 = vpow.pop %v2519
        %v2521 = vmul.f32 %v2516, 1.442695
        %v2522 = vpow.pop %v2521
        %v2523 = vmul.f32 %v2517, 1.442695
        %v2524 = vpow.pop %v2523
        %v2525 = vmul.f32 %v2518, 1.442695
        %v2526 = vpow.pop %v2525
        %v2527 = vadd.f32 %v2520, 1.0
        %v2528 = vadd.f32 %v2522, 1.0
        %v2529 = vadd.f32 %v2524, 1.0
        %v2530 = vadd.f32 %v2526, 1.0
        %v2531 = vrcp.pop %v2527
        %v2532 = vmul.f32 %v2527, %v2531
        %v2533 = vsub.f32 1.0, %v2532
        %v2534 = vmul.f32 %v2531, %v2533
        %v2535 = vadd.f32 %v2531, %v2534
        %vm2536 = vweird.f32 %v2527
        %vm2537 = vweird.f32 %v2531
        %vm2538 = vmor %vm2536, %vm2537
        %v2539 = vsel %vm2538, %v2531, %v2535
        %v2540 = vand.u32 2147483647, %v2527
        %vm2541 = vcmp.eq.f32.partialorder %v2540, 8.507059e+37
        %v2542 = vand.u32 %v2527, 2147483648
        %v2543 = vor.u32 1.1754944e-38, %v2542
        %v2544 = vsel %vm2541, %v2543, %v2539
        %v2545 = vmul.f32 1.0, %v2544
        %v2546 = vrcp.pop %v2528
        %v2547 = vmul.f32 %v2528, %v2546
        %v2548 = vsub.f32 1.0, %v2547
        %v2549 = vmul.f32 %v2546, %v2548
        %v2550 = vadd.f32 %v2546, %v2549
        %vm2551 = vweird.f32 %v2528
        %vm2552 = vweird.f32 %v2546
        %vm2553 = vmor %vm2551, %vm2552
        %v2554 = vsel %vm2553, %v2546, %v2550
        %v2555 = vand.u32 2147483647, %v2528
        %vm2556 = vcmp.eq.f32.partialorder %v2555, 8.507059e+37
        %v2557 = vand.u32 %v2528, 2147483648
        %v2558 = vor.u32 1.1754944e-38, %v2557
        %v2559 = vsel %vm2556, %v2558, %v2554
        %v2560 = vmul.f32 1.0, %v2559
        %v2561 = vrcp.pop %v2529
        %v2562 = vmul.f32 %v2529, %v2561
        %v2563 = vsub.f32 1.0, %v2562
        %v2564 = vmul.f32 %v2561, %v2563
        %v2565 = vadd.f32 %v2561, %v2564
        %vm2566 = vweird.f32 %v2529
        %vm2567 = vweird.f32 %v2561
        %vm2568 = vmor %vm2566, %vm2567
        %v2569 = vsel %vm2568, %v2561, %v2565
        %v2570 = vand.u32 2147483647, %v2529
        %vm2571 = vcmp.eq.f32.partialorder %v2570, 8.507059e+37
        %v2572 = vand.u32 %v2529, 2147483648
        %v2573 = vor.u32 1.1754944e-38, %v2572
        %v2574 = vsel %vm2571, %v2573, %v2569
        %v2575 = vmul.f32 1.0, %v2574
        %v2576 = vrcp.pop %v2530
        %v2577 = vmul.f32 %v2530, %v2576
        %v2578 = vsub.f32 1.0, %v2577
        %v2579 = vmul.f32 %v2576, %v2578
        %v2580 = vadd.f32 %v2576, %v2579
        %vm2581 = vweird.f32 %v2530
        %vm2582 = vweird.f32 %v2576
        %vm2583 = vmor %vm2581, %vm2582
        %v2584 = vsel %vm2583, %v2576, %v2580
        %v2585 = vand.u32 2147483647, %v2530
        %vm2586 = vcmp.eq.f32.partialorder %v2585, 8.507059e+37
        %v2587 = vand.u32 %v2530, 2147483648
        %v2588 = vor.u32 1.1754944e-38, %v2587
        %v2589 = vsel %vm2586, %v2588, %v2584
        %v2590 = vmul.f32 1.0, %v2589
        %2592 = vset.pattern.permute.xlu0 6
        %2593 = vperm.xlu0 %2592, %v2545
        %v2594 = vpop.permute.xlu0 %2593
        %2597 = vset.pattern.permute.xlu0 6
        %2598 = vperm.xlu0 %2597, %v2560
        %v2599 = vpop.permute.xlu0 %2598
        %2602 = vset.pattern.permute.xlu0 6
        %2603 = vperm.xlu0 %2602, %v2575
        %v2604 = vpop.permute.xlu0 %2603
        %2607 = vset.pattern.permute.xlu0 6
        %2608 = vperm.xlu0 %2607, %v2590
        %v2609 = vpop.permute.xlu0 %2608
        %v2611 = vmul.f32 %v2441, %v2594
        %v2612 = vmul.f32 %v2442, %v2594
        %v2613 = vmul.f32 %v2443, %v2599
        %v2614 = vmul.f32 %v2444, %v2599
        %v2615 = vmul.f32 %v2445, %v2604
        %v2616 = vmul.f32 %v2446, %v2604
        %v2617 = vmul.f32 %v2447, %v2609
        %v2618 = vmul.f32 %v2448, %v2609
        %v2620 = vsel %vm501, %v640, 0
        %v2623 = vsel %vm501, %v641, 0
        %v2626 = vsel %vm501, %v642, 0
        %v2629 = vsel %vm501, %v643, 0
        %2631 = vmatpush.msra.mxu0 0.0
        %2632 = vmatpush.msra.mxu0 0.0
        %2633 = vmatpush.msra.mxu0 0.0
        %2634 = vmatpush.msra.mxu0 0.0
        %2635 = vmatpush.msra.mxu0 0.0
        %2636 = vmatpush.msra.mxu0 0.0
        %2637 = vmatpush.msra.mxu0 0.0
        %2638 = vmatpush.msra.mxu0 0.0
        %2639 = vmatpush.msra.mxu0 0.0
        %2640 = vmatpush.msra.mxu0 0.0
        %2641 = vmatpush.msra.mxu0 0.0
        %2642 = vmatpush.msra.mxu0 0.0
        %2643 = vmatpush.msra.mxu0 %v2617
        %2644 = vmatpush.msra.mxu0 %v2615
        %2645 = vmatpush.msra.mxu0 %v2613
        %2646 = vmatpush.msra.mxu0 %v2611
        %2647 = vmatmul.f32.gmra.mxu0 %v2620
        %v2648 = vpop.f32.mrf.mxu0
        %v2649 = vadd.f32 0.0, %v2648
        %2650 = vmatmul.f32.gmra.mxu0 %v2623
        %v2651 = vpop.f32.mrf.mxu0
        %v2652 = vadd.f32 0.0, %v2651
        %2653 = vmatmul.f32.gmra.mxu0 %v2626
        %v2654 = vpop.f32.mrf.mxu0
        %v2655 = vadd.f32 0.0, %v2654
        %2656 = vmatmul.f32.gmra.mxu0 %v2629
        %v2657 = vpop.f32.mrf.mxu0
        %v2658 = vadd.f32 0.0, %v2657
        %2659 = vdwg.mxu0
        %2660 = vmatpush.msra.mxu0 0.0
        %2661 = vmatpush.msra.mxu0 0.0
        %2662 = vmatpush.msra.mxu0 0.0
        %2663 = vmatpush.msra.mxu0 0.0
        %2664 = vmatpush.msra.mxu0 0.0
        %2665 = vmatpush.msra.mxu0 0.0
        %2666 = vmatpush.msra.mxu0 0.0
        %2667 = vmatpush.msra.mxu0 0.0
        %2668 = vmatpush.msra.mxu0 0.0
        %2669 = vmatpush.msra.mxu0 0.0
        %2670 = vmatpush.msra.mxu0 0.0
        %2671 = vmatpush.msra.mxu0 0.0
        %2672 = vmatpush.msra.mxu0 %v2618
        %2673 = vmatpush.msra.mxu0 %v2616
        %2674 = vmatpush.msra.mxu0 %v2614
        %2675 = vmatpush.msra.mxu0 %v2612
        %2676 = vmatmul.f32.gmra.mxu0 %v2620
        %v2677 = vpop.f32.mrf.mxu0
        %v2678 = vadd.f32 0.0, %v2677
        %2679 = vmatmul.f32.gmra.mxu0 %v2623
        %v2680 = vpop.f32.mrf.mxu0
        %v2681 = vadd.f32 0.0, %v2680
        %2682 = vmatmul.f32.gmra.mxu0 %v2626
        %v2683 = vpop.f32.mrf.mxu0
        %v2684 = vadd.f32 0.0, %v2683
        %2685 = vmatmul.f32.gmra.mxu0 %v2629
        %v2686 = vpop.f32.mrf.mxu0
        %v2687 = vadd.f32 0.0, %v2686
        %2688 = vdwg.mxu0
        %2689 = vset.pattern.permute.xlu0 2
        %2690 = vperm.xlu0 %2689, %v2385
        %v2691 = vpop.permute.xlu0 %2690
        %2693 = vset.pattern.permute.xlu0 2
        %2694 = vperm.xlu0 %2693, %v2386
        %v2695 = vpop.permute.xlu0 %2694
        %2697 = vset.pattern.permute.xlu0 2
        %2698 = vperm.xlu0 %2697, %v2387
        %v2699 = vpop.permute.xlu0 %2698
        %2701 = vset.pattern.permute.xlu0 2
        %2702 = vperm.xlu0 %2701, %v2388
        %v2703 = vpop.permute.xlu0 %2702
        %v2705 = vmul.f32 %v2649, %v2691
        %v2706 = vmul.f32 %v2678, %v2691
        %v2707 = vmul.f32 %v2652, %v2695
        %v2708 = vmul.f32 %v2681, %v2695
        %v2709 = vmul.f32 %v2655, %v2699
        %v2710 = vmul.f32 %v2684, %v2699
        %v2711 = vmul.f32 %v2658, %v2703
        %v2712 = vmul.f32 %v2687, %v2703
        %2713 = vset.pattern.permute.xlu0 3
        %2714 = vperm.xlu0 %2713, %v2385
        %v2715 = vpop.permute.xlu0 %2714
        %2717 = vset.pattern.permute.xlu0 3
        %2718 = vperm.xlu0 %2717, %v2386
        %v2719 = vpop.permute.xlu0 %2718
        %2721 = vset.pattern.permute.xlu0 3
        %2722 = vperm.xlu0 %2721, %v2387
        %v2723 = vpop.permute.xlu0 %2722
        %2725 = vset.pattern.permute.xlu0 3
        %2726 = vperm.xlu0 %2725, %v2388
        %v2727 = vpop.permute.xlu0 %2726
        %v2729 = vadd.f32 %v2705, %v2715
        %v2730 = vadd.f32 %v2706, %v2715
        %v2731 = vadd.f32 %v2707, %v2719
        %v2732 = vadd.f32 %v2708, %v2719
        %v2733 = vadd.f32 %v2709, %v2723
        %v2734 = vadd.f32 %v2710, %v2723
        %v2735 = vadd.f32 %v2711, %v2727
        %v2736 = vadd.f32 %v2712, %v2727
        %v2737 = vmax.f32 %v2729, 0.0
        %v2738 = vmax.f32 %v2730, 0.0
        %v2739 = vmax.f32 %v2731, 0.0
        %v2740 = vmax.f32 %v2732, 0.0
        %v2741 = vmax.f32 %v2733, 0.0
        %v2742 = vmax.f32 %v2734, 0.0
        %v2743 = vmax.f32 %v2735, 0.0
        %v2744 = vmax.f32 %v2736, 0.0
        %v2745 = vadd.f32 %v2737, %v462
        %v2746 = vadd.f32 %v2738, %v463
        %v2747 = vadd.f32 %v2739, %v464
        %v2748 = vadd.f32 %v2740, %v465
        %v2749 = vadd.f32 %v2741, %v466
        %v2750 = vadd.f32 %v2742, %v467
        %v2751 = vadd.f32 %v2743, %v468
        %v2752 = vadd.f32 %v2744, %v469
        %v2753 = vadd.f32 %v2745, %v2747
        %v2754 = vadd.f32 %v2753, %v2749
        %v2755 = vadd.f32 %v2754, %v2751
        %v2756 = vrot.slane %v2755, 4
        %v2757 = vadd.f32 %v2755, %v2756
        %v2758 = vrot.slane %v2757, 2
        %v2759 = vadd.f32 %v2757, %v2758
        %v2760 = vrot.slane %v2759, 1
        %v2761 = vadd.f32 %v2759, %v2760
        %v2762 = vadd.f32 %v2746, %v2748
        %v2763 = vadd.f32 %v2762, %v2750
        %v2764 = vadd.f32 %v2763, %v2752
        %v2765 = vrot.slane %v2764, 4
        %v2766 = vadd.f32 %v2764, %v2765
        %v2767 = vrot.slane %v2766, 2
        %v2768 = vadd.f32 %v2766, %v2767
        %v2769 = vrot.slane %v2768, 1
        %v2770 = vadd.f32 %v2768, %v2769
        %v2771 = vrcp.pop 32.0
        %v2772 = vmul.f32 32.0, %v2771
        %v2773 = vsub.f32 1.0, %v2772
        %v2774 = vmul.f32 %v2771, %v2773
        %v2775 = vadd.f32 %v2771, %v2774
        %vm2776 = vweird.f32 %v2771
        %v2777 = vsel %vm2776, %v2771, %v2775
        %v2778 = vmul.f32 %v2761, %v2777
        %v2779 = vmul.f32 %v2770, %v2777
        %v2780 = vsub.f32 %v2745, %v2778
        %v2781 = vsub.f32 %v2746, %v2779
        %v2782 = vsub.f32 %v2747, %v2778
        %v2783 = vsub.f32 %v2748, %v2779
        %v2784 = vsub.f32 %v2749, %v2778
        %v2785 = vsub.f32 %v2750, %v2779
        %v2786 = vsub.f32 %v2751, %v2778
        %v2787 = vsub.f32 %v2752, %v2779
        %v2788 = vmul.f32 %v2780, %v2780
        %v2789 = vmul.f32 %v2781, %v2781
        %v2790 = vmul.f32 %v2782, %v2782
        %v2791 = vmul.f32 %v2783, %v2783
        %v2792 = vmul.f32 %v2784, %v2784
        %v2793 = vmul.f32 %v2785, %v2785
        %v2794 = vmul.f32 %v2786, %v2786
        %v2795 = vmul.f32 %v2787, %v2787
        %v2796 = vadd.f32 %v2788, %v2790
        %v2797 = vadd.f32 %v2796, %v2792
        %v2798 = vadd.f32 %v2797, %v2794
        %v2799 = vrot.slane %v2798, 4
        %v2800 = vadd.f32 %v2798, %v2799
        %v2801 = vrot.slane %v2800, 2
        %v2802 = vadd.f32 %v2800, %v2801
        %v2803 = vrot.slane %v2802, 1
        %v2804 = vadd.f32 %v2802, %v2803
        %v2805 = vadd.f32 %v2789, %v2791
        %v2806 = vadd.f32 %v2805, %v2793
        %v2807 = vadd.f32 %v2806, %v2795
        %v2808 = vrot.slane %v2807, 4
        %v2809 = vadd.f32 %v2807, %v2808
        %v2810 = vrot.slane %v2809, 2
        %v2811 = vadd.f32 %v2809, %v2810
        %v2812 = vrot.slane %v2811, 1
        %v2813 = vadd.f32 %v2811, %v2812
        %v2814 = vmul.f32 %v2804, %v2777
        %v2815 = vmul.f32 %v2813, %v2777
        %v2816 = vadd.f32 %v2814, 1e-05
        %v2817 = vadd.f32 %v2815, 1e-05
        %v2818 = vrsqrt.pop %v2816
        %v2819 = vmul.f32 %v2818, %v2816
        %v2820 = vmul.f32 %v2819, %v2818
        %v2821 = vmul.f32 0.5, %v2820
        %v2822 = vsub.f32 1.5, %v2821
        %v2823 = vmul.f32 %v2818, %v2822
        %vm2824 = vweird.f32 %v2816
        %vm2825 = vweird.f32 %v2818
        %vm2826 = vmor %vm2824, %vm2825
        %v2827 = vsel %vm2826, %v2818, %v2823
        %v2828 = vrsqrt.pop %v2817
        %v2829 = vmul.f32 %v2828, %v2817
        %v2830 = vmul.f32 %v2829, %v2828
        %v2831 = vmul.f32 0.5, %v2830
        %v2832 = vsub.f32 1.5, %v2831
        %v2833 = vmul.f32 %v2828, %v2832
        %vm2834 = vweird.f32 %v2817
        %vm2835 = vweird.f32 %v2828
        %vm2836 = vmor %vm2834, %vm2835
        %v2837 = vsel %vm2836, %v2828, %v2833
        %v2838 = vmul.f32 %v2780, %v2827
        %v2839 = vmul.f32 %v2781, %v2837
        %v2840 = vmul.f32 %v2782, %v2827
        %v2841 = vmul.f32 %v2783, %v2837
        %v2842 = vmul.f32 %v2784, %v2827
        %v2843 = vmul.f32 %v2785, %v2837
        %v2844 = vmul.f32 %v2786, %v2827
        %v2845 = vmul.f32 %v2787, %v2837
        %2846 = vset.pattern.permute.xlu0 4
        %2847 = vperm.xlu0 %2846, %v2385
        %v2848 = vpop.permute.xlu0 %2847
        %2850 = vset.pattern.permute.xlu0 4
        %2851 = vperm.xlu0 %2850, %v2386
        %v2852 = vpop.permute.xlu0 %2851
        %2854 = vset.pattern.permute.xlu0 4
        %2855 = vperm.xlu0 %2854, %v2387
        %v2856 = vpop.permute.xlu0 %2855
        %2858 = vset.pattern.permute.xlu0 4
        %2859 = vperm.xlu0 %2858, %v2388
        %v2860 = vpop.permute.xlu0 %2859
        %v2862 = vmul.f32 %v2838, %v2848
        %v2863 = vmul.f32 %v2839, %v2848
        %v2864 = vmul.f32 %v2840, %v2852
        %v2865 = vmul.f32 %v2841, %v2852
        %v2866 = vmul.f32 %v2842, %v2856
        %v2867 = vmul.f32 %v2843, %v2856
        %v2868 = vmul.f32 %v2844, %v2860
        %v2869 = vmul.f32 %v2845, %v2860
        %2870 = vset.pattern.permute.xlu0 5
        %2871 = vperm.xlu0 %2870, %v2385
        %v2872 = vpop.permute.xlu0 %2871
        %2874 = vset.pattern.permute.xlu0 5
        %2875 = vperm.xlu0 %2874, %v2386
        %v2876 = vpop.permute.xlu0 %2875
        %2878 = vset.pattern.permute.xlu0 5
        %2879 = vperm.xlu0 %2878, %v2387
        %v2880 = vpop.permute.xlu0 %2879
        %2882 = vset.pattern.permute.xlu0 5
        %2883 = vperm.xlu0 %2882, %v2388
        %v2884 = vpop.permute.xlu0 %2883
        %v2886 = vadd.f32 %v2862, %v2872
        %v2887 = vadd.f32 %v2863, %v2872
        %v2888 = vadd.f32 %v2864, %v2876
        %v2889 = vadd.f32 %v2865, %v2876
        %v2890 = vadd.f32 %v2866, %v2880
        %v2891 = vadd.f32 %v2867, %v2880
        %v2892 = vadd.f32 %v2868, %v2884
        %v2893 = vadd.f32 %v2869, %v2884
        %2894 = vst [vmem:[%s456] sm:$0xff] %v2886
        %2895 = vst [vmem:[%s456 + $0x8] sm:$0xff] %v2887
        %2896 = vst [vmem:[%s456 + $0x10] sm:$0xff] %v2888
        %2897 = vst [vmem:[%s456 + $0x18] sm:$0xff] %v2889
        %2898 = vst [vmem:[%s456 + $0x20] sm:$0xff] %v2890
        %2899 = vst [vmem:[%s456 + $0x28] sm:$0xff] %v2891
        %2900 = vst [vmem:[%s456 + $0x30] sm:$0xff] %v2892
        %2901 = vst [vmem:[%s456 + $0x38] sm:$0xff] %v2893
        %s2902 = sand.u32 %s272, 1
        %s2903 = scalar_lea.sflag [#allocation4], %s2902
        %s2904 = sand.u32 %s272, 1
        %s2905 = smul.addr %s2904, 64
        %s2906 = scalar_lea.vmem [#allocation11], %s2905
        // Predicated region
        $region85: #{tpu_custom_call.1} parent=63 // pred_check
          %p2907 = pneg %p282
        $region86: #{tpu_custom_call.1} parent=63 // pred_check_branch
          %2909 = sbr.rel (%p2907) target = $region88
        $region87: #{tpu_custom_call.1} parent=63 // pred_region
          %2911 = vsyncadd %s2903, 0
          %s2912 = smul.addr %s28, 8
          %s2913 = smul.addr %s2912, 8
          %s2914 = scalar_lea.hbm %s11, %s2913
          %s2915 = sshll.u32 %s2906, 4
          %s2916 = int_to_ptr.vmem [resolvable:$true] %s2915
          %s2917 = sshll.u32 %s2914, 4
          %s2918 = int_to_ptr.hbm [resolvable:$true] %s2917
          %2923 = dma.vmem_to_hbm [thread:$0]  %s2916, 1024, %s2918, %s2903, 256, 256, 16
        $region88: #{tpu_custom_call.1} parent=63 // pred_fallthru
          _
      $region64: #{tpu_custom_call.1} parent=5 // pred_fallthru
        _
      %p2924 = scmp.le.s32.totalorder 2, %s23
      // Predicated region
      $region89: #{tpu_custom_call.1} parent=5 // pred_check
        %p2925 = pneg %p2924
      $region90: #{tpu_custom_call.1} parent=5 // pred_check_branch
        %2927 = sbr.rel (%p2925) target = $region92
      $region91: #{tpu_custom_call.1} parent=5 // pred_region
        %s2928 = ssub.s32 %s23, 2
        // Predicated region
        $region93: #{tpu_custom_call.1} parent=91 // pred_check
          %p2929 = pneg %p288
        $region94: #{tpu_custom_call.1} parent=91 // pred_check_branch
          %2931 = sbr.rel (%p2929) target = $region96
        $region95: #{tpu_custom_call.1} parent=91 // pred_region
          %s2932 = sand.u32 %s273, 1
          %s2933 = scalar_lea.sflag [#allocation4], %s2932
          %s2934 = sand.u32 %s273, 1
          %s2935 = smul.addr %s2934, 64
          %s2936 = scalar_lea.vmem [#allocation11], %s2935
          %2938 = dma.done %s2933, 1024
        $region96: #{tpu_custom_call.1} parent=91 // pred_fallthru
          _
      $region92: #{tpu_custom_call.1} parent=5 // pred_fallthru
        _
    $region6: #{tpu_custom_call.1} parent=1 // loop_footer
      %s27 = sadd.s32 1, %s23
    $region7: #{tpu_custom_call.1} parent=1 // loop_footer_branch
      %22 = sbr.rel target = $region3
    $region8: #{tpu_custom_call.1} parent=1 // loop_exit
      _
    %2939 = vsyncpa [#allocation3], 1
    %s2940 = scalar_lea.sflag [#allocation3], 1
    %2941 = vsyncpa %s2940, 1
    %2942 = vsyncpa [#allocation6], 1
    %2943 = vsyncpa [#allocation9], 1
    %2944 = vsyncpa [#allocation4], 1
    %s2945 = scalar_lea.sflag [#allocation4], 1
    %2946 = vsyncpa %s2945, 1

</llo_original>
